<compile_context>
chip_gen: v7x
topology: tpu7x:2x2x1
jax: 0.10.0
libtpu: 0.0.40
codegen_flags: <defaults>
</compile_context>

<pallas_src>
import functools
import math

import jax
import jax.numpy as jnp
from jax import lax
from jax.experimental import pallas as pl
from jax.experimental.pallas import tpu as pltpu


def _round_up(n, m):
    return -(-n // m) * m


def mobilevit_encoder_kernel(
    x_ref,      # (B*T, K1p)  im2col'ed conv1 input (K padded to sublane multiple)
    mat_ref,    # (R, 128)    all weight matrices, row-packed, lane-padded to 128
    vec_ref,    # (Rv, 128)   all bias / scale / shift vectors, one per row
    out_ref,    # (B, D)
    *, B, T, D, nhead, d_hid, L, K1p,
):
    f32 = jnp.float32
    BT = B * T
    HD = D // nhead
    eps = 1e-5

    def silu(v):
        return v * jax.nn.sigmoid(v)

    def layernorm(v, g, b):
        mu = jnp.mean(v, axis=-1, keepdims=True)
        c = v - mu
        var = jnp.mean(c * c, axis=-1, keepdims=True)
        return c * lax.rsqrt(var + eps) * g + b

    # ---- static row offsets inside the two packed parameter arrays ----
    cw1 = mat_ref[0:K1p, 0:D]                              # (K1p, D)  conv1 taps stacked over K
    cw2 = mat_ref[K1p:K1p + 3 * D, 0:D]                    # (3D, D)   conv2 taps stacked over K
    layer_base = K1p + 3 * D
    layer_rows = 3 * D + d_hid
    op_off = layer_base + L * layer_rows
    outp_w = mat_ref[op_off:op_off + D, 0:D]               # (D, D)

    bn1s = vec_ref[0:1, 0:D]; bn1b = vec_ref[1:2, 0:D]
    bn2s = vec_ref[2:3, 0:D]; bn2b = vec_ref[3:4, 0:D]
    vhead = 4 + 8 * L
    outp_b = vec_ref[vhead:vhead + 1, 0:D]
    fn_g = vec_ref[vhead + 1:vhead + 2, 0:D]
    fn_b = vec_ref[vhead + 2:vhead + 3, 0:D]

    # ---------------- conv block ----------------
    # conv1: single im2col matmul; eval BatchNorm + conv bias folded into scale/shift; SiLU.
    h1 = silu(jnp.dot(x_ref[...], cw1, preferred_element_type=f32) * bn1s + bn1b)   # (BT, D)

    # conv2: +-1 time shifts via XLU sublane roll + boundary masks, then ONE K=3D matmul.
    # (roll wraps across batch boundaries, but those rows are exactly the masked t==0 / t==T-1
    #  rows, so the zero-padding semantics of Conv1d(padding=1) are preserved.)
    t_idx = lax.broadcasted_iota(jnp.int32, (B, T, D), 1).reshape(BT, D)
    h_prev = jnp.where(t_idx == 0, 0.0, pltpu.roll(h1, shift=1, axis=0))             # h1[t-1]
    h_next = jnp.where(t_idx == T - 1, 0.0, pltpu.roll(h1, shift=BT - 1, axis=0))    # h1[t+1]
    h_cat = jnp.concatenate([h_prev, h1, h_next], axis=-1)                           # (BT, 3D)
    local = silu(jnp.dot(h_cat, cw2, preferred_element_type=f32) * bn2s + bn2b)      # (BT, D)

    # ---------------- TransformerEncoder: post-norm, ReLU FFN, eval (dropout = id) ----------------
    h = local
    for l in range(L):
        base = layer_base + l * layer_rows
        w_qkv = mat_ref[base:base + D, 0:3 * D]                    # (D, 3D)  Q cols pre-scaled
        w_out = mat_ref[base + D:base + 2 * D, 0:D]                # (D, D)
        w_ff1 = mat_ref[base + 2 * D:base + 3 * D, 0:d_hid]        # (D, d_hid)
        w_ff2 = mat_ref[base + 3 * D:base + 3 * D + d_hid, 0:D]    # (d_hid, D)
        vb = 4 + 8 * l
        b_qkv = vec_ref[vb:vb + 1, 0:3 * D]
        b_out = vec_ref[vb + 1:vb + 2, 0:D]
        ln1g = vec_ref[vb + 2:vb + 3, 0:D]; ln1b = vec_ref[vb + 3:vb + 4, 0:D]
        b_ff1 = vec_ref[vb + 4:vb + 5, 0:d_hid]
        b_ff2 = vec_ref[vb + 5:vb + 6, 0:D]
        ln2g = vec_ref[vb + 6:vb + 7, 0:D]; ln2b = vec_ref[vb + 7:vb + 8, 0:D]

        # --- multi-head self-attention: heads batched along the leading axis ---
        qkv = jnp.dot(h, w_qkv, preferred_element_type=f32) + b_qkv                  # (BT, 3D)
        qkv3 = qkv.reshape(B, T, 3 * D)
        qh = jnp.concatenate([qkv3[:, :, i * HD:(i + 1) * HD]
                              for i in range(nhead)], axis=0)                        # (H*B,T,HD)
        kh = jnp.concatenate([qkv3[:, :, D + i * HD:D + (i + 1) * HD]
                              for i in range(nhead)], axis=0)
        vh = jnp.concatenate([qkv3[:, :, 2 * D + i * HD:2 * D + (i + 1) * HD]
                              for i in range(nhead)], axis=0)
        s = jnp.einsum('btd,bsd->bts', qh, kh, preferred_element_type=f32)           # (H*B,T,T)
        s = s - jnp.max(s, axis=-1, keepdims=True)
        p = jnp.exp(s)
        p = p * pl.reciprocal(jnp.sum(p, axis=-1, keepdims=True), approx=True)
        o = jnp.einsum('bts,bsd->btd', p, vh, preferred_element_type=f32)            # (H*B,T,HD)
        o = jnp.concatenate([o[i * B:(i + 1) * B] for i in range(nhead)], axis=-1)   # (B,T,D)
        attn = jnp.dot(o.reshape(BT, D), w_out, preferred_element_type=f32) + b_out
        h = layernorm(h + attn, ln1g, ln1b)

        # --- feed-forward ---
        ff = jnp.maximum(jnp.dot(h, w_ff1, preferred_element_type=f32) + b_ff1, 0.0)
        ff = jnp.dot(ff, w_ff2, preferred_element_type=f32) + b_ff2
        h = layernorm(h + ff, ln2g, ln2b)

    # ---------------- fuse + mean pool + Linear + LayerNorm head ----------------
    pooled = jnp.mean((h + local).reshape(B, T, D), axis=1)                           # (B, D)
    y = jnp.dot(pooled, outp_w, preferred_element_type=f32) + outp_b
    out_ref[...] = layernorm(y, fn_g, fn_b)


def mobilevit_encoder(x, params, nhead=2):
    """x: (B, T, input_dim) float32 — same batch_first layout as the PyTorch module."""
    B, T, Din = x.shape
    D = params["fn_g"].shape[-1]
    L = params["attn_in_w"].shape[0]
    d_hid = params["ff1_w"].shape[-1]
    HD = D // nhead
    eps = 1e-5

    # Fold eval-mode BatchNorm1d (+ conv bias) into per-channel scale/shift (exact in eval).
    bn1s = params["bn1_g"] * lax.rsqrt(params["bn1_var"] + eps)
    bn1b = params["bn1_b"] + (params["cb1"] - params["bn1_mean"]) * bn1s
    bn2s = params["bn2_g"] * lax.rsqrt(params["bn2_var"] + eps)
    bn2b = params["bn2_b"] + (params["cb2"] - params["bn2_mean"]) * bn2s

    # im2col for conv1 (fused with the zero padding); K padded to a sublane multiple.
    K1 = 3 * Din
    K1p = _round_up(K1, 8)
    x_pad = jnp.pad(x, ((0, 0), (1, 1), (0, 0)))
    x_cols = jnp.concatenate([x_pad[:, k:k + T, :] for k in range(3)], axis=-1)   # (B,T,3*Din)
    x_cols = jnp.pad(x_cols, ((0, 0), (0, 0), (0, K1p - K1))).reshape(B * T, K1p)

    # Fold the 1/sqrt(HD) attention scale into the Q columns of the in-projection.
    qscale = 1.0 / math.sqrt(HD)
    attn_in_w = params["attn_in_w"].at[:, :, :D].multiply(qscale)
    attn_in_b = params["attn_in_b"].at[:, :, :D].multiply(qscale)

    # Pack every weight matrix into ONE (rows, 128) array and every per-channel vector into ONE
    # (rows, 128) array: 3 input DMAs total (x, mats, vecs) instead of ~25 sub-KB transfers.
    def pad128(m):
        return jnp.pad(m, ((0, 0), (0, 128 - m.shape[-1])))

    mats = [pad128(jnp.pad(params["cw1"].reshape(K1, D), ((0, K1p - K1), (0, 0)))),
            pad128(params["cw2"].reshape(3 * D, D))]
    for l in range(L):
        mats += [pad128(attn_in_w[l]), pad128(params["attn_out_w"][l]),
                 pad128(params["ff1_w"][l]), pad128(params["ff2_w"][l])]
    mats.append(pad128(params["outp_w"]))
    mat_pack = jnp.concatenate(mats, axis=0)

    vecs = [bn1s, bn1b, bn2s, bn2b]
    for l in range(L):
        vecs += [attn_in_b[l], params["attn_out_b"][l],
                 params["ln1_g"][l], params["ln1_b"][l],
                 params["ff1_b"][l], params["ff2_b"][l],
                 params["ln2_g"][l], params["ln2_b"][l]]
    vecs += [params["outp_b"], params["fn_g"], params["fn_b"]]
    vec_pack = jnp.concatenate([pad128(v) for v in vecs], axis=0)
    vec_pack = jnp.pad(
        vec_pack, ((0, _round_up(vec_pack.shape[0], 8) - vec_pack.shape[0]), (0, 0)))

    kernel = functools.partial(
        mobilevit_encoder_kernel,
        B=B, T=T, D=D, nhead=nhead, d_hid=d_hid, L=L, K1p=K1p)

    vmem = pl.BlockSpec(memory_space=pltpu.MemorySpace.VMEM)
    # TODO(synk): for large B (esp. on v7x with 2 TensorCores / 64 MiB VMEM), add a grid over
    #             batch row-blocks with dimension_semantics=("parallel",) instead of the
    #             gridless all-resident call used here.
    return pl.pallas_call(
        kernel,
        out_shape=jax.ShapeDtypeStruct((B, D), jnp.float32),
        in_specs=[vmem, vmem, vmem],
        out_specs=vmem,
    )(x_cols, mat_pack, vec_pack)


def init_params(key, input_dim=6, d_model=32, nhead=2, d_hid=128, nlayers=2):
    """Deterministic init. Conv weights stored as (tap, in, out); Linear/MHA weights as (in, out)."""
    D = d_model
    keys = iter(jax.random.split(key, 40))

    def u(shape, scale):
        return jax.random.uniform(next(keys), shape, jnp.float32, -scale, scale)

    return {
        # conv block
        "cw1": u((3, input_dim, D), 1.0 / math.sqrt(3 * input_dim)),
        "cb1": u((1, D), 1.0 / math.sqrt(3 * input_dim)),
        "bn1_g": 1.0 + u((1, D), 0.1), "bn1_b": u((1, D), 0.1),
        "bn1_mean": u((1, D), 0.2), "bn1_var": 1.0 + u((1, D), 0.3),
        "cw2": u((3, D, D), 1.0 / math.sqrt(3 * D)),
        "cb2": u((1, D), 1.0 / math.sqrt(3 * D)),
        "bn2_g": 1.0 + u((1, D), 0.1), "bn2_b": u((1, D), 0.1),
        "bn2_mean": u((1, D), 0.2), "bn2_var": 1.0 + u((1, D), 0.3),
        # transformer encoder layers (stacked over nlayers on the leading axis)
        "attn_in_w": u((nlayers, D, 3 * D), 1.0 / math.sqrt(D)),
        "attn_in_b": u((nlayers, 1, 3 * D), 1.0 / math.sqrt(D)),
        "attn_out_w": u((nlayers, D, D), 1.0 / math.sqrt(D)),
        "attn_out_b": u((nlayers, 1, D), 1.0 / math.sqrt(D)),
        "ln1_g": 1.0 + u((nlayers, 1, D), 0.1), "ln1_b": u((nlayers, 1, D), 0.1),
        "ff1_w": u((nlayers, D, d_hid), 1.0 / math.sqrt(D)),
        "ff1_b": u((nlayers, 1, d_hid), 1.0 / math.sqrt(D)),
        "ff2_w": u((nlayers, d_hid, D), 1.0 / math.sqrt(d_hid)),
        "ff2_b": u((nlayers, 1, D), 1.0 / math.sqrt(d_hid)),
        "ln2_g": 1.0 + u((nlayers, 1, D), 0.1), "ln2_b": u((nlayers, 1, D), 0.1),
        # output head
        "outp_w": u((D, D), 1.0 / math.sqrt(D)),
        "outp_b": u((1, D), 1.0 / math.sqrt(D)),
        "fn_g": 1.0 + u((1, D), 0.1), "fn_b": u((1, D), 0.1),
    }


def _reference(x, params, nhead=2):
    """Pure-JAX mirror of the PyTorch eval-mode forward (for correctness checking)."""
    B, T, Din = x.shape
    D = params["fn_g"].shape[-1]
    L = params["attn_in_w"].shape[0]
    hd = D // nhead
    eps = 1e-5

    def conv1d(h, w, b):                     # h (B,T,Cin), w (3,Cin,Cout), b (1,Cout)
        hp = jnp.pad(h, ((0, 0), (1, 1), (0, 0)))
        return sum(hp[:, k:k + T, :] @ w[k] for k in range(3)) + b

    def bn(h, g, be, mean, var):
        return (h - mean) / jnp.sqrt(var + eps) * g + be

    def silu(v):
        return v * jax.nn.sigmoid(v)

    def ln(v, g, b):
        mu = v.mean(-1, keepdims=True)
        var = ((v - mu) ** 2).mean(-1, keepdims=True)
        return (v - mu) / jnp.sqrt(var + eps) * g + b

    h = silu(bn(conv1d(x, params["cw1"], params["cb1"]),
                params["bn1_g"], params["bn1_b"], params["bn1_mean"], params["bn1_var"]))
    local = silu(bn(conv1d(h, params["cw2"], params["cb2"]),
                    params["bn2_g"], params["bn2_b"], params["bn2_mean"], params["bn2_var"]))

    g = local
    for l in range(L):
        qkv = g @ params["attn_in_w"][l] + params["attn_in_b"][l]
        q, k, v = qkv[..., :D], qkv[..., D:2 * D], qkv[..., 2 * D:]
        qh = q.reshape(B, T, nhead, hd).transpose(0, 2, 1, 3)
        kh = k.reshape(B, T, nhead, hd).transpose(0, 2, 1, 3)
        vh = v.reshape(B, T, nhead, hd).transpose(0, 2, 1, 3)
        s = jnp.einsum('bhtd,bhsd->bhts', qh, kh) / jnp.sqrt(jnp.float32(hd))
        p = jax.nn.softmax(s, axis=-1)
        o = jnp.einsum('bhts,bhsd->bhtd', p, vh).transpose(0, 2, 1, 3).reshape(B, T, D)
        o = o @ params["attn_out_w"][l] + params["attn_out_b"][l]
        g = ln(g + o, params["ln1_g"][l], params["ln1_b"][l])
        ff = jnp.maximum(g @ params["ff1_w"][l] + params["ff1_b"][l], 0.0)
        ff = ff @ params["ff2_w"][l] + params["ff2_b"][l]
        g = ln(g + ff, params["ln2_g"][l], params["ln2_b"][l])

    fused = g + local
    pooled = fused.mean(axis=1)
    y = pooled @ params["outp_w"] + params["outp_b"]
    return ln(y, params["fn_g"], params["fn_b"])


if __name__ == "__main__":
    B, T, D_in, D = 2, 16, 6, 32
    key = jax.random.PRNGKey(0)
    kx, kp = jax.random.split(key)
    x = jax.random.normal(kx, (B, T, D_in), jnp.float32)
    params = init_params(kp, input_dim=D_in, d_model=D)

    out = jax.block_until_ready(mobilevit_encoder(x, params))

    ref = _reference(x, params)
    assert out.shape == (B, D)
    # Tolerance covers the EUP approximate reciprocal used in the in-kernel softmax.
    assert jnp.allclose(out, ref, atol=5e-3, rtol=5e-3), "mismatch vs reference"

    print("KERNEL_OK")
</pallas_src>

<mosaic_0001>
module attributes {stable_mosaic.version = 11 : i64} {
  func.func @mobilevit_encoder_kernel(%arg0: memref<32x24xf32, #tpu.memory_space<vmem>>, %arg1: memref<600x128xf32, #tpu.memory_space<vmem>>, %arg2: memref<24x128xf32, #tpu.memory_space<vmem>>, %arg3: memref<2x32xf32, #tpu.memory_space<vmem>>) attributes {dimension_semantics = [], scalar_prefetch = 0 : i64, scratch_operands = 0 : i64, tpu.core_type = #tpu.core_type<tc>} {
    %c0 = arith.constant 0 : index
    %c0_0 = arith.constant 0 : index
    %0 = vector.load %arg1[%c0, %c0_0] : memref<600x128xf32, #tpu.memory_space<vmem>>, vector<24x32xf32>
    %c24 = arith.constant 24 : index
    %c0_1 = arith.constant 0 : index
    %1 = vector.load %arg1[%c24, %c0_1] : memref<600x128xf32, #tpu.memory_space<vmem>>, vector<96x32xf32>
    %c568 = arith.constant 568 : index
    %c0_2 = arith.constant 0 : index
    %2 = vector.load %arg1[%c568, %c0_2] : memref<600x128xf32, #tpu.memory_space<vmem>>, vector<32x32xf32>
    %c0_3 = arith.constant 0 : index
    %c0_4 = arith.constant 0 : index
    %3 = vector.load %arg2[%c0_3, %c0_4] : memref<24x128xf32, #tpu.memory_space<vmem>>, vector<1x32xf32>
    %c1 = arith.constant 1 : index
    %c0_5 = arith.constant 0 : index
    %4 = vector.load %arg2[%c1, %c0_5] : memref<24x128xf32, #tpu.memory_space<vmem>>, vector<1x32xf32>
    %c2 = arith.constant 2 : index
    %c0_6 = arith.constant 0 : index
    %5 = vector.load %arg2[%c2, %c0_6] : memref<24x128xf32, #tpu.memory_space<vmem>>, vector<1x32xf32>
    %c3 = arith.constant 3 : index
    %c0_7 = arith.constant 0 : index
    %6 = vector.load %arg2[%c3, %c0_7] : memref<24x128xf32, #tpu.memory_space<vmem>>, vector<1x32xf32>
    %c20 = arith.constant 20 : index
    %c0_8 = arith.constant 0 : index
    %7 = vector.load %arg2[%c20, %c0_8] : memref<24x128xf32, #tpu.memory_space<vmem>>, vector<1x32xf32>
    %c21 = arith.constant 21 : index
    %c0_9 = arith.constant 0 : index
    %8 = vector.load %arg2[%c21, %c0_9] : memref<24x128xf32, #tpu.memory_space<vmem>>, vector<1x32xf32>
    %c22 = arith.constant 22 : index
    %c0_10 = arith.constant 0 : index
    %9 = vector.load %arg2[%c22, %c0_10] : memref<24x128xf32, #tpu.memory_space<vmem>>, vector<1x32xf32>
    %c0_11 = arith.constant 0 : index
    %c0_12 = arith.constant 0 : index
    %10 = vector.load %arg0[%c0_11, %c0_12] : memref<32x24xf32, #tpu.memory_space<vmem>>, vector<32x24xf32>
    %cst = arith.constant dense<0.000000e+00> : vector<32x32xf32>
    %11 = tpu.matmul %10, %0, %cst {dimension_numbers = #tpu.dot_dimension_numbers<[1], [0], [0], [1], [0, 0, 1, 1], [], []>} : vector<32x24xf32>, vector<24x32xf32>, vector<32x32xf32> -> vector<32x32xf32>
    %12 = vector.broadcast %3 : vector<1x32xf32> to vector<32x32xf32>
    %13 = arith.mulf %11, %12 : vector<32x32xf32>
    %14 = vector.broadcast %4 : vector<1x32xf32> to vector<32x32xf32>
    %15 = arith.addf %13, %14 : vector<32x32xf32>
    %16 = arith.negf %15 : vector<32x32xf32>
    %17 = math.exp %16 : vector<32x32xf32>
    %cst_13 = arith.constant 1.000000e+00 : f32
    %18 = vector.broadcast %cst_13 : f32 to vector<32x32xf32>
    %19 = arith.addf %18, %17 : vector<32x32xf32>
    %20 = arith.divf %18, %19 : vector<32x32xf32>
    %21 = arith.mulf %15, %20 : vector<32x32xf32>
    %22 = tpu.iota {dimensions = array<i32: 1>} : vector<2x16x32xi32>
    %23 = vector.shape_cast %22 : vector<2x16x32xi32> to vector<32x32xi32>
    %c0_i32 = arith.constant 0 : i32
    %24 = vector.broadcast %c0_i32 : i32 to vector<32x32xi32>
    %25 = arith.cmpi eq, %23, %24 : vector<32x32xi32>
    %c1_i32 = arith.constant 1 : i32
    %26 = tpu.dynamic_rotate %21 by %c1_i32 dim 0 : vector<32x32xf32>, i32 -> vector<32x32xf32>
    %cst_14 = arith.constant 0.000000e+00 : f32
    %27 = vector.broadcast %cst_14 : f32 to vector<32x32xf32>
    %28 = arith.select %25, %27, %26 : vector<32x32xi1>, vector<32x32xf32>
    %c15_i32 = arith.constant 15 : i32
    %29 = vector.broadcast %c15_i32 : i32 to vector<32x32xi32>
    %30 = arith.cmpi eq, %23, %29 : vector<32x32xi32>
    %c31_i32 = arith.constant 31 : i32
    %31 = tpu.dynamic_rotate %21 by %c31_i32 dim 0 : vector<32x32xf32>, i32 -> vector<32x32xf32>
    %cst_15 = arith.constant 0.000000e+00 : f32
    %32 = vector.broadcast %cst_15 : f32 to vector<32x32xf32>
    %33 = arith.select %30, %32, %31 : vector<32x32xi1>, vector<32x32xf32>
    %34 = tpu.concatenate %28, %21, %33 in 1 : vector<32x32xf32>, vector<32x32xf32>, vector<32x32xf32> -> vector<32x96xf32>
    %cst_16 = arith.constant dense<0.000000e+00> : vector<32x32xf32>
    %35 = tpu.matmul %34, %1, %cst_16 {dimension_numbers = #tpu.dot_dimension_numbers<[1], [0], [0], [1], [0, 0, 1, 1], [], []>} : vector<32x96xf32>, vector<96x32xf32>, vector<32x32xf32> -> vector<32x32xf32>
    %36 = vector.broadcast %5 : vector<1x32xf32> to vector<32x32xf32>
    %37 = arith.mulf %35, %36 : vector<32x32xf32>
    %38 = vector.broadcast %6 : vector<1x32xf32> to vector<32x32xf32>
    %39 = arith.addf %37, %38 : vector<32x32xf32>
    %40 = arith.negf %39 : vector<32x32xf32>
    %41 = math.exp %40 : vector<32x32xf32>
    %cst_17 = arith.constant 1.000000e+00 : f32
    %42 = vector.broadcast %cst_17 : f32 to vector<32x32xf32>
    %43 = arith.addf %42, %41 : vector<32x32xf32>
    %44 = arith.divf %42, %43 : vector<32x32xf32>
    %45 = arith.mulf %39, %44 : vector<32x32xf32>
    %c120 = arith.constant 120 : index
    %c0_18 = arith.constant 0 : index
    %46 = vector.load %arg1[%c120, %c0_18] : memref<600x128xf32, #tpu.memory_space<vmem>>, vector<32x96xf32>
    %c152 = arith.constant 152 : index
    %c0_19 = arith.constant 0 : index
    %47 = vector.load %arg1[%c152, %c0_19] : memref<600x128xf32, #tpu.memory_space<vmem>>, vector<32x32xf32>
    %c184 = arith.constant 184 : index
    %c0_20 = arith.constant 0 : index
    %48 = vector.load %arg1[%c184, %c0_20] : memref<600x128xf32, #tpu.memory_space<vmem>>, vector<32x128xf32>
    %c216 = arith.constant 216 : index
    %c0_21 = arith.constant 0 : index
    %49 = vector.load %arg1[%c216, %c0_21] : memref<600x128xf32, #tpu.memory_space<vmem>>, vector<128x32xf32>
    %c4 = arith.constant 4 : index
    %c0_22 = arith.constant 0 : index
    %50 = vector.load %arg2[%c4, %c0_22] : memref<24x128xf32, #tpu.memory_space<vmem>>, vector<1x96xf32>
    %c5 = arith.constant 5 : index
    %c0_23 = arith.constant 0 : index
    %51 = vector.load %arg2[%c5, %c0_23] : memref<24x128xf32, #tpu.memory_space<vmem>>, vector<1x32xf32>
    %c6 = arith.constant 6 : index
    %c0_24 = arith.constant 0 : index
    %52 = vector.load %arg2[%c6, %c0_24] : memref<24x128xf32, #tpu.memory_space<vmem>>, vector<1x32xf32>
    %c7 = arith.constant 7 : index
    %c0_25 = arith.constant 0 : index
    %53 = vector.load %arg2[%c7, %c0_25] : memref<24x128xf32, #tpu.memory_space<vmem>>, vector<1x32xf32>
    %c8 = arith.constant 8 : index
    %c0_26 = arith.constant 0 : index
    %54 = vector.load %arg2[%c8, %c0_26] : memref<24x128xf32, #tpu.memory_space<vmem>>, vector<1x128xf32>
    %c9 = arith.constant 9 : index
    %c0_27 = arith.constant 0 : index
    %55 = vector.load %arg2[%c9, %c0_27] : memref<24x128xf32, #tpu.memory_space<vmem>>, vector<1x32xf32>
    %c10 = arith.constant 10 : index
    %c0_28 = arith.constant 0 : index
    %56 = vector.load %arg2[%c10, %c0_28] : memref<24x128xf32, #tpu.memory_space<vmem>>, vector<1x32xf32>
    %c11 = arith.constant 11 : index
    %c0_29 = arith.constant 0 : index
    %57 = vector.load %arg2[%c11, %c0_29] : memref<24x128xf32, #tpu.memory_space<vmem>>, vector<1x32xf32>
    %cst_30 = arith.constant dense<0.000000e+00> : vector<32x96xf32>
    %58 = tpu.matmul %45, %46, %cst_30 {dimension_numbers = #tpu.dot_dimension_numbers<[1], [0], [0], [1], [0, 0, 1, 1], [], []>} : vector<32x32xf32>, vector<32x96xf32>, vector<32x96xf32> -> vector<32x96xf32>
    %59 = vector.broadcast %50 : vector<1x96xf32> to vector<32x96xf32>
    %60 = arith.addf %58, %59 : vector<32x96xf32>
    %61 = vector.shape_cast %60 : vector<32x96xf32> to vector<2x16x96xf32>
    %62 = vector.extract_strided_slice %61 {offsets = [0, 0, 0], sizes = [2, 16, 16], strides = [1, 1, 1]} : vector<2x16x96xf32> to vector<2x16x16xf32>
    %63 = vector.extract_strided_slice %61 {offsets = [0, 0, 16], sizes = [2, 16, 16], strides = [1, 1, 1]} : vector<2x16x96xf32> to vector<2x16x16xf32>
    %64 = tpu.concatenate %62, %63 in 0 : vector<2x16x16xf32>, vector<2x16x16xf32> -> vector<4x16x16xf32>
    %65 = vector.extract_strided_slice %61 {offsets = [0, 0, 32], sizes = [2, 16, 16], strides = [1, 1, 1]} : vector<2x16x96xf32> to vector<2x16x16xf32>
    %66 = vector.extract_strided_slice %61 {offsets = [0, 0, 48], sizes = [2, 16, 16], strides = [1, 1, 1]} : vector<2x16x96xf32> to vector<2x16x16xf32>
    %67 = tpu.concatenate %65, %66 in 0 : vector<2x16x16xf32>, vector<2x16x16xf32> -> vector<4x16x16xf32>
    %68 = vector.extract_strided_slice %61 {offsets = [0, 0, 64], sizes = [2, 16, 16], strides = [1, 1, 1]} : vector<2x16x96xf32> to vector<2x16x16xf32>
    %69 = vector.extract_strided_slice %61 {offsets = [0, 0, 80], sizes = [2, 16, 16], strides = [1, 1, 1]} : vector<2x16x96xf32> to vector<2x16x16xf32>
    %70 = tpu.concatenate %68, %69 in 0 : vector<2x16x16xf32>, vector<2x16x16xf32> -> vector<4x16x16xf32>
    "tpu.trace_start"() <{level = 10 : i32, message = "btd,bsd->bts"}> : () -> ()
    %cst_31 = arith.constant dense<0.000000e+00> : vector<4x16x16xf32>
    %71 = tpu.matmul %64, %67, %cst_31 {dimension_numbers = #tpu.dot_dimension_numbers<[2], [2], [1], [1], [0, 0, 0, 1, 1, 1], [0], [0]>} : vector<4x16x16xf32>, vector<4x16x16xf32>, vector<4x16x16xf32> -> vector<4x16x16xf32>
    "tpu.trace_stop"() : () -> ()
    %cst_32 = arith.constant dense<0xFF800000> : vector<4x16xf32>
    %72 = vector.multi_reduction <maximumf>, %71, %cst_32 [2] : vector<4x16x16xf32> to vector<4x16xf32>
    %73 = vector.shape_cast %72 : vector<4x16xf32> to vector<4x16x1xf32>
    %74 = vector.broadcast %73 : vector<4x16x1xf32> to vector<4x16x16xf32>
    %75 = arith.subf %71, %74 : vector<4x16x16xf32>
    %76 = math.exp %75 : vector<4x16x16xf32>
    %cst_33 = arith.constant dense<0.000000e+00> : vector<4x16xf32>
    %77 = vector.multi_reduction <add>, %76, %cst_33 [2] : vector<4x16x16xf32> to vector<4x16xf32>
    %78 = vector.shape_cast %77 : vector<4x16xf32> to vector<4x16x1xf32>
    %79 = tpu.reciprocal %78 {approx = true} : vector<4x16x1xf32> -> vector<4x16x1xf32>
    %80 = vector.broadcast %79 : vector<4x16x1xf32> to vector<4x16x16xf32>
    %81 = arith.mulf %76, %80 : vector<4x16x16xf32>
    "tpu.trace_start"() <{level = 10 : i32, message = "bts,bsd->btd"}> : () -> ()
    %cst_34 = arith.constant dense<0.000000e+00> : vector<4x16x16xf32>
    %82 = tpu.matmul %81, %70, %cst_34 {dimension_numbers = #tpu.dot_dimension_numbers<[2], [1], [1], [2], [0, 0, 0, 1, 1, 2], [0], [0]>} : vector<4x16x16xf32>, vector<4x16x16xf32>, vector<4x16x16xf32> -> vector<4x16x16xf32>
    "tpu.trace_stop"() : () -> ()
    %83 = vector.extract_strided_slice %82 {offsets = [0, 0, 0], sizes = [2, 16, 16], strides = [1, 1, 1]} : vector<4x16x16xf32> to vector<2x16x16xf32>
    %84 = vector.extract_strided_slice %82 {offsets = [2, 0, 0], sizes = [2, 16, 16], strides = [1, 1, 1]} : vector<4x16x16xf32> to vector<2x16x16xf32>
    %85 = tpu.concatenate %83, %84 in 2 : vector<2x16x16xf32>, vector<2x16x16xf32> -> vector<2x16x32xf32>
    %86 = vector.shape_cast %85 : vector<2x16x32xf32> to vector<32x32xf32>
    %cst_35 = arith.constant dense<0.000000e+00> : vector<32x32xf32>
    %87 = tpu.matmul %86, %47, %cst_35 {dimension_numbers = #tpu.dot_dimension_numbers<[1], [0], [0], [1], [0, 0, 1, 1], [], []>} : vector<32x32xf32>, vector<32x32xf32>, vector<32x32xf32> -> vector<32x32xf32>
    %88 = vector.broadcast %51 : vector<1x32xf32> to vector<32x32xf32>
    %89 = arith.addf %87, %88 : vector<32x32xf32>
    %90 = arith.addf %45, %89 : vector<32x32xf32>
    %cst_36 = arith.constant dense<0.000000e+00> : vector<32xf32>
    %91 = vector.multi_reduction <add>, %90, %cst_36 [1] : vector<32x32xf32> to vector<32xf32>
    %92 = vector.shape_cast %91 : vector<32xf32> to vector<32x1xf32>
    %cst_37 = arith.constant 3.200000e+01 : f32
    %93 = vector.broadcast %cst_37 : f32 to vector<32x1xf32>
    %94 = arith.divf %92, %93 : vector<32x1xf32>
    %95 = vector.broadcast %94 : vector<32x1xf32> to vector<32x32xf32>
    %96 = arith.subf %90, %95 : vector<32x32xf32>
    %97 = arith.mulf %96, %96 : vector<32x32xf32>
    %cst_38 = arith.constant dense<0.000000e+00> : vector<32xf32>
    %98 = vector.multi_reduction <add>, %97, %cst_38 [1] : vector<32x32xf32> to vector<32xf32>
    %99 = vector.shape_cast %98 : vector<32xf32> to vector<32x1xf32>
    %cst_39 = arith.constant 3.200000e+01 : f32
    %100 = vector.broadcast %cst_39 : f32 to vector<32x1xf32>
    %101 = arith.divf %99, %100 : vector<32x1xf32>
    %cst_40 = arith.constant 9.99999974E-6 : f32
    %102 = vector.broadcast %cst_40 : f32 to vector<32x1xf32>
    %103 = arith.addf %101, %102 : vector<32x1xf32>
    %104 = math.rsqrt %103 : vector<32x1xf32>
    %105 = vector.broadcast %104 : vector<32x1xf32> to vector<32x32xf32>
    %106 = arith.mulf %96, %105 : vector<32x32xf32>
    %107 = vector.broadcast %52 : vector<1x32xf32> to vector<32x32xf32>
    %108 = arith.mulf %106, %107 : vector<32x32xf32>
    %109 = vector.broadcast %53 : vector<1x32xf32> to vector<32x32xf32>
    %110 = arith.addf %108, %109 : vector<32x32xf32>
    %cst_41 = arith.constant dense<0.000000e+00> : vector<32x128xf32>
    %111 = tpu.matmul %110, %48, %cst_41 {dimension_numbers = #tpu.dot_dimension_numbers<[1], [0], [0], [1], [0, 0, 1, 1], [], []>} : vector<32x32xf32>, vector<32x128xf32>, vector<32x128xf32> -> vector<32x128xf32>
    %112 = vector.broadcast %54 : vector<1x128xf32> to vector<32x128xf32>
    %113 = arith.addf %111, %112 : vector<32x128xf32>
    %cst_42 = arith.constant 0.000000e+00 : f32
    %114 = vector.broadcast %cst_42 : f32 to vector<32x128xf32>
    %115 = arith.maximumf %113, %114 : vector<32x128xf32>
    %cst_43 = arith.constant dense<0.000000e+00> : vector<32x32xf32>
    %116 = tpu.matmul %115, %49, %cst_43 {dimension_numbers = #tpu.dot_dimension_numbers<[1], [0], [0], [1], [0, 0, 1, 1], [], []>} : vector<32x128xf32>, vector<128x32xf32>, vector<32x32xf32> -> vector<32x32xf32>
    %117 = vector.broadcast %55 : vector<1x32xf32> to vector<32x32xf32>
    %118 = arith.addf %116, %117 : vector<32x32xf32>
    %119 = arith.addf %110, %118 : vector<32x32xf32>
    %cst_44 = arith.constant dense<0.000000e+00> : vector<32xf32>
    %120 = vector.multi_reduction <add>, %119, %cst_44 [1] : vector<32x32xf32> to vector<32xf32>
    %121 = vector.shape_cast %120 : vector<32xf32> to vector<32x1xf32>
    %cst_45 = arith.constant 3.200000e+01 : f32
    %122 = vector.broadcast %cst_45 : f32 to vector<32x1xf32>
    %123 = arith.divf %121, %122 : vector<32x1xf32>
    %124 = vector.broadcast %123 : vector<32x1xf32> to vector<32x32xf32>
    %125 = arith.subf %119, %124 : vector<32x32xf32>
    %126 = arith.mulf %125, %125 : vector<32x32xf32>
    %cst_46 = arith.constant dense<0.000000e+00> : vector<32xf32>
    %127 = vector.multi_reduction <add>, %126, %cst_46 [1] : vector<32x32xf32> to vector<32xf32>
    %128 = vector.shape_cast %127 : vector<32xf32> to vector<32x1xf32>
    %cst_47 = arith.constant 3.200000e+01 : f32
    %129 = vector.broadcast %cst_47 : f32 to vector<32x1xf32>
    %130 = arith.divf %128, %129 : vector<32x1xf32>
    %cst_48 = arith.constant 9.99999974E-6 : f32
    %131 = vector.broadcast %cst_48 : f32 to vector<32x1xf32>
    %132 = arith.addf %130, %131 : vector<32x1xf32>
    %133 = math.rsqrt %132 : vector<32x1xf32>
    %134 = vector.broadcast %133 : vector<32x1xf32> to vector<32x32xf32>
    %135 = arith.mulf %125, %134 : vector<32x32xf32>
    %136 = vector.broadcast %56 : vector<1x32xf32> to vector<32x32xf32>
    %137 = arith.mulf %135, %136 : vector<32x32xf32>
    %138 = vector.broadcast %57 : vector<1x32xf32> to vector<32x32xf32>
    %139 = arith.addf %137, %138 : vector<32x32xf32>
    %c344 = arith.constant 344 : index
    %c0_49 = arith.constant 0 : index
    %140 = vector.load %arg1[%c344, %c0_49] : memref<600x128xf32, #tpu.memory_space<vmem>>, vector<32x96xf32>
    %c376 = arith.constant 376 : index
    %c0_50 = arith.constant 0 : index
    %141 = vector.load %arg1[%c376, %c0_50] : memref<600x128xf32, #tpu.memory_space<vmem>>, vector<32x32xf32>
    %c408 = arith.constant 408 : index
    %c0_51 = arith.constant 0 : index
    %142 = vector.load %arg1[%c408, %c0_51] : memref<600x128xf32, #tpu.memory_space<vmem>>, vector<32x128xf32>
    %c440 = arith.constant 440 : index
    %c0_52 = arith.constant 0 : index
    %143 = vector.load %arg1[%c440, %c0_52] : memref<600x128xf32, #tpu.memory_space<vmem>>, vector<128x32xf32>
    %c12 = arith.constant 12 : index
    %c0_53 = arith.constant 0 : index
    %144 = vector.load %arg2[%c12, %c0_53] : memref<24x128xf32, #tpu.memory_space<vmem>>, vector<1x96xf32>
    %c13 = arith.constant 13 : index
    %c0_54 = arith.constant 0 : index
    %145 = vector.load %arg2[%c13, %c0_54] : memref<24x128xf32, #tpu.memory_space<vmem>>, vector<1x32xf32>
    %c14 = arith.constant 14 : index
    %c0_55 = arith.constant 0 : index
    %146 = vector.load %arg2[%c14, %c0_55] : memref<24x128xf32, #tpu.memory_space<vmem>>, vector<1x32xf32>
    %c15 = arith.constant 15 : index
    %c0_56 = arith.constant 0 : index
    %147 = vector.load %arg2[%c15, %c0_56] : memref<24x128xf32, #tpu.memory_space<vmem>>, vector<1x32xf32>
    %c16 = arith.constant 16 : index
    %c0_57 = arith.constant 0 : index
    %148 = vector.load %arg2[%c16, %c0_57] : memref<24x128xf32, #tpu.memory_space<vmem>>, vector<1x128xf32>
    %c17 = arith.constant 17 : index
    %c0_58 = arith.constant 0 : index
    %149 = vector.load %arg2[%c17, %c0_58] : memref<24x128xf32, #tpu.memory_space<vmem>>, vector<1x32xf32>
    %c18 = arith.constant 18 : index
    %c0_59 = arith.constant 0 : index
    %150 = vector.load %arg2[%c18, %c0_59] : memref<24x128xf32, #tpu.memory_space<vmem>>, vector<1x32xf32>
    %c19 = arith.constant 19 : index
    %c0_60 = arith.constant 0 : index
    %151 = vector.load %arg2[%c19, %c0_60] : memref<24x128xf32, #tpu.memory_space<vmem>>, vector<1x32xf32>
    %cst_61 = arith.constant dense<0.000000e+00> : vector<32x96xf32>
    %152 = tpu.matmul %139, %140, %cst_61 {dimension_numbers = #tpu.dot_dimension_numbers<[1], [0], [0], [1], [0, 0, 1, 1], [], []>} : vector<32x32xf32>, vector<32x96xf32>, vector<32x96xf32> -> vector<32x96xf32>
    %153 = vector.broadcast %144 : vector<1x96xf32> to vector<32x96xf32>
    %154 = arith.addf %152, %153 : vector<32x96xf32>
    %155 = vector.shape_cast %154 : vector<32x96xf32> to vector<2x16x96xf32>
    %156 = vector.extract_strided_slice %155 {offsets = [0, 0, 0], sizes = [2, 16, 16], strides = [1, 1, 1]} : vector<2x16x96xf32> to vector<2x16x16xf32>
    %157 = vector.extract_strided_slice %155 {offsets = [0, 0, 16], sizes = [2, 16, 16], strides = [1, 1, 1]} : vector<2x16x96xf32> to vector<2x16x16xf32>
    %158 = tpu.concatenate %156, %157 in 0 : vector<2x16x16xf32>, vector<2x16x16xf32> -> vector<4x16x16xf32>
    %159 = vector.extract_strided_slice %155 {offsets = [0, 0, 32], sizes = [2, 16, 16], strides = [1, 1, 1]} : vector<2x16x96xf32> to vector<2x16x16xf32>
    %160 = vector.extract_strided_slice %155 {offsets = [0, 0, 48], sizes = [2, 16, 16], strides = [1, 1, 1]} : vector<2x16x96xf32> to vector<2x16x16xf32>
    %161 = tpu.concatenate %159, %160 in 0 : vector<2x16x16xf32>, vector<2x16x16xf32> -> vector<4x16x16xf32>
    %162 = vector.extract_strided_slice %155 {offsets = [0, 0, 64], sizes = [2, 16, 16], strides = [1, 1, 1]} : vector<2x16x96xf32> to vector<2x16x16xf32>
    %163 = vector.extract_strided_slice %155 {offsets = [0, 0, 80], sizes = [2, 16, 16], strides = [1, 1, 1]} : vector<2x16x96xf32> to vector<2x16x16xf32>
    %164 = tpu.concatenate %162, %163 in 0 : vector<2x16x16xf32>, vector<2x16x16xf32> -> vector<4x16x16xf32>
    "tpu.trace_start"() <{level = 10 : i32, message = "btd,bsd->bts"}> : () -> ()
    %cst_62 = arith.constant dense<0.000000e+00> : vector<4x16x16xf32>
    %165 = tpu.matmul %158, %161, %cst_62 {dimension_numbers = #tpu.dot_dimension_numbers<[2], [2], [1], [1], [0, 0, 0, 1, 1, 1], [0], [0]>} : vector<4x16x16xf32>, vector<4x16x16xf32>, vector<4x16x16xf32> -> vector<4x16x16xf32>
    "tpu.trace_stop"() : () -> ()
    %cst_63 = arith.constant dense<0xFF800000> : vector<4x16xf32>
    %166 = vector.multi_reduction <maximumf>, %165, %cst_63 [2] : vector<4x16x16xf32> to vector<4x16xf32>
    %167 = vector.shape_cast %166 : vector<4x16xf32> to vector<4x16x1xf32>
    %168 = vector.broadcast %167 : vector<4x16x1xf32> to vector<4x16x16xf32>
    %169 = arith.subf %165, %168 : vector<4x16x16xf32>
    %170 = math.exp %169 : vector<4x16x16xf32>
    %cst_64 = arith.constant dense<0.000000e+00> : vector<4x16xf32>
    %171 = vector.multi_reduction <add>, %170, %cst_64 [2] : vector<4x16x16xf32> to vector<4x16xf32>
    %172 = vector.shape_cast %171 : vector<4x16xf32> to vector<4x16x1xf32>
    %173 = tpu.reciprocal %172 {approx = true} : vector<4x16x1xf32> -> vector<4x16x1xf32>
    %174 = vector.broadcast %173 : vector<4x16x1xf32> to vector<4x16x16xf32>
    %175 = arith.mulf %170, %174 : vector<4x16x16xf32>
    "tpu.trace_start"() <{level = 10 : i32, message = "bts,bsd->btd"}> : () -> ()
    %cst_65 = arith.constant dense<0.000000e+00> : vector<4x16x16xf32>
    %176 = tpu.matmul %175, %164, %cst_65 {dimension_numbers = #tpu.dot_dimension_numbers<[2], [1], [1], [2], [0, 0, 0, 1, 1, 2], [0], [0]>} : vector<4x16x16xf32>, vector<4x16x16xf32>, vector<4x16x16xf32> -> vector<4x16x16xf32>
    "tpu.trace_stop"() : () -> ()
    %177 = vector.extract_strided_slice %176 {offsets = [0, 0, 0], sizes = [2, 16, 16], strides = [1, 1, 1]} : vector<4x16x16xf32> to vector<2x16x16xf32>
    %178 = vector.extract_strided_slice %176 {offsets = [2, 0, 0], sizes = [2, 16, 16], strides = [1, 1, 1]} : vector<4x16x16xf32> to vector<2x16x16xf32>
    %179 = tpu.concatenate %177, %178 in 2 : vector<2x16x16xf32>, vector<2x16x16xf32> -> vector<2x16x32xf32>
    %180 = vector.shape_cast %179 : vector<2x16x32xf32> to vector<32x32xf32>
    %cst_66 = arith.constant dense<0.000000e+00> : vector<32x32xf32>
    %181 = tpu.matmul %180, %141, %cst_66 {dimension_numbers = #tpu.dot_dimension_numbers<[1], [0], [0], [1], [0, 0, 1, 1], [], []>} : vector<32x32xf32>, vector<32x32xf32>, vector<32x32xf32> -> vector<32x32xf32>
    %182 = vector.broadcast %145 : vector<1x32xf32> to vector<32x32xf32>
    %183 = arith.addf %181, %182 : vector<32x32xf32>
    %184 = arith.addf %139, %183 : vector<32x32xf32>
    %cst_67 = arith.constant dense<0.000000e+00> : vector<32xf32>
    %185 = vector.multi_reduction <add>, %184, %cst_67 [1] : vector<32x32xf32> to vector<32xf32>
    %186 = vector.shape_cast %185 : vector<32xf32> to vector<32x1xf32>
    %cst_68 = arith.constant 3.200000e+01 : f32
    %187 = vector.broadcast %cst_68 : f32 to vector<32x1xf32>
    %188 = arith.divf %186, %187 : vector<32x1xf32>
    %189 = vector.broadcast %188 : vector<32x1xf32> to vector<32x32xf32>
    %190 = arith.subf %184, %189 : vector<32x32xf32>
    %191 = arith.mulf %190, %190 : vector<32x32xf32>
    %cst_69 = arith.constant dense<0.000000e+00> : vector<32xf32>
    %192 = vector.multi_reduction <add>, %191, %cst_69 [1] : vector<32x32xf32> to vector<32xf32>
    %193 = vector.shape_cast %192 : vector<32xf32> to vector<32x1xf32>
    %cst_70 = arith.constant 3.200000e+01 : f32
    %194 = vector.broadcast %cst_70 : f32 to vector<32x1xf32>
    %195 = arith.divf %193, %194 : vector<32x1xf32>
    %cst_71 = arith.constant 9.99999974E-6 : f32
    %196 = vector.broadcast %cst_71 : f32 to vector<32x1xf32>
    %197 = arith.addf %195, %196 : vector<32x1xf32>
    %198 = math.rsqrt %197 : vector<32x1xf32>
    %199 = vector.broadcast %198 : vector<32x1xf32> to vector<32x32xf32>
    %200 = arith.mulf %190, %199 : vector<32x32xf32>
    %201 = vector.broadcast %146 : vector<1x32xf32> to vector<32x32xf32>
    %202 = arith.mulf %200, %201 : vector<32x32xf32>
    %203 = vector.broadcast %147 : vector<1x32xf32> to vector<32x32xf32>
    %204 = arith.addf %202, %203 : vector<32x32xf32>
    %cst_72 = arith.constant dense<0.000000e+00> : vector<32x128xf32>
    %205 = tpu.matmul %204, %142, %cst_72 {dimension_numbers = #tpu.dot_dimension_numbers<[1], [0], [0], [1], [0, 0, 1, 1], [], []>} : vector<32x32xf32>, vector<32x128xf32>, vector<32x128xf32> -> vector<32x128xf32>
    %206 = vector.broadcast %148 : vector<1x128xf32> to vector<32x128xf32>
    %207 = arith.addf %205, %206 : vector<32x128xf32>
    %cst_73 = arith.constant 0.000000e+00 : f32
    %208 = vector.broadcast %cst_73 : f32 to vector<32x128xf32>
    %209 = arith.maximumf %207, %208 : vector<32x128xf32>
    %cst_74 = arith.constant dense<0.000000e+00> : vector<32x32xf32>
    %210 = tpu.matmul %209, %143, %cst_74 {dimension_numbers = #tpu.dot_dimension_numbers<[1], [0], [0], [1], [0, 0, 1, 1], [], []>} : vector<32x128xf32>, vector<128x32xf32>, vector<32x32xf32> -> vector<32x32xf32>
    %211 = vector.broadcast %149 : vector<1x32xf32> to vector<32x32xf32>
    %212 = arith.addf %210, %211 : vector<32x32xf32>
    %213 = arith.addf %204, %212 : vector<32x32xf32>
    %cst_75 = arith.constant dense<0.000000e+00> : vector<32xf32>
    %214 = vector.multi_reduction <add>, %213, %cst_75 [1] : vector<32x32xf32> to vector<32xf32>
    %215 = vector.shape_cast %214 : vector<32xf32> to vector<32x1xf32>
    %cst_76 = arith.constant 3.200000e+01 : f32
    %216 = vector.broadcast %cst_76 : f32 to vector<32x1xf32>
    %217 = arith.divf %215, %216 : vector<32x1xf32>
    %218 = vector.broadcast %217 : vector<32x1xf32> to vector<32x32xf32>
    %219 = arith.subf %213, %218 : vector<32x32xf32>
    %220 = arith.mulf %219, %219 : vector<32x32xf32>
    %cst_77 = arith.constant dense<0.000000e+00> : vector<32xf32>
    %221 = vector.multi_reduction <add>, %220, %cst_77 [1] : vector<32x32xf32> to vector<32xf32>
    %222 = vector.shape_cast %221 : vector<32xf32> to vector<32x1xf32>
    %cst_78 = arith.constant 3.200000e+01 : f32
    %223 = vector.broadcast %cst_78 : f32 to vector<32x1xf32>
    %224 = arith.divf %222, %223 : vector<32x1xf32>
    %cst_79 = arith.constant 9.99999974E-6 : f32
    %225 = vector.broadcast %cst_79 : f32 to vector<32x1xf32>
    %226 = arith.addf %224, %225 : vector<32x1xf32>
    %227 = math.rsqrt %226 : vector<32x1xf32>
    %228 = vector.broadcast %227 : vector<32x1xf32> to vector<32x32xf32>
    %229 = arith.mulf %219, %228 : vector<32x32xf32>
    %230 = vector.broadcast %150 : vector<1x32xf32> to vector<32x32xf32>
    %231 = arith.mulf %229, %230 : vector<32x32xf32>
    %232 = vector.broadcast %151 : vector<1x32xf32> to vector<32x32xf32>
    %233 = arith.addf %231, %232 : vector<32x32xf32>
    %234 = arith.addf %233, %45 : vector<32x32xf32>
    %235 = vector.shape_cast %234 : vector<32x32xf32> to vector<2x16x32xf32>
    %cst_80 = arith.constant dense<0.000000e+00> : vector<2x32xf32>
    %236 = vector.multi_reduction <add>, %235, %cst_80 [1] : vector<2x16x32xf32> to vector<2x32xf32>
    %cst_81 = arith.constant 1.600000e+01 : f32
    %237 = vector.broadcast %cst_81 : f32 to vector<2x32xf32>
    %238 = arith.divf %236, %237 : vector<2x32xf32>
    %cst_82 = arith.constant dense<0.000000e+00> : vector<2x32xf32>
    %239 = tpu.matmul %238, %2, %cst_82 {dimension_numbers = #tpu.dot_dimension_numbers<[1], [0], [0], [1], [0, 0, 1, 1], [], []>} : vector<2x32xf32>, vector<32x32xf32>, vector<2x32xf32> -> vector<2x32xf32>
    %240 = vector.broadcast %7 : vector<1x32xf32> to vector<2x32xf32>
    %241 = arith.addf %239, %240 : vector<2x32xf32>
    %cst_83 = arith.constant dense<0.000000e+00> : vector<2xf32>
    %242 = vector.multi_reduction <add>, %241, %cst_83 [1] : vector<2x32xf32> to vector<2xf32>
    %243 = vector.shape_cast %242 : vector<2xf32> to vector<2x1xf32>
    %cst_84 = arith.constant 3.200000e+01 : f32
    %244 = vector.broadcast %cst_84 : f32 to vector<2x1xf32>
    %245 = arith.divf %243, %244 : vector<2x1xf32>
    %246 = vector.broadcast %245 : vector<2x1xf32> to vector<2x32xf32>
    %247 = arith.subf %241, %246 : vector<2x32xf32>
    %248 = arith.mulf %247, %247 : vector<2x32xf32>
    %cst_85 = arith.constant dense<0.000000e+00> : vector<2xf32>
    %249 = vector.multi_reduction <add>, %248, %cst_85 [1] : vector<2x32xf32> to vector<2xf32>
    %250 = vector.shape_cast %249 : vector<2xf32> to vector<2x1xf32>
    %cst_86 = arith.constant 3.200000e+01 : f32
    %251 = vector.broadcast %cst_86 : f32 to vector<2x1xf32>
    %252 = arith.divf %250, %251 : vector<2x1xf32>
    %cst_87 = arith.constant 9.99999974E-6 : f32
    %253 = vector.broadcast %cst_87 : f32 to vector<2x1xf32>
    %254 = arith.addf %252, %253 : vector<2x1xf32>
    %255 = math.rsqrt %254 : vector<2x1xf32>
    %256 = vector.broadcast %255 : vector<2x1xf32> to vector<2x32xf32>
    %257 = arith.mulf %247, %256 : vector<2x32xf32>
    %258 = vector.broadcast %8 : vector<1x32xf32> to vector<2x32xf32>
    %259 = arith.mulf %257, %258 : vector<2x32xf32>
    %260 = vector.broadcast %9 : vector<1x32xf32> to vector<2x32xf32>
    %261 = arith.addf %259, %260 : vector<2x32xf32>
    %c0_88 = arith.constant 0 : index
    %c0_89 = arith.constant 0 : index
    %262 = vector.load %arg3[%c0_88, %c0_89] : memref<2x32xf32, #tpu.memory_space<vmem>>, vector<2x32xf32>
    tpu.vector_store %arg3[%c0_88, %c0_89], %261 {strides = array<i32>} : memref<2x32xf32, #tpu.memory_space<vmem>>, vector<2x32xf32>,
    return
  }
}

</mosaic_0001>

<llo_original>
// kernel: tpu_custom_call.1
$region0: #{tpu_custom_call.1}
  #allocation0 [shape = 'u32[]', space=smem, size = 0x4, offset = 0x4, fixed_abs, tag = 'smem constant byte address 0x4 - core index']
  #allocation1 [shape = 'u32[144,128]{1,0:T(1,128)}', space=vmem, size = 0x12000, scoped, tag = 'internal scratch']
  %s0 = inlined_call_operand.vmem [shape: f32[32,24], index: 0, kind: input, shape index: {}]
  %s1 = inlined_call_operand.hbm [shape: f32[600,128], index: 1, kind: input, shape index: {}]
  %s2 = inlined_call_operand.vmem [shape: f32[24,128], index: 2, kind: input, shape index: {}]
  %s3 = inlined_call_operand.hbm [shape: f32[2,32], index: 3, kind: output, shape index: {}]
  %s4 = sld [smem:[#allocation0]]
  $region26: #{tpu_custom_call.1} parent=0
    _
  %s6 = ssub.s32 1, %s4
  %s7 = scalar_select 0, %s6, %s4
  $region1: #{tpu_custom_call.1} parent=0
    #allocation2 [shape = 'u8[307200]{0}', space=vmem, size = 0x4b000, scoped, tag = 'input window, operand 1, single buffered']
    #allocation3 [shape = 's32[1]{0}', space=sflag, size = 0x4, scoped, tag = 'scoped memory for tpu_custom_call.1']
    #allocation4 [shape = 's32[1]{0}', space=sflag, size = 0x4, scoped, tag = 'scoped memory for tpu_custom_call.1']
    #allocation5 [shape = 'u8[1024]{0}', space=vmem, size = 0x400, scoped, tag = 'output window, operand 0, single buffered']
    %8 = vsyncpa [#allocation3], 0
    %9 = vsyncpa [#allocation4], 0
    // Predicated region
    $region2: #{tpu_custom_call.1} parent=1 // pred_check
      _
    $region3: #{tpu_custom_call.1} parent=1 // pred_check_branch
      %11 = sbr.rel (0) target = $region5
    $region4: #{tpu_custom_call.1} parent=1 // pred_region
      _
    $region5: #{tpu_custom_call.1} parent=1 // pred_fallthru
      _
    // Predicated region
    $region6: #{tpu_custom_call.1} parent=1 // pred_check
      _
    $region7: #{tpu_custom_call.1} parent=1 // pred_check_branch
      %13 = sbr.rel (0) target = $region9
    $region8: #{tpu_custom_call.1} parent=1 // pred_region
      %s15 = ssub.s32 9600, 9600
      %16 = vsyncadd [#allocation3], %s15
      %s17 = sshll.u32 [#allocation2], 4
      %s18 = int_to_ptr.vmem [resolvable:$true] %s17
      %23 = dma.hbm_to_vmem [thread:$0]  %s1, 9600, %s18, [#allocation3], 128, 128, 8
    $region9: #{tpu_custom_call.1} parent=1 // pred_fallthru
      _
    // Predicated region
    $region10: #{tpu_custom_call.1} parent=1 // pred_check
      _
    $region11: #{tpu_custom_call.1} parent=1 // pred_check_branch
      %25 = sbr.rel (0) target = $region13
    $region12: #{tpu_custom_call.1} parent=1 // pred_region
      _
    $region13: #{tpu_custom_call.1} parent=1 // pred_fallthru
      _
    // Predicated region
    $region14: #{tpu_custom_call.1} parent=1 // pred_check
      _
    $region15: #{tpu_custom_call.1} parent=1 // pred_check_branch
      %27 = sbr.rel (0) target = $region17
    $region16: #{tpu_custom_call.1} parent=1 // pred_region
      %28 = dma.done [#allocation3], 9600
    $region17: #{tpu_custom_call.1} parent=1 // pred_fallthru
      _
    %v29 = vld [vmem:[#allocation2] sm:$0xff]
    %v30 = vld [vmem:[#allocation2 + $0x8] sm:$0xff]
    %v31 = vld [vmem:[#allocation2 + $0x10] sm:$0xff]
    %v32 = vld [vmem:[#allocation2 + $0x18] sm:$0xff]
    %v33 = vld [vmem:[#allocation2 + $0x20] sm:$0xff]
    %v34 = vld [vmem:[#allocation2 + $0x28] sm:$0xff]
    %v35 = vld [vmem:[#allocation2 + $0x30] sm:$0xff]
    %v36 = vld [vmem:[#allocation2 + $0x38] sm:$0xff]
    %v37 = vld [vmem:[#allocation2 + $0x40] sm:$0xff]
    %v38 = vld [vmem:[#allocation2 + $0x48] sm:$0xff]
    %v39 = vld [vmem:[#allocation2 + $0x50] sm:$0xff]
    %v40 = vld [vmem:[#allocation2 + $0x58] sm:$0xff]
    %v41 = vld [vmem:[#allocation2 + $0x60] sm:$0xff]
    %v42 = vld [vmem:[#allocation2 + $0x68] sm:$0xff]
    %v43 = vld [vmem:[#allocation2 + $0x70] sm:$0xff]
    %v44 = vld [vmem:[#allocation2 + $0x238] sm:$0xff]
    %v45 = vld [vmem:[#allocation2 + $0x240] sm:$0xff]
    %v46 = vld [vmem:[#allocation2 + $0x248] sm:$0xff]
    %v47 = vld [vmem:[#allocation2 + $0x250] sm:$0xff]
    %v48 = vld [vmem:[%s2] sm:$0x1]
    %v49 = vld [vmem:[%s2 + $0x1] sm:$0x1]
    %v50 = vld [vmem:[%s2 + $0x2] sm:$0x1]
    %v51 = vld [vmem:[%s2 + $0x3] sm:$0x1]
    %v52 = vld [vmem:[%s2 + $0x14] sm:$0x1]
    %v53 = vld [vmem:[%s2 + $0x15] sm:$0x1]
    %v54 = vld [vmem:[%s2 + $0x16] sm:$0x1]
    %v55 = vld [vmem:[%s0] sm:$0xff]
    %v56 = vld [vmem:[%s0 + $0x8] sm:$0xff]
    %v57 = vld [vmem:[%s0 + $0x10] sm:$0xff]
    %v58 = vld [vmem:[%s0 + $0x18] sm:$0xff]
    %vm59 = vcmask 195584
    %v61 = vsel %vm59, %v55, 0
    %v64 = vsel %vm59, %v56, 0
    %v67 = vsel %vm59, %v57, 0
    %v70 = vsel %vm59, %v58, 0
    %72 = vmatprep.subr.mxu0 0.0
    %73 = vmatpush1.msra.mxu0 %v29
    %74 = vmatprep.subr.mxu0 0.0
    %75 = vmatpush1.msra.mxu0 %v30
    %76 = vmatprep.subr.mxu0 0.0
    %77 = vmatpush1.msra.mxu0 %v31
    %78 = vmatprep.subr.mxu0 0.0
    %79 = vmatpush1.msra.mxu0 0.0
    %80 = vmatprep.subr.mxu0 0.0
    %81 = vmatpush1.msra.mxu0 0.0
    %82 = vmatprep.subr.mxu0 0.0
    %83 = vmatpush1.msra.mxu0 0.0
    %84 = vmatprep.subr.mxu0 0.0
    %85 = vmatpush1.msra.mxu0 0.0
    %86 = vmatprep.subr.mxu0 0.0
    %87 = vmatpush1.msra.mxu0 0.0
    %88 = vmatprep.subr.mxu0 0.0
    %89 = vmatpush1.msra.mxu0 0.0
    %90 = vmatprep.subr.mxu0 0.0
    %91 = vmatpush1.msra.mxu0 0.0
    %92 = vmatprep.subr.mxu0 0.0
    %93 = vmatpush1.msra.mxu0 0.0
    %94 = vmatprep.subr.mxu0 0.0
    %95 = vmatpush1.msra.mxu0 0.0
    %96 = vmatprep.subr.mxu0 0.0
    %97 = vmatpush1.msra.mxu0 0.0
    %98 = vmatprep.subr.mxu0 0.0
    %99 = vmatpush1.msra.mxu0 0.0
    %100 = vmatprep.subr.mxu0 0.0
    %101 = vmatpush1.msra.mxu0 0.0
    %102 = vmatprep.subr.mxu0 0.0
    %103 = vmatpush1.msra.mxu0 0.0
    %104 = vmatprep.subr.mxu0 0.0
    %105 = vmatpush1.msra.mxu0 0.0
    %106 = vmatprep.subr.mxu0 0.0
    %107 = vmatpush1.msra.mxu0 0.0
    %108 = vmatprep.subr.mxu0 0.0
    %109 = vmatpush1.msra.mxu0 0.0
    %110 = vmatprep.subr.mxu0 0.0
    %111 = vmatpush1.msra.mxu0 0.0
    %112 = vmatprep.subr.mxu0 0.0
    %113 = vmatpush1.msra.mxu0 0.0
    %114 = vmatprep.subr.mxu0 0.0
    %115 = vmatpush1.msra.mxu0 0.0
    %116 = vmatprep.subr.mxu0 0.0
    %117 = vmatpush1.msra.mxu0 0.0
    %118 = vmatprep.subr.mxu0 0.0
    %119 = vmatpush1.msra.mxu0 0.0
    %120 = vmatprep.subr.mxu0 0.0
    %121 = vmatpush1.msra.mxu0 0.0
    %122 = vmatprep.subr.mxu0 0.0
    %123 = vmatpush1.msra.mxu0 0.0
    %124 = vmatprep.subr.mxu0 0.0
    %125 = vmatpush1.msra.mxu0 0.0
    %126 = vmatprep.subr.mxu0 0.0
    %127 = vmatpush1.msra.mxu0 0.0
    %128 = vmatprep.subr.mxu0 0.0
    %129 = vmatpush1.msra.mxu0 0.0
    %130 = vmatprep.subr.mxu0 0.0
    %131 = vmatpush1.msra.mxu0 0.0
    %132 = vmatprep.subr.mxu0 0.0
    %133 = vmatpush1.msra.mxu0 0.0
    %134 = vmatprep.subr.mxu0 0.0
    %135 = vmatpush1.msra.mxu0 0.0
    %136 = vmatprep.mubr.f32.mxu0 0.0
    %137 = vmatmul.mubr.f32.gmra.mrb[0].mxu0 %v61
    %v138 = vpop.f32.mrb[0].mxu0
    %v139 = vadd.f32 0.0, %v138
    %v140 = vpop.f32.mrb[0].mxu0
    %141 = vmatprep.mubr.f32.mxu0 0.0
    %142 = vmatmul.mubr.f32.gmra.mrb[0].mxu0 %v64
    %v143 = vpop.f32.mrb[0].mxu0
    %v144 = vadd.f32 0.0, %v143
    %v145 = vpop.f32.mrb[0].mxu0
    %146 = vmatprep.mubr.f32.mxu0 0.0
    %147 = vmatmul.mubr.f32.gmra.mrb[0].mxu0 %v67
    %v148 = vpop.f32.mrb[0].mxu0
    %v149 = vadd.f32 0.0, %v148
    %v150 = vpop.f32.mrb[0].mxu0
    %151 = vmatprep.mubr.f32.mxu0 0.0
    %152 = vmatmul.mubr.f32.gmra.mrb[0].mxu0 %v70
    %v153 = vpop.f32.mrb[0].mxu0
    %v154 = vadd.f32 0.0, %v153
    %v155 = vpop.f32.mrb[0].mxu0
    %156 = vdwg.mxu0
    %v157 = vlaneseq
    %v158 = vshrl.u32 %v157, 7
    %v159 = vsub.s32 0, %v158
    %v160 = vrot.slane %v48, %v159
    %v161 = vmul.f32 %v139, %v160
    %v162 = vmul.f32 %v144, %v160
    %v163 = vmul.f32 %v149, %v160
    %v164 = vmul.f32 %v154, %v160
    %v165 = vlaneseq
    %v166 = vshrl.u32 %v165, 7
    %v167 = vsub.s32 0, %v166
    %v168 = vrot.slane %v49, %v167
    %v169 = vadd.f32 %v161, %v168
    %v170 = vadd.f32 %v162, %v168
    %v171 = vadd.f32 %v163, %v168
    %v172 = vadd.f32 %v164, %v168
    %v173 = vxor.u32 %v169, 2147483648
    %v174 = vxor.u32 %v170, 2147483648
    %v175 = vxor.u32 %v171, 2147483648
    %v176 = vxor.u32 %v172, 2147483648
    %v177 = vmul.f32 %v173, 1.442695
    %v178 = vpow.pop %v177
    %v179 = vmul.f32 %v174, 1.442695
    %v180 = vpow.pop %v179
    %v181 = vmul.f32 %v175, 1.442695
    %v182 = vpow.pop %v181
    %v183 = vmul.f32 %v176, 1.442695
    %v184 = vpow.pop %v183
    %v185 = vadd.f32 %v178, 1.0
    %v186 = vadd.f32 %v180, 1.0
    %v187 = vadd.f32 %v182, 1.0
    %v188 = vadd.f32 %v184, 1.0
    %v189 = vrcp.pop %v185
    %v190 = vmul.f32 1.0, %v189
    %v191 = vrcp.pop %v186
    %v192 = vmul.f32 1.0, %v191
    %v193 = vrcp.pop %v187
    %v194 = vmul.f32 1.0, %v193
    %v195 = vrcp.pop %v188
    %v196 = vmul.f32 1.0, %v195
    %v197 = vmul.f32 %v169, %v190
    %v198 = vmul.f32 %v170, %v192
    %v199 = vmul.f32 %v171, %v194
    %v200 = vmul.f32 %v172, %v196
    %v201 = vlaneseq
    %v202 = vshrl.u32 %v201, 7
    %v203 = vadd.s32 %v202, 8
    %vm204 = vcmp.eq.s32.totalorder %v202, 0
    %vm205 = vcmp.eq.s32.totalorder %v203, 0
    %v206 = vrot.slane %v197, 7
    %v207 = vrot.slane %v198, 7
    %v208 = vrot.slane %v199, 7
    %v209 = vrot.slane %v200, 7
    %vm210 = vcmp.lt.s32.totalorder %v202, 1
    %v211 = vsel %vm210, %v208, %v209
    %v212 = vsel %vm210, %v207, %v208
    %v213 = vsel %vm210, %v206, %v207
    %v214 = vsel %vm210, %v209, %v206
    %v215 = vsel %vm204, 0.0, %v214
    %v216 = vsel %vm205, 0.0, %v213
    %v217 = vsel %vm204, 0.0, %v212
    %v218 = vsel %vm205, 0.0, %v211
    %vm219 = vcmp.eq.s32.totalorder %v202, 15
    %vm220 = vcmp.eq.s32.totalorder %v203, 15
    %v221 = vrot.slane %v197, 1
    %v222 = vrot.slane %v198, 1
    %v223 = vrot.slane %v199, 1
    %v224 = vrot.slane %v200, 1
    %vm225 = vcmp.lt.s32.totalorder %v202, 7
    %v226 = vsel %vm225, %v223, %v224
    %v227 = vsel %vm225, %v222, %v223
    %v228 = vsel %vm225, %v221, %v222
    %v229 = vsel %vm225, %v224, %v221
    %v230 = vsel %vm219, 0.0, %v228
    %v231 = vsel %vm220, 0.0, %v227
    %v232 = vsel %vm219, 0.0, %v226
    %v233 = vsel %vm220, 0.0, %v229
    %238 = vrot.lane.b32.xlu0 %v197, 32
    %v239 = vpop.permute.xlu0 %238
    %240 = vrot.lane.b32.xlu0 %v198, 32
    %v241 = vpop.permute.xlu0 %240
    %242 = vrot.lane.b32.xlu0 %v199, 32
    %v243 = vpop.permute.xlu0 %242
    %244 = vrot.lane.b32.xlu0 %v200, 32
    %v245 = vpop.permute.xlu0 %244
    %254 = vrot.lane.b32.xlu0 %v230, 64
    %v255 = vpop.permute.xlu0 %254
    %256 = vrot.lane.b32.xlu0 %v231, 64
    %v257 = vpop.permute.xlu0 %256
    %258 = vrot.lane.b32.xlu0 %v232, 64
    %v259 = vpop.permute.xlu0 %258
    %260 = vrot.lane.b32.xlu0 %v233, 64
    %v261 = vpop.permute.xlu0 %260
    %vm266 = vcmask 261120
    %v267 = vsel %vm266, %v215, %v239
    %v268 = vsel %vm266, %v216, %v241
    %v269 = vsel %vm266, %v217, %v243
    %v270 = vsel %vm266, %v218, %v245
    %vm271 = vcmask 523264
    %v272 = vsel %vm271, %v267, %v255
    %v273 = vsel %vm271, %v268, %v257
    %v274 = vsel %vm271, %v269, %v259
    %v275 = vsel %vm271, %v270, %v261
    %vm276 = vcmask 785408
    %v278 = vsel %vm276, %v272, 0
    %v281 = vsel %vm276, %v273, 0
    %v284 = vsel %vm276, %v274, 0
    %v287 = vsel %vm276, %v275, 0
    %289 = vmatprep.subr.mxu0 0.0
    %290 = vmatpush1.msra.mxu0 %v32
    %291 = vmatprep.subr.mxu0 0.0
    %292 = vmatpush1.msra.mxu0 %v33
    %293 = vmatprep.subr.mxu0 0.0
    %294 = vmatpush1.msra.mxu0 %v34
    %295 = vmatprep.subr.mxu0 0.0
    %296 = vmatpush1.msra.mxu0 %v35
    %297 = vmatprep.subr.mxu0 0.0
    %298 = vmatpush1.msra.mxu0 %v36
    %299 = vmatprep.subr.mxu0 0.0
    %300 = vmatpush1.msra.mxu0 %v37
    %301 = vmatprep.subr.mxu0 0.0
    %302 = vmatpush1.msra.mxu0 %v38
    %303 = vmatprep.subr.mxu0 0.0
    %304 = vmatpush1.msra.mxu0 %v39
    %305 = vmatprep.subr.mxu0 0.0
    %306 = vmatpush1.msra.mxu0 %v40
    %307 = vmatprep.subr.mxu0 0.0
    %308 = vmatpush1.msra.mxu0 %v41
    %309 = vmatprep.subr.mxu0 0.0
    %310 = vmatpush1.msra.mxu0 %v42
    %311 = vmatprep.subr.mxu0 0.0
    %312 = vmatpush1.msra.mxu0 %v43
    %313 = vmatprep.subr.mxu0 0.0
    %314 = vmatpush1.msra.mxu0 0.0
    %315 = vmatprep.subr.mxu0 0.0
    %316 = vmatpush1.msra.mxu0 0.0
    %317 = vmatprep.subr.mxu0 0.0
    %318 = vmatpush1.msra.mxu0 0.0
    %319 = vmatprep.subr.mxu0 0.0
    %320 = vmatpush1.msra.mxu0 0.0
    %321 = vmatprep.subr.mxu0 0.0
    %322 = vmatpush1.msra.mxu0 0.0
    %323 = vmatprep.subr.mxu0 0.0
    %324 = vmatpush1.msra.mxu0 0.0
    %325 = vmatprep.subr.mxu0 0.0
    %326 = vmatpush1.msra.mxu0 0.0
    %327 = vmatprep.subr.mxu0 0.0
    %328 = vmatpush1.msra.mxu0 0.0
    %329 = vmatprep.subr.mxu0 0.0
    %330 = vmatpush1.msra.mxu0 0.0
    %331 = vmatprep.subr.mxu0 0.0
    %332 = vmatpush1.msra.mxu0 0.0
    %333 = vmatprep.subr.mxu0 0.0
    %334 = vmatpush1.msra.mxu0 0.0
    %335 = vmatprep.subr.mxu0 0.0
    %336 = vmatpush1.msra.mxu0 0.0
    %337 = vmatprep.subr.mxu0 0.0
    %338 = vmatpush1.msra.mxu0 0.0
    %339 = vmatprep.subr.mxu0 0.0
    %340 = vmatpush1.msra.mxu0 0.0
    %341 = vmatprep.subr.mxu0 0.0
    %342 = vmatpush1.msra.mxu0 0.0
    %343 = vmatprep.subr.mxu0 0.0
    %344 = vmatpush1.msra.mxu0 0.0
    %345 = vmatprep.subr.mxu0 0.0
    %346 = vmatpush1.msra.mxu0 0.0
    %347 = vmatprep.subr.mxu0 0.0
    %348 = vmatpush1.msra.mxu0 0.0
    %349 = vmatprep.subr.mxu0 0.0
    %350 = vmatpush1.msra.mxu0 0.0
    %351 = vmatprep.subr.mxu0 0.0
    %352 = vmatpush1.msra.mxu0 0.0
    %353 = vmatprep.mubr.f32.mxu0 0.0
    %354 = vmatmul.mubr.f32.gmra.mrb[0].mxu0 %v278
    %v355 = vpop.f32.mrb[0].mxu0
    %v356 = vadd.f32 0.0, %v355
    %v357 = vpop.f32.mrb[0].mxu0
    %358 = vmatprep.mubr.f32.mxu0 0.0
    %359 = vmatmul.mubr.f32.gmra.mrb[0].mxu0 %v281
    %v360 = vpop.f32.mrb[0].mxu0
    %v361 = vadd.f32 0.0, %v360
    %v362 = vpop.f32.mrb[0].mxu0
    %363 = vmatprep.mubr.f32.mxu0 0.0
    %364 = vmatmul.mubr.f32.gmra.mrb[0].mxu0 %v284
    %v365 = vpop.f32.mrb[0].mxu0
    %v366 = vadd.f32 0.0, %v365
    %v367 = vpop.f32.mrb[0].mxu0
    %368 = vmatprep.mubr.f32.mxu0 0.0
    %369 = vmatmul.mubr.f32.gmra.mrb[0].mxu0 %v287
    %v370 = vpop.f32.mrb[0].mxu0
    %v371 = vadd.f32 0.0, %v370
    %v372 = vpop.f32.mrb[0].mxu0
    %373 = vdwg.mxu0
    %v374 = vlaneseq
    %v375 = vshrl.u32 %v374, 7
    %v376 = vsub.s32 0, %v375
    %v377 = vrot.slane %v50, %v376
    %v378 = vmul.f32 %v356, %v377
    %v379 = vmul.f32 %v361, %v377
    %v380 = vmul.f32 %v366, %v377
    %v381 = vmul.f32 %v371, %v377
    %v382 = vlaneseq
    %v383 = vshrl.u32 %v382, 7
    %v384 = vsub.s32 0, %v383
    %v385 = vrot.slane %v51, %v384
    %v386 = vadd.f32 %v378, %v385
    %v387 = vadd.f32 %v379, %v385
    %v388 = vadd.f32 %v380, %v385
    %v389 = vadd.f32 %v381, %v385
    %v390 = vxor.u32 %v386, 2147483648
    %v391 = vxor.u32 %v387, 2147483648
    %v392 = vxor.u32 %v388, 2147483648
    %v393 = vxor.u32 %v389, 2147483648
    %v394 = vmul.f32 %v390, 1.442695
    %v395 = vpow.pop %v394
    %v396 = vmul.f32 %v391, 1.442695
    %v397 = vpow.pop %v396
    %v398 = vmul.f32 %v392, 1.442695
    %v399 = vpow.pop %v398
    %v400 = vmul.f32 %v393, 1.442695
    %v401 = vpow.pop %v400
    %v402 = vadd.f32 %v395, 1.0
    %v403 = vadd.f32 %v397, 1.0
    %v404 = vadd.f32 %v399, 1.0
    %v405 = vadd.f32 %v401, 1.0
    %v406 = vrcp.pop %v402
    %v407 = vmul.f32 1.0, %v406
    %v408 = vrcp.pop %v403
    %v409 = vmul.f32 1.0, %v408
    %v410 = vrcp.pop %v404
    %v411 = vmul.f32 1.0, %v410
    %v412 = vrcp.pop %v405
    %v413 = vmul.f32 1.0, %v412
    %v414 = vmul.f32 %v386, %v407
    %v415 = vmul.f32 %v387, %v409
    %v416 = vmul.f32 %v388, %v411
    %v417 = vmul.f32 %v389, %v413
    %v418 = vld [vmem:[#allocation2 + $0x78] sm:$0xff]
    %v419 = vld [vmem:[#allocation2 + $0x80] sm:$0xff]
    %v420 = vld [vmem:[#allocation2 + $0x88] sm:$0xff]
    %v421 = vld [vmem:[#allocation2 + $0x90] sm:$0xff]
    %v422 = vld [vmem:[#allocation2 + $0x98] sm:$0xff]
    %v423 = vld [vmem:[#allocation2 + $0xa0] sm:$0xff]
    %v424 = vld [vmem:[#allocation2 + $0xa8] sm:$0xff]
    %v425 = vld [vmem:[#allocation2 + $0xb0] sm:$0xff]
    %v426 = vld [vmem:[#allocation2 + $0xb8] sm:$0xff]
    %v427 = vld [vmem:[#allocation2 + $0xc0] sm:$0xff]
    %v428 = vld [vmem:[#allocation2 + $0xc8] sm:$0xff]
    %v429 = vld [vmem:[#allocation2 + $0xd0] sm:$0xff]
    %v430 = vld [vmem:[#allocation2 + $0xd8] sm:$0xff]
    %v431 = vld [vmem:[#allocation2 + $0xe0] sm:$0xff]
    %v432 = vld [vmem:[#allocation2 + $0xe8] sm:$0xff]
    %v433 = vld [vmem:[#allocation2 + $0xf0] sm:$0xff]
    %v434 = vld [vmem:[#allocation2 + $0xf8] sm:$0xff]
    %v435 = vld [vmem:[#allocation2 + $0x100] sm:$0xff]
    %v436 = vld [vmem:[#allocation2 + $0x108] sm:$0xff]
    %v437 = vld [vmem:[#allocation2 + $0x110] sm:$0xff]
    %v438 = vld [vmem:[#allocation2 + $0x118] sm:$0xff]
    %v439 = vld [vmem:[#allocation2 + $0x120] sm:$0xff]
    %v440 = vld [vmem:[#allocation2 + $0x128] sm:$0xff]
    %v441 = vld [vmem:[#allocation2 + $0x130] sm:$0xff]
    %v442 = vld [vmem:[#allocation2 + $0x138] sm:$0xff]
    %v443 = vld [vmem:[#allocation2 + $0x140] sm:$0xff]
    %v444 = vld [vmem:[#allocation2 + $0x148] sm:$0xff]
    %v445 = vld [vmem:[#allocation2 + $0x150] sm:$0xff]
    %v446 = vld [vmem:[%s2 + $0x4] sm:$0x1]
    %v447 = vld [vmem:[%s2 + $0x5] sm:$0x1]
    %v448 = vld [vmem:[%s2 + $0x6] sm:$0x1]
    %v449 = vld [vmem:[%s2 + $0x7] sm:$0x1]
    %v450 = vld [vmem:[%s2 + $0x8] sm:$0x1]
    %v451 = vld [vmem:[%s2 + $0x9] sm:$0x1]
    %v452 = vld [vmem:[%s2 + $0xa] sm:$0x1]
    %v453 = vld [vmem:[%s2 + $0xb] sm:$0x1]
    %v454 = vlaneseq
    %v455 = vshrl.u32 %v454, 7
    %v456 = vsub.s32 0, %v455
    %v457 = vrot.slane %v446, %v456
    %v459 = vsel %vm266, %v414, 0
    %v462 = vsel %vm266, %v415, 0
    %v465 = vsel %vm266, %v416, 0
    %v468 = vsel %vm266, %v417, 0
    %470 = vmatprep.subr.mxu0 0.0
    %471 = vmatpush1.msra.mxu0 %v418
    %472 = vmatprep.subr.mxu0 0.0
    %473 = vmatpush1.msra.mxu0 %v419
    %474 = vmatprep.subr.mxu0 0.0
    %475 = vmatpush1.msra.mxu0 %v420
    %476 = vmatprep.subr.mxu0 0.0
    %477 = vmatpush1.msra.mxu0 %v421
    %478 = vmatprep.subr.mxu0 0.0
    %479 = vmatpush1.msra.mxu0 0.0
    %480 = vmatprep.subr.mxu0 0.0
    %481 = vmatpush1.msra.mxu0 0.0
    %482 = vmatprep.subr.mxu0 0.0
    %483 = vmatpush1.msra.mxu0 0.0
    %484 = vmatprep.subr.mxu0 0.0
    %485 = vmatpush1.msra.mxu0 0.0
    %486 = vmatprep.subr.mxu0 0.0
    %487 = vmatpush1.msra.mxu0 0.0
    %488 = vmatprep.subr.mxu0 0.0
    %489 = vmatpush1.msra.mxu0 0.0
    %490 = vmatprep.subr.mxu0 0.0
    %491 = vmatpush1.msra.mxu0 0.0
    %492 = vmatprep.subr.mxu0 0.0
    %493 = vmatpush1.msra.mxu0 0.0
    %494 = vmatprep.subr.mxu0 0.0
    %495 = vmatpush1.msra.mxu0 0.0
    %496 = vmatprep.subr.mxu0 0.0
    %497 = vmatpush1.msra.mxu0 0.0
    %498 = vmatprep.subr.mxu0 0.0
    %499 = vmatpush1.msra.mxu0 0.0
    %500 = vmatprep.subr.mxu0 0.0
    %501 = vmatpush1.msra.mxu0 0.0
    %502 = vmatprep.subr.mxu0 0.0
    %503 = vmatpush1.msra.mxu0 0.0
    %504 = vmatprep.subr.mxu0 0.0
    %505 = vmatpush1.msra.mxu0 0.0
    %506 = vmatprep.subr.mxu0 0.0
    %507 = vmatpush1.msra.mxu0 0.0
    %508 = vmatprep.subr.mxu0 0.0
    %509 = vmatpush1.msra.mxu0 0.0
    %510 = vmatprep.subr.mxu0 0.0
    %511 = vmatpush1.msra.mxu0 0.0
    %512 = vmatprep.subr.mxu0 0.0
    %513 = vmatpush1.msra.mxu0 0.0
    %514 = vmatprep.subr.mxu0 0.0
    %515 = vmatpush1.msra.mxu0 0.0
    %516 = vmatprep.subr.mxu0 0.0
    %517 = vmatpush1.msra.mxu0 0.0
    %518 = vmatprep.subr.mxu0 0.0
    %519 = vmatpush1.msra.mxu0 0.0
    %520 = vmatprep.subr.mxu0 0.0
    %521 = vmatpush1.msra.mxu0 0.0
    %522 = vmatprep.subr.mxu0 0.0
    %523 = vmatpush1.msra.mxu0 0.0
    %524 = vmatprep.subr.mxu0 0.0
    %525 = vmatpush1.msra.mxu0 0.0
    %526 = vmatprep.subr.mxu0 0.0
    %527 = vmatpush1.msra.mxu0 0.0
    %528 = vmatprep.subr.mxu0 0.0
    %529 = vmatpush1.msra.mxu0 0.0
    %530 = vmatprep.subr.mxu0 0.0
    %531 = vmatpush1.msra.mxu0 0.0
    %532 = vmatprep.subr.mxu0 0.0
    %533 = vmatpush1.msra.mxu0 0.0
    %534 = vmatprep.mubr.f32.mxu0 0.0
    %535 = vmatmul.mubr.f32.gmra.mrb[0].mxu0 %v459
    %v536 = vpop.f32.mrb[0].mxu0
    %v537 = vadd.f32 %v457, %v536
    %v538 = vpop.f32.mrb[0].mxu0
    %539 = vmatprep.mubr.f32.mxu0 0.0
    %540 = vmatmul.mubr.f32.gmra.mrb[0].mxu0 %v462
    %v541 = vpop.f32.mrb[0].mxu0
    %v542 = vadd.f32 %v457, %v541
    %v543 = vpop.f32.mrb[0].mxu0
    %544 = vmatprep.mubr.f32.mxu0 0.0
    %545 = vmatmul.mubr.f32.gmra.mrb[0].mxu0 %v465
    %v546 = vpop.f32.mrb[0].mxu0
    %v547 = vadd.f32 %v457, %v546
    %v548 = vpop.f32.mrb[0].mxu0
    %549 = vmatprep.mubr.f32.mxu0 0.0
    %550 = vmatmul.mubr.f32.gmra.mrb[0].mxu0 %v468
    %v551 = vpop.f32.mrb[0].mxu0
    %v552 = vadd.f32 %v457, %v551
    %v553 = vpop.f32.mrb[0].mxu0
    %554 = vdwg.mxu0
    %559 = vrot.lane.b32.xlu0 %v537, 112
    %v560 = vpop.permute.xlu0 %559
    %561 = vrot.lane.b32.xlu0 %v542, 112
    %v562 = vpop.permute.xlu0 %561
    %563 = vrot.lane.b32.xlu0 %v547, 112
    %v564 = vpop.permute.xlu0 %563
    %565 = vrot.lane.b32.xlu0 %v552, 112
    %v566 = vpop.permute.xlu0 %565
    %567 = vrot.lane.b32.xlu0 %v537, 96
    %v568 = vpop.permute.xlu0 %567
    %569 = vrot.lane.b32.xlu0 %v542, 96
    %v570 = vpop.permute.xlu0 %569
    %vm571 = vcmask 130048
    %v572 = vsel %vm571, %v537, 0
    %v574 = vsel %vm571, %v542, 0
    %v576 = vsel %vm571, %v568, 0
    %v578 = vsel %vm571, %v570, 0
    %580 = vmatprep.subr.mxu0 0.0
    %581 = vmatpush1.xpose.msra.mxu0 %v576
    %582 = vmatprep.subr.mxu0 0.0
    %583 = vmatpush1.xpose.msra.mxu0 %v578
    %584 = vmatprep.subr.mxu0 0.0
    %585 = vmatpush1.xpose.msra.mxu0 0.0
    %586 = vmatprep.subr.mxu0 0.0
    %587 = vmatpush1.xpose.msra.mxu0 0.0
    %588 = vmatprep.subr.mxu0 0.0
    %589 = vmatpush1.xpose.msra.mxu0 0.0
    %590 = vmatprep.subr.mxu0 0.0
    %591 = vmatpush1.xpose.msra.mxu0 0.0
    %592 = vmatprep.subr.mxu0 0.0
    %593 = vmatpush1.xpose.msra.mxu0 0.0
    %594 = vmatprep.subr.mxu0 0.0
    %595 = vmatpush1.xpose.msra.mxu0 0.0
    %596 = vmatprep.subr.mxu0 0.0
    %597 = vmatpush1.xpose.msra.mxu0 0.0
    %598 = vmatprep.subr.mxu0 0.0
    %599 = vmatpush1.xpose.msra.mxu0 0.0
    %600 = vmatprep.subr.mxu0 0.0
    %601 = vmatpush1.xpose.msra.mxu0 0.0
    %602 = vmatprep.subr.mxu0 0.0
    %603 = vmatpush1.xpose.msra.mxu0 0.0
    %604 = vmatprep.subr.mxu0 0.0
    %605 = vmatpush1.xpose.msra.mxu0 0.0
    %606 = vmatprep.subr.mxu0 0.0
    %607 = vmatpush1.xpose.msra.mxu0 0.0
    %608 = vmatprep.subr.mxu0 0.0
    %609 = vmatpush1.xpose.msra.mxu0 0.0
    %610 = vmatprep.subr.mxu0 0.0
    %611 = vmatpush1.xpose.msra.mxu0 0.0
    %612 = vmatprep.subr.mxu0 0.0
    %613 = vmatpush1.xpose.msra.mxu0 0.0
    %614 = vmatprep.subr.mxu0 0.0
    %615 = vmatpush1.xpose.msra.mxu0 0.0
    %616 = vmatprep.subr.mxu0 0.0
    %617 = vmatpush1.xpose.msra.mxu0 0.0
    %618 = vmatprep.subr.mxu0 0.0
    %619 = vmatpush1.xpose.msra.mxu0 0.0
    %620 = vmatprep.subr.mxu0 0.0
    %621 = vmatpush1.xpose.msra.mxu0 0.0
    %622 = vmatprep.subr.mxu0 0.0
    %623 = vmatpush1.xpose.msra.mxu0 0.0
    %624 = vmatprep.subr.mxu0 0.0
    %625 = vmatpush1.xpose.msra.mxu0 0.0
    %626 = vmatprep.subr.mxu0 0.0
    %627 = vmatpush1.xpose.msra.mxu0 0.0
    %628 = vmatprep.subr.mxu0 0.0
    %629 = vmatpush1.xpose.msra.mxu0 0.0
    %630 = vmatprep.subr.mxu0 0.0
    %631 = vmatpush1.xpose.msra.mxu0 0.0
    %632 = vmatprep.subr.mxu0 0.0
    %633 = vmatpush1.xpose.msra.mxu0 0.0
    %634 = vmatprep.subr.mxu0 0.0
    %635 = vmatpush1.xpose.msra.mxu0 0.0
    %636 = vmatprep.subr.mxu0 0.0
    %637 = vmatpush1.xpose.msra.mxu0 0.0
    %638 = vmatprep.subr.mxu0 0.0
    %639 = vmatpush1.xpose.msra.mxu0 0.0
    %640 = vmatprep.subr.mxu0 0.0
    %641 = vmatpush1.xpose.msra.mxu0 0.0
    %642 = vmatprep.subr.mxu0 0.0
    %643 = vmatpush1.xpose.msra.mxu0 0.0
    %644 = vmatprep.mubr.f32.mxu0 0.0
    %645 = vmatmul.mubr.f32.gmra.mrb[0].mxu0 %v572
    %v646 = vpop.f32.mrb[0].mxu0
    %v647 = vadd.f32 0.0, %v646
    %v648 = vpop.f32.mrb[0].mxu0
    %649 = vmatprep.mubr.f32.mxu0 0.0
    %650 = vmatmul.mubr.f32.gmra.mrb[0].mxu0 %v574
    %v651 = vpop.f32.mrb[0].mxu0
    %v652 = vadd.f32 0.0, %v651
    %v653 = vpop.f32.mrb[0].mxu0
    %654 = vdwg.mxu0
    %655 = vrot.lane.b32.xlu0 %v547, 96
    %v656 = vpop.permute.xlu0 %655
    %657 = vrot.lane.b32.xlu0 %v552, 96
    %v658 = vpop.permute.xlu0 %657
    %v659 = vsel %vm571, %v547, 0
    %v661 = vsel %vm571, %v552, 0
    %v663 = vsel %vm571, %v656, 0
    %v665 = vsel %vm571, %v658, 0
    %667 = vmatprep.subr.mxu0 0.0
    %668 = vmatpush1.xpose.msra.mxu0 %v663
    %669 = vmatprep.subr.mxu0 0.0
    %670 = vmatpush1.xpose.msra.mxu0 %v665
    %671 = vmatprep.subr.mxu0 0.0
    %672 = vmatpush1.xpose.msra.mxu0 0.0
    %673 = vmatprep.subr.mxu0 0.0
    %674 = vmatpush1.xpose.msra.mxu0 0.0
    %675 = vmatprep.subr.mxu0 0.0
    %676 = vmatpush1.xpose.msra.mxu0 0.0
    %677 = vmatprep.subr.mxu0 0.0
    %678 = vmatpush1.xpose.msra.mxu0 0.0
    %679 = vmatprep.subr.mxu0 0.0
    %680 = vmatpush1.xpose.msra.mxu0 0.0
    %681 = vmatprep.subr.mxu0 0.0
    %682 = vmatpush1.xpose.msra.mxu0 0.0
    %683 = vmatprep.subr.mxu0 0.0
    %684 = vmatpush1.xpose.msra.mxu0 0.0
    %685 = vmatprep.subr.mxu0 0.0
    %686 = vmatpush1.xpose.msra.mxu0 0.0
    %687 = vmatprep.subr.mxu0 0.0
    %688 = vmatpush1.xpose.msra.mxu0 0.0
    %689 = vmatprep.subr.mxu0 0.0
    %690 = vmatpush1.xpose.msra.mxu0 0.0
    %691 = vmatprep.subr.mxu0 0.0
    %692 = vmatpush1.xpose.msra.mxu0 0.0
    %693 = vmatprep.subr.mxu0 0.0
    %694 = vmatpush1.xpose.msra.mxu0 0.0
    %695 = vmatprep.subr.mxu0 0.0
    %696 = vmatpush1.xpose.msra.mxu0 0.0
    %697 = vmatprep.subr.mxu0 0.0
    %698 = vmatpush1.xpose.msra.mxu0 0.0
    %699 = vmatprep.subr.mxu0 0.0
    %700 = vmatpush1.xpose.msra.mxu0 0.0
    %701 = vmatprep.subr.mxu0 0.0
    %702 = vmatpush1.xpose.msra.mxu0 0.0
    %703 = vmatprep.subr.mxu0 0.0
    %704 = vmatpush1.xpose.msra.mxu0 0.0
    %705 = vmatprep.subr.mxu0 0.0
    %706 = vmatpush1.xpose.msra.mxu0 0.0
    %707 = vmatprep.subr.mxu0 0.0
    %708 = vmatpush1.xpose.msra.mxu0 0.0
    %709 = vmatprep.subr.mxu0 0.0
    %710 = vmatpush1.xpose.msra.mxu0 0.0
    %711 = vmatprep.subr.mxu0 0.0
    %712 = vmatpush1.xpose.msra.mxu0 0.0
    %713 = vmatprep.subr.mxu0 0.0
    %714 = vmatpush1.xpose.msra.mxu0 0.0
    %715 = vmatprep.subr.mxu0 0.0
    %716 = vmatpush1.xpose.msra.mxu0 0.0
    %717 = vmatprep.subr.mxu0 0.0
    %718 = vmatpush1.xpose.msra.mxu0 0.0
    %719 = vmatprep.subr.mxu0 0.0
    %720 = vmatpush1.xpose.msra.mxu0 0.0
    %721 = vmatprep.subr.mxu0 0.0
    %722 = vmatpush1.xpose.msra.mxu0 0.0
    %723 = vmatprep.subr.mxu0 0.0
    %724 = vmatpush1.xpose.msra.mxu0 0.0
    %725 = vmatprep.subr.mxu0 0.0
    %726 = vmatpush1.xpose.msra.mxu0 0.0
    %727 = vmatprep.subr.mxu0 0.0
    %728 = vmatpush1.xpose.msra.mxu0 0.0
    %729 = vmatprep.subr.mxu0 0.0
    %730 = vmatpush1.xpose.msra.mxu0 0.0
    %731 = vmatprep.mubr.f32.mxu0 0.0
    %732 = vmatmul.mubr.f32.gmra.mrb[0].mxu0 %v659
    %v733 = vpop.f32.mrb[0].mxu0
    %v734 = vadd.f32 0.0, %v733
    %v735 = vpop.f32.mrb[0].mxu0
    %736 = vmatprep.mubr.f32.mxu0 0.0
    %737 = vmatmul.mubr.f32.gmra.mrb[0].mxu0 %v661
    %v738 = vpop.f32.mrb[0].mxu0
    %v739 = vadd.f32 0.0, %v738
    %v740 = vpop.f32.mrb[0].mxu0
    %741 = vdwg.mxu0
    %742 = vrot.lane.b32.xlu0 %v560, 96
    %v743 = vpop.permute.xlu0 %742
    %744 = vrot.lane.b32.xlu0 %v562, 96
    %v745 = vpop.permute.xlu0 %744
    %v746 = vsel %vm571, %v560, 0
    %v748 = vsel %vm571, %v562, 0
    %v750 = vsel %vm571, %v743, 0
    %v752 = vsel %vm571, %v745, 0
    %754 = vmatprep.subr.mxu0 0.0
    %755 = vmatpush1.xpose.msra.mxu0 %v750
    %756 = vmatprep.subr.mxu0 0.0
    %757 = vmatpush1.xpose.msra.mxu0 %v752
    %758 = vmatprep.subr.mxu0 0.0
    %759 = vmatpush1.xpose.msra.mxu0 0.0
    %760 = vmatprep.subr.mxu0 0.0
    %761 = vmatpush1.xpose.msra.mxu0 0.0
    %762 = vmatprep.subr.mxu0 0.0
    %763 = vmatpush1.xpose.msra.mxu0 0.0
    %764 = vmatprep.subr.mxu0 0.0
    %765 = vmatpush1.xpose.msra.mxu0 0.0
    %766 = vmatprep.subr.mxu0 0.0
    %767 = vmatpush1.xpose.msra.mxu0 0.0
    %768 = vmatprep.subr.mxu0 0.0
    %769 = vmatpush1.xpose.msra.mxu0 0.0
    %770 = vmatprep.subr.mxu0 0.0
    %771 = vmatpush1.xpose.msra.mxu0 0.0
    %772 = vmatprep.subr.mxu0 0.0
    %773 = vmatpush1.xpose.msra.mxu0 0.0
    %774 = vmatprep.subr.mxu0 0.0
    %775 = vmatpush1.xpose.msra.mxu0 0.0
    %776 = vmatprep.subr.mxu0 0.0
    %777 = vmatpush1.xpose.msra.mxu0 0.0
    %778 = vmatprep.subr.mxu0 0.0
    %779 = vmatpush1.xpose.msra.mxu0 0.0
    %780 = vmatprep.subr.mxu0 0.0
    %781 = vmatpush1.xpose.msra.mxu0 0.0
    %782 = vmatprep.subr.mxu0 0.0
    %783 = vmatpush1.xpose.msra.mxu0 0.0
    %784 = vmatprep.subr.mxu0 0.0
    %785 = vmatpush1.xpose.msra.mxu0 0.0
    %786 = vmatprep.subr.mxu0 0.0
    %787 = vmatpush1.xpose.msra.mxu0 0.0
    %788 = vmatprep.subr.mxu0 0.0
    %789 = vmatpush1.xpose.msra.mxu0 0.0
    %790 = vmatprep.subr.mxu0 0.0
    %791 = vmatpush1.xpose.msra.mxu0 0.0
    %792 = vmatprep.subr.mxu0 0.0
    %793 = vmatpush1.xpose.msra.mxu0 0.0
    %794 = vmatprep.subr.mxu0 0.0
    %795 = vmatpush1.xpose.msra.mxu0 0.0
    %796 = vmatprep.subr.mxu0 0.0
    %797 = vmatpush1.xpose.msra.mxu0 0.0
    %798 = vmatprep.subr.mxu0 0.0
    %799 = vmatpush1.xpose.msra.mxu0 0.0
    %800 = vmatprep.subr.mxu0 0.0
    %801 = vmatpush1.xpose.msra.mxu0 0.0
    %802 = vmatprep.subr.mxu0 0.0
    %803 = vmatpush1.xpose.msra.mxu0 0.0
    %804 = vmatprep.subr.mxu0 0.0
    %805 = vmatpush1.xpose.msra.mxu0 0.0
    %806 = vmatprep.subr.mxu0 0.0
    %807 = vmatpush1.xpose.msra.mxu0 0.0
    %808 = vmatprep.subr.mxu0 0.0
    %809 = vmatpush1.xpose.msra.mxu0 0.0
    %810 = vmatprep.subr.mxu0 0.0
    %811 = vmatpush1.xpose.msra.mxu0 0.0
    %812 = vmatprep.subr.mxu0 0.0
    %813 = vmatpush1.xpose.msra.mxu0 0.0
    %814 = vmatprep.subr.mxu0 0.0
    %815 = vmatpush1.xpose.msra.mxu0 0.0
    %816 = vmatprep.subr.mxu0 0.0
    %817 = vmatpush1.xpose.msra.mxu0 0.0
    %818 = vmatprep.mubr.f32.mxu0 0.0
    %819 = vmatmul.mubr.f32.gmra.mrb[0].mxu0 %v746
    %v820 = vpop.f32.mrb[0].mxu0
    %v821 = vadd.f32 0.0, %v820
    %v822 = vpop.f32.mrb[0].mxu0
    %823 = vmatprep.mubr.f32.mxu0 0.0
    %824 = vmatmul.mubr.f32.gmra.mrb[0].mxu0 %v748
    %v825 = vpop.f32.mrb[0].mxu0
    %v826 = vadd.f32 0.0, %v825
    %v827 = vpop.f32.mrb[0].mxu0
    %828 = vdwg.mxu0
    %829 = vrot.lane.b32.xlu0 %v564, 96
    %v830 = vpop.permute.xlu0 %829
    %831 = vrot.lane.b32.xlu0 %v566, 96
    %v832 = vpop.permute.xlu0 %831
    %v833 = vsel %vm571, %v564, 0
    %v835 = vsel %vm571, %v566, 0
    %v837 = vsel %vm571, %v830, 0
    %v839 = vsel %vm571, %v832, 0
    %841 = vmatprep.subr.mxu0 0.0
    %842 = vmatpush1.xpose.msra.mxu0 %v837
    %843 = vmatprep.subr.mxu0 0.0
    %844 = vmatpush1.xpose.msra.mxu0 %v839
    %845 = vmatprep.subr.mxu0 0.0
    %846 = vmatpush1.xpose.msra.mxu0 0.0
    %847 = vmatprep.subr.mxu0 0.0
    %848 = vmatpush1.xpose.msra.mxu0 0.0
    %849 = vmatprep.subr.mxu0 0.0
    %850 = vmatpush1.xpose.msra.mxu0 0.0
    %851 = vmatprep.subr.mxu0 0.0
    %852 = vmatpush1.xpose.msra.mxu0 0.0
    %853 = vmatprep.subr.mxu0 0.0
    %854 = vmatpush1.xpose.msra.mxu0 0.0
    %855 = vmatprep.subr.mxu0 0.0
    %856 = vmatpush1.xpose.msra.mxu0 0.0
    %857 = vmatprep.subr.mxu0 0.0
    %858 = vmatpush1.xpose.msra.mxu0 0.0
    %859 = vmatprep.subr.mxu0 0.0
    %860 = vmatpush1.xpose.msra.mxu0 0.0
    %861 = vmatprep.subr.mxu0 0.0
    %862 = vmatpush1.xpose.msra.mxu0 0.0
    %863 = vmatprep.subr.mxu0 0.0
    %864 = vmatpush1.xpose.msra.mxu0 0.0
    %865 = vmatprep.subr.mxu0 0.0
    %866 = vmatpush1.xpose.msra.mxu0 0.0
    %867 = vmatprep.subr.mxu0 0.0
    %868 = vmatpush1.xpose.msra.mxu0 0.0
    %869 = vmatprep.subr.mxu0 0.0
    %870 = vmatpush1.xpose.msra.mxu0 0.0
    %871 = vmatprep.subr.mxu0 0.0
    %872 = vmatpush1.xpose.msra.mxu0 0.0
    %873 = vmatprep.subr.mxu0 0.0
    %874 = vmatpush1.xpose.msra.mxu0 0.0
    %875 = vmatprep.subr.mxu0 0.0
    %876 = vmatpush1.xpose.msra.mxu0 0.0
    %877 = vmatprep.subr.mxu0 0.0
    %878 = vmatpush1.xpose.msra.mxu0 0.0
    %879 = vmatprep.subr.mxu0 0.0
    %880 = vmatpush1.xpose.msra.mxu0 0.0
    %881 = vmatprep.subr.mxu0 0.0
    %882 = vmatpush1.xpose.msra.mxu0 0.0
    %883 = vmatprep.subr.mxu0 0.0
    %884 = vmatpush1.xpose.msra.mxu0 0.0
    %885 = vmatprep.subr.mxu0 0.0
    %886 = vmatpush1.xpose.msra.mxu0 0.0
    %887 = vmatprep.subr.mxu0 0.0
    %888 = vmatpush1.xpose.msra.mxu0 0.0
    %889 = vmatprep.subr.mxu0 0.0
    %890 = vmatpush1.xpose.msra.mxu0 0.0
    %891 = vmatprep.subr.mxu0 0.0
    %892 = vmatpush1.xpose.msra.mxu0 0.0
    %893 = vmatprep.subr.mxu0 0.0
    %894 = vmatpush1.xpose.msra.mxu0 0.0
    %895 = vmatprep.subr.mxu0 0.0
    %896 = vmatpush1.xpose.msra.mxu0 0.0
    %897 = vmatprep.subr.mxu0 0.0
    %898 = vmatpush1.xpose.msra.mxu0 0.0
    %899 = vmatprep.subr.mxu0 0.0
    %900 = vmatpush1.xpose.msra.mxu0 0.0
    %901 = vmatprep.subr.mxu0 0.0
    %902 = vmatpush1.xpose.msra.mxu0 0.0
    %903 = vmatprep.subr.mxu0 0.0
    %904 = vmatpush1.xpose.msra.mxu0 0.0
    %905 = vmatprep.mubr.f32.mxu0 0.0
    %906 = vmatmul.mubr.f32.gmra.mrb[0].mxu0 %v833
    %v907 = vpop.f32.mrb[0].mxu0
    %v908 = vadd.f32 0.0, %v907
    %v909 = vpop.f32.mrb[0].mxu0
    %910 = vmatprep.mubr.f32.mxu0 0.0
    %911 = vmatmul.mubr.f32.gmra.mrb[0].mxu0 %v835
    %v912 = vpop.f32.mrb[0].mxu0
    %v913 = vadd.f32 0.0, %v912
    %v914 = vpop.f32.mrb[0].mxu0
    %915 = vdwg.mxu0
    %v916 = vsel %vm571, %v647, -inf
    %917 = vmax.xlane.f32.xlu0 %v916
    %v918 = vpop.xlane.xlu0 %917
    %v919 = vsel %vm571, %v652, -inf
    %920 = vmax.xlane.f32.xlu0 %v919
    %v921 = vpop.xlane.xlu0 %920
    %v922 = vsel %vm571, %v734, -inf
    %923 = vmax.xlane.f32.xlu0 %v922
    %v924 = vpop.xlane.xlu0 %923
    %v925 = vsel %vm571, %v739, -inf
    %926 = vmax.xlane.f32.xlu0 %v925
    %v927 = vpop.xlane.xlu0 %926
    %v928 = vsel %vm571, %v821, -inf
    %929 = vmax.xlane.f32.xlu0 %v928
    %v930 = vpop.xlane.xlu0 %929
    %v931 = vsel %vm571, %v826, -inf
    %932 = vmax.xlane.f32.xlu0 %v931
    %v933 = vpop.xlane.xlu0 %932
    %v934 = vsel %vm571, %v908, -inf
    %935 = vmax.xlane.f32.xlu0 %v934
    %v936 = vpop.xlane.xlu0 %935
    %v937 = vsel %vm571, %v913, -inf
    %938 = vmax.xlane.f32.xlu0 %v937
    %v939 = vpop.xlane.xlu0 %938
    %v940 = vsub.f32 %v647, %v918
    %v941 = vsub.f32 %v652, %v921
    %v942 = vsub.f32 %v734, %v924
    %v943 = vsub.f32 %v739, %v927
    %v944 = vsub.f32 %v821, %v930
    %v945 = vsub.f32 %v826, %v933
    %v946 = vsub.f32 %v908, %v936
    %v947 = vsub.f32 %v913, %v939
    %v948 = vmul.f32 %v940, 1.442695
    %v949 = vpow.pop %v948
    %v950 = vmul.f32 %v941, 1.442695
    %v951 = vpow.pop %v950
    %v952 = vmul.f32 %v942, 1.442695
    %v953 = vpow.pop %v952
    %v954 = vmul.f32 %v943, 1.442695
    %v955 = vpow.pop %v954
    %v956 = vmul.f32 %v944, 1.442695
    %v957 = vpow.pop %v956
    %v958 = vmul.f32 %v945, 1.442695
    %v959 = vpow.pop %v958
    %v960 = vmul.f32 %v946, 1.442695
    %v961 = vpow.pop %v960
    %v962 = vmul.f32 %v947, 1.442695
    %v963 = vpow.pop %v962
    %v964 = vsel %vm571, %v949, 0.0
    %965 = vadd.xlane.f32.xlu0 %v964
    %v966 = vpop.xlane.xlu0 %965
    %v967 = vsel %vm571, %v951, 0.0
    %968 = vadd.xlane.f32.xlu0 %v967
    %v969 = vpop.xlane.xlu0 %968
    %v970 = vsel %vm571, %v953, 0.0
    %971 = vadd.xlane.f32.xlu0 %v970
    %v972 = vpop.xlane.xlu0 %971
    %v973 = vsel %vm571, %v955, 0.0
    %974 = vadd.xlane.f32.xlu0 %v973
    %v975 = vpop.xlane.xlu0 %974
    %v976 = vsel %vm571, %v957, 0.0
    %977 = vadd.xlane.f32.xlu0 %v976
    %v978 = vpop.xlane.xlu0 %977
    %v979 = vsel %vm571, %v959, 0.0
    %980 = vadd.xlane.f32.xlu0 %v979
    %v981 = vpop.xlane.xlu0 %980
    %v982 = vsel %vm571, %v961, 0.0
    %983 = vadd.xlane.f32.xlu0 %v982
    %v984 = vpop.xlane.xlu0 %983
    %v985 = vsel %vm571, %v963, 0.0
    %986 = vadd.xlane.f32.xlu0 %v985
    %v987 = vpop.xlane.xlu0 %986
    %v988 = vrcp.pop %v966
    %v989 = vrcp.pop %v969
    %v990 = vrcp.pop %v972
    %v991 = vrcp.pop %v975
    %v992 = vrcp.pop %v978
    %v993 = vrcp.pop %v981
    %v994 = vrcp.pop %v984
    %v995 = vrcp.pop %v987
    %v996 = vmul.f32 %v949, %v988
    %v997 = vmul.f32 %v951, %v989
    %v998 = vmul.f32 %v953, %v990
    %v999 = vmul.f32 %v955, %v991
    %v1000 = vmul.f32 %v957, %v992
    %v1001 = vmul.f32 %v959, %v993
    %v1002 = vmul.f32 %v961, %v994
    %v1003 = vmul.f32 %v963, %v995
    %1004 = vrot.lane.b32.xlu0 %v537, 64
    %v1005 = vpop.permute.xlu0 %1004
    %1006 = vrot.lane.b32.xlu0 %v542, 64
    %v1007 = vpop.permute.xlu0 %1006
    %v1011 = vsel %vm571, %v996, 0
    %v1014 = vsel %vm571, %v997, 0
    %1016 = vmatprep.subr.mxu0 0.0
    %1017 = vmatpush1.msra.mxu0 %v1005
    %1018 = vmatprep.subr.mxu0 0.0
    %1019 = vmatpush1.msra.mxu0 %v1007
    %1020 = vmatprep.subr.mxu0 0.0
    %1021 = vmatpush1.msra.mxu0 0.0
    %1022 = vmatprep.subr.mxu0 0.0
    %1023 = vmatpush1.msra.mxu0 0.0
    %1024 = vmatprep.subr.mxu0 0.0
    %1025 = vmatpush1.msra.mxu0 0.0
    %1026 = vmatprep.subr.mxu0 0.0
    %1027 = vmatpush1.msra.mxu0 0.0
    %1028 = vmatprep.subr.mxu0 0.0
    %1029 = vmatpush1.msra.mxu0 0.0
    %1030 = vmatprep.subr.mxu0 0.0
    %1031 = vmatpush1.msra.mxu0 0.0
    %1032 = vmatprep.subr.mxu0 0.0
    %1033 = vmatpush1.msra.mxu0 0.0
    %1034 = vmatprep.subr.mxu0 0.0
    %1035 = vmatpush1.msra.mxu0 0.0
    %1036 = vmatprep.subr.mxu0 0.0
    %1037 = vmatpush1.msra.mxu0 0.0
    %1038 = vmatprep.subr.mxu0 0.0
    %1039 = vmatpush1.msra.mxu0 0.0
    %1040 = vmatprep.subr.mxu0 0.0
    %1041 = vmatpush1.msra.mxu0 0.0
    %1042 = vmatprep.subr.mxu0 0.0
    %1043 = vmatpush1.msra.mxu0 0.0
    %1044 = vmatprep.subr.mxu0 0.0
    %1045 = vmatpush1.msra.mxu0 0.0
    %1046 = vmatprep.subr.mxu0 0.0
    %1047 = vmatpush1.msra.mxu0 0.0
    %1048 = vmatprep.subr.mxu0 0.0
    %1049 = vmatpush1.msra.mxu0 0.0
    %1050 = vmatprep.subr.mxu0 0.0
    %1051 = vmatpush1.msra.mxu0 0.0
    %1052 = vmatprep.subr.mxu0 0.0
    %1053 = vmatpush1.msra.mxu0 0.0
    %1054 = vmatprep.subr.mxu0 0.0
    %1055 = vmatpush1.msra.mxu0 0.0
    %1056 = vmatprep.subr.mxu0 0.0
    %1057 = vmatpush1.msra.mxu0 0.0
    %1058 = vmatprep.subr.mxu0 0.0
    %1059 = vmatpush1.msra.mxu0 0.0
    %1060 = vmatprep.subr.mxu0 0.0
    %1061 = vmatpush1.msra.mxu0 0.0
    %1062 = vmatprep.subr.mxu0 0.0
    %1063 = vmatpush1.msra.mxu0 0.0
    %1064 = vmatprep.subr.mxu0 0.0
    %1065 = vmatpush1.msra.mxu0 0.0
    %1066 = vmatprep.subr.mxu0 0.0
    %1067 = vmatpush1.msra.mxu0 0.0
    %1068 = vmatprep.subr.mxu0 0.0
    %1069 = vmatpush1.msra.mxu0 0.0
    %1070 = vmatprep.subr.mxu0 0.0
    %1071 = vmatpush1.msra.mxu0 0.0
    %1072 = vmatprep.subr.mxu0 0.0
    %1073 = vmatpush1.msra.mxu0 0.0
    %1074 = vmatprep.subr.mxu0 0.0
    %1075 = vmatpush1.msra.mxu0 0.0
    %1076 = vmatprep.subr.mxu0 0.0
    %1077 = vmatpush1.msra.mxu0 0.0
    %1078 = vmatprep.subr.mxu0 0.0
    %1079 = vmatpush1.msra.mxu0 0.0
    %1080 = vmatprep.mubr.f32.mxu0 0.0
    %1081 = vmatmul.mubr.f32.gmra.mrb[0].mxu0 %v1011
    %v1082 = vpop.f32.mrb[0].mxu0
    %v1083 = vadd.f32 0.0, %v1082
    %v1084 = vpop.f32.mrb[0].mxu0
    %1085 = vmatprep.mubr.f32.mxu0 0.0
    %1086 = vmatmul.mubr.f32.gmra.mrb[0].mxu0 %v1014
    %v1087 = vpop.f32.mrb[0].mxu0
    %v1088 = vadd.f32 0.0, %v1087
    %v1089 = vpop.f32.mrb[0].mxu0
    %1090 = vdwg.mxu0
    %1091 = vrot.lane.b32.xlu0 %v547, 64
    %v1092 = vpop.permute.xlu0 %1091
    %1093 = vrot.lane.b32.xlu0 %v552, 64
    %v1094 = vpop.permute.xlu0 %1093
    %v1098 = vsel %vm571, %v998, 0
    %v1101 = vsel %vm571, %v999, 0
    %1103 = vmatprep.subr.mxu0 0.0
    %1104 = vmatpush1.msra.mxu0 %v1092
    %1105 = vmatprep.subr.mxu0 0.0
    %1106 = vmatpush1.msra.mxu0 %v1094
    %1107 = vmatprep.subr.mxu0 0.0
    %1108 = vmatpush1.msra.mxu0 0.0
    %1109 = vmatprep.subr.mxu0 0.0
    %1110 = vmatpush1.msra.mxu0 0.0
    %1111 = vmatprep.subr.mxu0 0.0
    %1112 = vmatpush1.msra.mxu0 0.0
    %1113 = vmatprep.subr.mxu0 0.0
    %1114 = vmatpush1.msra.mxu0 0.0
    %1115 = vmatprep.subr.mxu0 0.0
    %1116 = vmatpush1.msra.mxu0 0.0
    %1117 = vmatprep.subr.mxu0 0.0
    %1118 = vmatpush1.msra.mxu0 0.0
    %1119 = vmatprep.subr.mxu0 0.0
    %1120 = vmatpush1.msra.mxu0 0.0
    %1121 = vmatprep.subr.mxu0 0.0
    %1122 = vmatpush1.msra.mxu0 0.0
    %1123 = vmatprep.subr.mxu0 0.0
    %1124 = vmatpush1.msra.mxu0 0.0
    %1125 = vmatprep.subr.mxu0 0.0
    %1126 = vmatpush1.msra.mxu0 0.0
    %1127 = vmatprep.subr.mxu0 0.0
    %1128 = vmatpush1.msra.mxu0 0.0
    %1129 = vmatprep.subr.mxu0 0.0
    %1130 = vmatpush1.msra.mxu0 0.0
    %1131 = vmatprep.subr.mxu0 0.0
    %1132 = vmatpush1.msra.mxu0 0.0
    %1133 = vmatprep.subr.mxu0 0.0
    %1134 = vmatpush1.msra.mxu0 0.0
    %1135 = vmatprep.subr.mxu0 0.0
    %1136 = vmatpush1.msra.mxu0 0.0
    %1137 = vmatprep.subr.mxu0 0.0
    %1138 = vmatpush1.msra.mxu0 0.0
    %1139 = vmatprep.subr.mxu0 0.0
    %1140 = vmatpush1.msra.mxu0 0.0
    %1141 = vmatprep.subr.mxu0 0.0
    %1142 = vmatpush1.msra.mxu0 0.0
    %1143 = vmatprep.subr.mxu0 0.0
    %1144 = vmatpush1.msra.mxu0 0.0
    %1145 = vmatprep.subr.mxu0 0.0
    %1146 = vmatpush1.msra.mxu0 0.0
    %1147 = vmatprep.subr.mxu0 0.0
    %1148 = vmatpush1.msra.mxu0 0.0
    %1149 = vmatprep.subr.mxu0 0.0
    %1150 = vmatpush1.msra.mxu0 0.0
    %1151 = vmatprep.subr.mxu0 0.0
    %1152 = vmatpush1.msra.mxu0 0.0
    %1153 = vmatprep.subr.mxu0 0.0
    %1154 = vmatpush1.msra.mxu0 0.0
    %1155 = vmatprep.subr.mxu0 0.0
    %1156 = vmatpush1.msra.mxu0 0.0
    %1157 = vmatprep.subr.mxu0 0.0
    %1158 = vmatpush1.msra.mxu0 0.0
    %1159 = vmatprep.subr.mxu0 0.0
    %1160 = vmatpush1.msra.mxu0 0.0
    %1161 = vmatprep.subr.mxu0 0.0
    %1162 = vmatpush1.msra.mxu0 0.0
    %1163 = vmatprep.subr.mxu0 0.0
    %1164 = vmatpush1.msra.mxu0 0.0
    %1165 = vmatprep.subr.mxu0 0.0
    %1166 = vmatpush1.msra.mxu0 0.0
    %1167 = vmatprep.mubr.f32.mxu0 0.0
    %1168 = vmatmul.mubr.f32.gmra.mrb[0].mxu0 %v1098
    %v1169 = vpop.f32.mrb[0].mxu0
    %v1170 = vadd.f32 0.0, %v1169
    %v1171 = vpop.f32.mrb[0].mxu0
    %1172 = vmatprep.mubr.f32.mxu0 0.0
    %1173 = vmatmul.mubr.f32.gmra.mrb[0].mxu0 %v1101
    %v1174 = vpop.f32.mrb[0].mxu0
    %v1175 = vadd.f32 0.0, %v1174
    %v1176 = vpop.f32.mrb[0].mxu0
    %1177 = vdwg.mxu0
    %1178 = vrot.lane.b32.xlu0 %v560, 64
    %v1179 = vpop.permute.xlu0 %1178
    %1180 = vrot.lane.b32.xlu0 %v562, 64
    %v1181 = vpop.permute.xlu0 %1180
    %v1185 = vsel %vm571, %v1000, 0
    %v1188 = vsel %vm571, %v1001, 0
    %1190 = vmatprep.subr.mxu0 0.0
    %1191 = vmatpush1.msra.mxu0 %v1179
    %1192 = vmatprep.subr.mxu0 0.0
    %1193 = vmatpush1.msra.mxu0 %v1181
    %1194 = vmatprep.subr.mxu0 0.0
    %1195 = vmatpush1.msra.mxu0 0.0
    %1196 = vmatprep.subr.mxu0 0.0
    %1197 = vmatpush1.msra.mxu0 0.0
    %1198 = vmatprep.subr.mxu0 0.0
    %1199 = vmatpush1.msra.mxu0 0.0
    %1200 = vmatprep.subr.mxu0 0.0
    %1201 = vmatpush1.msra.mxu0 0.0
    %1202 = vmatprep.subr.mxu0 0.0
    %1203 = vmatpush1.msra.mxu0 0.0
    %1204 = vmatprep.subr.mxu0 0.0
    %1205 = vmatpush1.msra.mxu0 0.0
    %1206 = vmatprep.subr.mxu0 0.0
    %1207 = vmatpush1.msra.mxu0 0.0
    %1208 = vmatprep.subr.mxu0 0.0
    %1209 = vmatpush1.msra.mxu0 0.0
    %1210 = vmatprep.subr.mxu0 0.0
    %1211 = vmatpush1.msra.mxu0 0.0
    %1212 = vmatprep.subr.mxu0 0.0
    %1213 = vmatpush1.msra.mxu0 0.0
    %1214 = vmatprep.subr.mxu0 0.0
    %1215 = vmatpush1.msra.mxu0 0.0
    %1216 = vmatprep.subr.mxu0 0.0
    %1217 = vmatpush1.msra.mxu0 0.0
    %1218 = vmatprep.subr.mxu0 0.0
    %1219 = vmatpush1.msra.mxu0 0.0
    %1220 = vmatprep.subr.mxu0 0.0
    %1221 = vmatpush1.msra.mxu0 0.0
    %1222 = vmatprep.subr.mxu0 0.0
    %1223 = vmatpush1.msra.mxu0 0.0
    %1224 = vmatprep.subr.mxu0 0.0
    %1225 = vmatpush1.msra.mxu0 0.0
    %1226 = vmatprep.subr.mxu0 0.0
    %1227 = vmatpush1.msra.mxu0 0.0
    %1228 = vmatprep.subr.mxu0 0.0
    %1229 = vmatpush1.msra.mxu0 0.0
    %1230 = vmatprep.subr.mxu0 0.0
    %1231 = vmatpush1.msra.mxu0 0.0
    %1232 = vmatprep.subr.mxu0 0.0
    %1233 = vmatpush1.msra.mxu0 0.0
    %1234 = vmatprep.subr.mxu0 0.0
    %1235 = vmatpush1.msra.mxu0 0.0
    %1236 = vmatprep.subr.mxu0 0.0
    %1237 = vmatpush1.msra.mxu0 0.0
    %1238 = vmatprep.subr.mxu0 0.0
    %1239 = vmatpush1.msra.mxu0 0.0
    %1240 = vmatprep.subr.mxu0 0.0
    %1241 = vmatpush1.msra.mxu0 0.0
    %1242 = vmatprep.subr.mxu0 0.0
    %1243 = vmatpush1.msra.mxu0 0.0
    %1244 = vmatprep.subr.mxu0 0.0
    %1245 = vmatpush1.msra.mxu0 0.0
    %1246 = vmatprep.subr.mxu0 0.0
    %1247 = vmatpush1.msra.mxu0 0.0
    %1248 = vmatprep.subr.mxu0 0.0
    %1249 = vmatpush1.msra.mxu0 0.0
    %1250 = vmatprep.subr.mxu0 0.0
    %1251 = vmatpush1.msra.mxu0 0.0
    %1252 = vmatprep.subr.mxu0 0.0
    %1253 = vmatpush1.msra.mxu0 0.0
    %1254 = vmatprep.mubr.f32.mxu0 0.0
    %1255 = vmatmul.mubr.f32.gmra.mrb[0].mxu0 %v1185
    %v1256 = vpop.f32.mrb[0].mxu0
    %v1257 = vadd.f32 0.0, %v1256
    %v1258 = vpop.f32.mrb[0].mxu0
    %1259 = vmatprep.mubr.f32.mxu0 0.0
    %1260 = vmatmul.mubr.f32.gmra.mrb[0].mxu0 %v1188
    %v1261 = vpop.f32.mrb[0].mxu0
    %v1262 = vadd.f32 0.0, %v1261
    %v1263 = vpop.f32.mrb[0].mxu0
    %1264 = vdwg.mxu0
    %1265 = vrot.lane.b32.xlu0 %v564, 64
    %v1266 = vpop.permute.xlu0 %1265
    %1267 = vrot.lane.b32.xlu0 %v566, 64
    %v1268 = vpop.permute.xlu0 %1267
    %v1272 = vsel %vm571, %v1002, 0
    %v1275 = vsel %vm571, %v1003, 0
    %1277 = vmatprep.subr.mxu0 0.0
    %1278 = vmatpush1.msra.mxu0 %v1266
    %1279 = vmatprep.subr.mxu0 0.0
    %1280 = vmatpush1.msra.mxu0 %v1268
    %1281 = vmatprep.subr.mxu0 0.0
    %1282 = vmatpush1.msra.mxu0 0.0
    %1283 = vmatprep.subr.mxu0 0.0
    %1284 = vmatpush1.msra.mxu0 0.0
    %1285 = vmatprep.subr.mxu0 0.0
    %1286 = vmatpush1.msra.mxu0 0.0
    %1287 = vmatprep.subr.mxu0 0.0
    %1288 = vmatpush1.msra.mxu0 0.0
    %1289 = vmatprep.subr.mxu0 0.0
    %1290 = vmatpush1.msra.mxu0 0.0
    %1291 = vmatprep.subr.mxu0 0.0
    %1292 = vmatpush1.msra.mxu0 0.0
    %1293 = vmatprep.subr.mxu0 0.0
    %1294 = vmatpush1.msra.mxu0 0.0
    %1295 = vmatprep.subr.mxu0 0.0
    %1296 = vmatpush1.msra.mxu0 0.0
    %1297 = vmatprep.subr.mxu0 0.0
    %1298 = vmatpush1.msra.mxu0 0.0
    %1299 = vmatprep.subr.mxu0 0.0
    %1300 = vmatpush1.msra.mxu0 0.0
    %1301 = vmatprep.subr.mxu0 0.0
    %1302 = vmatpush1.msra.mxu0 0.0
    %1303 = vmatprep.subr.mxu0 0.0
    %1304 = vmatpush1.msra.mxu0 0.0
    %1305 = vmatprep.subr.mxu0 0.0
    %1306 = vmatpush1.msra.mxu0 0.0
    %1307 = vmatprep.subr.mxu0 0.0
    %1308 = vmatpush1.msra.mxu0 0.0
    %1309 = vmatprep.subr.mxu0 0.0
    %1310 = vmatpush1.msra.mxu0 0.0
    %1311 = vmatprep.subr.mxu0 0.0
    %1312 = vmatpush1.msra.mxu0 0.0
    %1313 = vmatprep.subr.mxu0 0.0
    %1314 = vmatpush1.msra.mxu0 0.0
    %1315 = vmatprep.subr.mxu0 0.0
    %1316 = vmatpush1.msra.mxu0 0.0
    %1317 = vmatprep.subr.mxu0 0.0
    %1318 = vmatpush1.msra.mxu0 0.0
    %1319 = vmatprep.subr.mxu0 0.0
    %1320 = vmatpush1.msra.mxu0 0.0
    %1321 = vmatprep.subr.mxu0 0.0
    %1322 = vmatpush1.msra.mxu0 0.0
    %1323 = vmatprep.subr.mxu0 0.0
    %1324 = vmatpush1.msra.mxu0 0.0
    %1325 = vmatprep.subr.mxu0 0.0
    %1326 = vmatpush1.msra.mxu0 0.0
    %1327 = vmatprep.subr.mxu0 0.0
    %1328 = vmatpush1.msra.mxu0 0.0
    %1329 = vmatprep.subr.mxu0 0.0
    %1330 = vmatpush1.msra.mxu0 0.0
    %1331 = vmatprep.subr.mxu0 0.0
    %1332 = vmatpush1.msra.mxu0 0.0
    %1333 = vmatprep.subr.mxu0 0.0
    %1334 = vmatpush1.msra.mxu0 0.0
    %1335 = vmatprep.subr.mxu0 0.0
    %1336 = vmatpush1.msra.mxu0 0.0
    %1337 = vmatprep.subr.mxu0 0.0
    %1338 = vmatpush1.msra.mxu0 0.0
    %1339 = vmatprep.subr.mxu0 0.0
    %1340 = vmatpush1.msra.mxu0 0.0
    %1341 = vmatprep.mubr.f32.mxu0 0.0
    %1342 = vmatmul.mubr.f32.gmra.mrb[0].mxu0 %v1272
    %v1343 = vpop.f32.mrb[0].mxu0
    %v1344 = vadd.f32 0.0, %v1343
    %v1345 = vpop.f32.mrb[0].mxu0
    %1346 = vmatprep.mubr.f32.mxu0 0.0
    %1347 = vmatmul.mubr.f32.gmra.mrb[0].mxu0 %v1275
    %v1348 = vpop.f32.mrb[0].mxu0
    %v1349 = vadd.f32 0.0, %v1348
    %v1350 = vpop.f32.mrb[0].mxu0
    %1351 = vdwg.mxu0
    %1356 = vrot.lane.b32.xlu0 %v1257, 16
    %v1357 = vpop.permute.xlu0 %1356
    %1358 = vrot.lane.b32.xlu0 %v1262, 16
    %v1359 = vpop.permute.xlu0 %1358
    %1360 = vrot.lane.b32.xlu0 %v1344, 16
    %v1361 = vpop.permute.xlu0 %1360
    %1362 = vrot.lane.b32.xlu0 %v1349, 16
    %v1363 = vpop.permute.xlu0 %1362
    %v1368 = vsel %vm571, %v1083, %v1357
    %v1369 = vsel %vm571, %v1088, %v1359
    %v1370 = vsel %vm571, %v1170, %v1361
    %v1371 = vsel %vm571, %v1175, %v1363
    %v1372 = vlaneseq
    %v1373 = vshrl.u32 %v1372, 7
    %v1374 = vsub.s32 0, %v1373
    %v1375 = vrot.slane %v447, %v1374
    %v1377 = vsel %vm266, %v1368, 0
    %v1380 = vsel %vm266, %v1369, 0
    %v1383 = vsel %vm266, %v1370, 0
    %v1386 = vsel %vm266, %v1371, 0
    %1388 = vmatprep.subr.mxu0 0.0
    %1389 = vmatpush1.msra.mxu0 %v422
    %1390 = vmatprep.subr.mxu0 0.0
    %1391 = vmatpush1.msra.mxu0 %v423
    %1392 = vmatprep.subr.mxu0 0.0
    %1393 = vmatpush1.msra.mxu0 %v424
    %1394 = vmatprep.subr.mxu0 0.0
    %1395 = vmatpush1.msra.mxu0 %v425
    %1396 = vmatprep.subr.mxu0 0.0
    %1397 = vmatpush1.msra.mxu0 0.0
    %1398 = vmatprep.subr.mxu0 0.0
    %1399 = vmatpush1.msra.mxu0 0.0
    %1400 = vmatprep.subr.mxu0 0.0
    %1401 = vmatpush1.msra.mxu0 0.0
    %1402 = vmatprep.subr.mxu0 0.0
    %1403 = vmatpush1.msra.mxu0 0.0
    %1404 = vmatprep.subr.mxu0 0.0
    %1405 = vmatpush1.msra.mxu0 0.0
    %1406 = vmatprep.subr.mxu0 0.0
    %1407 = vmatpush1.msra.mxu0 0.0
    %1408 = vmatprep.subr.mxu0 0.0
    %1409 = vmatpush1.msra.mxu0 0.0
    %1410 = vmatprep.subr.mxu0 0.0
    %1411 = vmatpush1.msra.mxu0 0.0
    %1412 = vmatprep.subr.mxu0 0.0
    %1413 = vmatpush1.msra.mxu0 0.0
    %1414 = vmatprep.subr.mxu0 0.0
    %1415 = vmatpush1.msra.mxu0 0.0
    %1416 = vmatprep.subr.mxu0 0.0
    %1417 = vmatpush1.msra.mxu0 0.0
    %1418 = vmatprep.subr.mxu0 0.0
    %1419 = vmatpush1.msra.mxu0 0.0
    %1420 = vmatprep.subr.mxu0 0.0
    %1421 = vmatpush1.msra.mxu0 0.0
    %1422 = vmatprep.subr.mxu0 0.0
    %1423 = vmatpush1.msra.mxu0 0.0
    %1424 = vmatprep.subr.mxu0 0.0
    %1425 = vmatpush1.msra.mxu0 0.0
    %1426 = vmatprep.subr.mxu0 0.0
    %1427 = vmatpush1.msra.mxu0 0.0
    %1428 = vmatprep.subr.mxu0 0.0
    %1429 = vmatpush1.msra.mxu0 0.0
    %1430 = vmatprep.subr.mxu0 0.0
    %1431 = vmatpush1.msra.mxu0 0.0
    %1432 = vmatprep.subr.mxu0 0.0
    %1433 = vmatpush1.msra.mxu0 0.0
    %1434 = vmatprep.subr.mxu0 0.0
    %1435 = vmatpush1.msra.mxu0 0.0
    %1436 = vmatprep.subr.mxu0 0.0
    %1437 = vmatpush1.msra.mxu0 0.0
    %1438 = vmatprep.subr.mxu0 0.0
    %1439 = vmatpush1.msra.mxu0 0.0
    %1440 = vmatprep.subr.mxu0 0.0
    %1441 = vmatpush1.msra.mxu0 0.0
    %1442 = vmatprep.subr.mxu0 0.0
    %1443 = vmatpush1.msra.mxu0 0.0
    %1444 = vmatprep.subr.mxu0 0.0
    %1445 = vmatpush1.msra.mxu0 0.0
    %1446 = vmatprep.subr.mxu0 0.0
    %1447 = vmatpush1.msra.mxu0 0.0
    %1448 = vmatprep.subr.mxu0 0.0
    %1449 = vmatpush1.msra.mxu0 0.0
    %1450 = vmatprep.subr.mxu0 0.0
    %1451 = vmatpush1.msra.mxu0 0.0
    %1452 = vmatprep.mubr.f32.mxu0 0.0
    %1453 = vmatmul.mubr.f32.gmra.mrb[0].mxu0 %v1377
    %v1454 = vpop.f32.mrb[0].mxu0
    %v1455 = vadd.f32 %v1375, %v1454
    %v1456 = vpop.f32.mrb[0].mxu0
    %1457 = vmatprep.mubr.f32.mxu0 0.0
    %1458 = vmatmul.mubr.f32.gmra.mrb[0].mxu0 %v1380
    %v1459 = vpop.f32.mrb[0].mxu0
    %v1460 = vadd.f32 %v1375, %v1459
    %v1461 = vpop.f32.mrb[0].mxu0
    %1462 = vmatprep.mubr.f32.mxu0 0.0
    %1463 = vmatmul.mubr.f32.gmra.mrb[0].mxu0 %v1383
    %v1464 = vpop.f32.mrb[0].mxu0
    %v1465 = vadd.f32 %v1375, %v1464
    %v1466 = vpop.f32.mrb[0].mxu0
    %1467 = vmatprep.mubr.f32.mxu0 0.0
    %1468 = vmatmul.mubr.f32.gmra.mrb[0].mxu0 %v1386
    %v1469 = vpop.f32.mrb[0].mxu0
    %v1470 = vadd.f32 %v1375, %v1469
    %v1471 = vpop.f32.mrb[0].mxu0
    %1472 = vdwg.mxu0
    %v1473 = vadd.f32 %v414, %v1455
    %v1474 = vadd.f32 %v415, %v1460
    %v1475 = vadd.f32 %v416, %v1465
    %v1476 = vadd.f32 %v417, %v1470
    %v1477 = vsel %vm266, %v1473, 0.0
    %1478 = vadd.xlane.f32.xlu0 %v1477
    %v1479 = vpop.xlane.xlu0 %1478
    %v1480 = vsel %vm266, %v1474, 0.0
    %1481 = vadd.xlane.f32.xlu0 %v1480
    %v1482 = vpop.xlane.xlu0 %1481
    %v1483 = vsel %vm266, %v1475, 0.0
    %1484 = vadd.xlane.f32.xlu0 %v1483
    %v1485 = vpop.xlane.xlu0 %1484
    %v1486 = vsel %vm266, %v1476, 0.0
    %1487 = vadd.xlane.f32.xlu0 %v1486
    %v1488 = vpop.xlane.xlu0 %1487
    %v1489 = vrcp.pop 32.0
    %v1490 = vmul.f32 %v1479, %v1489
    %v1491 = vmul.f32 %v1482, %v1489
    %v1492 = vmul.f32 %v1485, %v1489
    %v1493 = vmul.f32 %v1488, %v1489
    %v1494 = vsub.f32 %v1473, %v1490
    %v1495 = vsub.f32 %v1474, %v1491
    %v1496 = vsub.f32 %v1475, %v1492
    %v1497 = vsub.f32 %v1476, %v1493
    %v1498 = vmul.f32 %v1494, %v1494
    %v1499 = vmul.f32 %v1495, %v1495
    %v1500 = vmul.f32 %v1496, %v1496
    %v1501 = vmul.f32 %v1497, %v1497
    %v1502 = vsel %vm266, %v1498, 0.0
    %1503 = vadd.xlane.f32.xlu0 %v1502
    %v1504 = vpop.xlane.xlu0 %1503
    %v1505 = vsel %vm266, %v1499, 0.0
    %1506 = vadd.xlane.f32.xlu0 %v1505
    %v1507 = vpop.xlane.xlu0 %1506
    %v1508 = vsel %vm266, %v1500, 0.0
    %1509 = vadd.xlane.f32.xlu0 %v1508
    %v1510 = vpop.xlane.xlu0 %1509
    %v1511 = vsel %vm266, %v1501, 0.0
    %1512 = vadd.xlane.f32.xlu0 %v1511
    %v1513 = vpop.xlane.xlu0 %1512
    %v1514 = vmul.f32 %v1504, %v1489
    %v1515 = vmul.f32 %v1507, %v1489
    %v1516 = vmul.f32 %v1510, %v1489
    %v1517 = vmul.f32 %v1513, %v1489
    %v1518 = vadd.f32 %v1514, 1e-05
    %v1519 = vadd.f32 %v1515, 1e-05
    %v1520 = vadd.f32 %v1516, 1e-05
    %v1521 = vadd.f32 %v1517, 1e-05
    %v1522 = vrsqrt.pop %v1518
    %v1523 = vrsqrt.pop %v1519
    %v1524 = vrsqrt.pop %v1520
    %v1525 = vrsqrt.pop %v1521
    %v1526 = vmul.f32 %v1494, %v1522
    %v1527 = vmul.f32 %v1495, %v1523
    %v1528 = vmul.f32 %v1496, %v1524
    %v1529 = vmul.f32 %v1497, %v1525
    %v1530 = vlaneseq
    %v1531 = vshrl.u32 %v1530, 7
    %v1532 = vsub.s32 0, %v1531
    %v1533 = vrot.slane %v448, %v1532
    %v1534 = vmul.f32 %v1526, %v1533
    %v1535 = vmul.f32 %v1527, %v1533
    %v1536 = vmul.f32 %v1528, %v1533
    %v1537 = vmul.f32 %v1529, %v1533
    %v1538 = vlaneseq
    %v1539 = vshrl.u32 %v1538, 7
    %v1540 = vsub.s32 0, %v1539
    %v1541 = vrot.slane %v449, %v1540
    %v1542 = vadd.f32 %v1534, %v1541
    %v1543 = vadd.f32 %v1535, %v1541
    %v1544 = vadd.f32 %v1536, %v1541
    %v1545 = vadd.f32 %v1537, %v1541
    %v1546 = vlaneseq
    %v1547 = vshrl.u32 %v1546, 7
    %v1548 = vsub.s32 0, %v1547
    %v1549 = vrot.slane %v450, %v1548
    %v1551 = vsel %vm266, %v1542, 0
    %v1554 = vsel %vm266, %v1543, 0
    %v1557 = vsel %vm266, %v1544, 0
    %v1560 = vsel %vm266, %v1545, 0
    %1562 = vmatprep.subr.mxu0 0.0
    %1563 = vmatpush1.msra.mxu0 %v426
    %1564 = vmatprep.subr.mxu0 0.0
    %1565 = vmatpush1.msra.mxu0 %v427
    %1566 = vmatprep.subr.mxu0 0.0
    %1567 = vmatpush1.msra.mxu0 %v428
    %1568 = vmatprep.subr.mxu0 0.0
    %1569 = vmatpush1.msra.mxu0 %v429
    %1570 = vmatprep.subr.mxu0 0.0
    %1571 = vmatpush1.msra.mxu0 0.0
    %1572 = vmatprep.subr.mxu0 0.0
    %1573 = vmatpush1.msra.mxu0 0.0
    %1574 = vmatprep.subr.mxu0 0.0
    %1575 = vmatpush1.msra.mxu0 0.0
    %1576 = vmatprep.subr.mxu0 0.0
    %1577 = vmatpush1.msra.mxu0 0.0
    %1578 = vmatprep.subr.mxu0 0.0
    %1579 = vmatpush1.msra.mxu0 0.0
    %1580 = vmatprep.subr.mxu0 0.0
    %1581 = vmatpush1.msra.mxu0 0.0
    %1582 = vmatprep.subr.mxu0 0.0
    %1583 = vmatpush1.msra.mxu0 0.0
    %1584 = vmatprep.subr.mxu0 0.0
    %1585 = vmatpush1.msra.mxu0 0.0
    %1586 = vmatprep.subr.mxu0 0.0
    %1587 = vmatpush1.msra.mxu0 0.0
    %1588 = vmatprep.subr.mxu0 0.0
    %1589 = vmatpush1.msra.mxu0 0.0
    %1590 = vmatprep.subr.mxu0 0.0
    %1591 = vmatpush1.msra.mxu0 0.0
    %1592 = vmatprep.subr.mxu0 0.0
    %1593 = vmatpush1.msra.mxu0 0.0
    %1594 = vmatprep.subr.mxu0 0.0
    %1595 = vmatpush1.msra.mxu0 0.0
    %1596 = vmatprep.subr.mxu0 0.0
    %1597 = vmatpush1.msra.mxu0 0.0
    %1598 = vmatprep.subr.mxu0 0.0
    %1599 = vmatpush1.msra.mxu0 0.0
    %1600 = vmatprep.subr.mxu0 0.0
    %1601 = vmatpush1.msra.mxu0 0.0
    %1602 = vmatprep.subr.mxu0 0.0
    %1603 = vmatpush1.msra.mxu0 0.0
    %1604 = vmatprep.subr.mxu0 0.0
    %1605 = vmatpush1.msra.mxu0 0.0
    %1606 = vmatprep.subr.mxu0 0.0
    %1607 = vmatpush1.msra.mxu0 0.0
    %1608 = vmatprep.subr.mxu0 0.0
    %1609 = vmatpush1.msra.mxu0 0.0
    %1610 = vmatprep.subr.mxu0 0.0
    %1611 = vmatpush1.msra.mxu0 0.0
    %1612 = vmatprep.subr.mxu0 0.0
    %1613 = vmatpush1.msra.mxu0 0.0
    %1614 = vmatprep.subr.mxu0 0.0
    %1615 = vmatpush1.msra.mxu0 0.0
    %1616 = vmatprep.subr.mxu0 0.0
    %1617 = vmatpush1.msra.mxu0 0.0
    %1618 = vmatprep.subr.mxu0 0.0
    %1619 = vmatpush1.msra.mxu0 0.0
    %1620 = vmatprep.subr.mxu0 0.0
    %1621 = vmatpush1.msra.mxu0 0.0
    %1622 = vmatprep.subr.mxu0 0.0
    %1623 = vmatpush1.msra.mxu0 0.0
    %1624 = vmatprep.subr.mxu0 0.0
    %1625 = vmatpush1.msra.mxu0 0.0
    %1626 = vmatprep.mubr.f32.mxu0 0.0
    %1627 = vmatmul.mubr.f32.gmra.mrb[0].mxu0 %v1551
    %v1628 = vpop.f32.mrb[0].mxu0
    %v1629 = vadd.f32 %v1549, %v1628
    %v1630 = vpop.f32.mrb[0].mxu0
    %1631 = vmatprep.mubr.f32.mxu0 0.0
    %1632 = vmatmul.mubr.f32.gmra.mrb[0].mxu0 %v1554
    %v1633 = vpop.f32.mrb[0].mxu0
    %v1634 = vadd.f32 %v1549, %v1633
    %v1635 = vpop.f32.mrb[0].mxu0
    %1636 = vmatprep.mubr.f32.mxu0 0.0
    %1637 = vmatmul.mubr.f32.gmra.mrb[0].mxu0 %v1557
    %v1638 = vpop.f32.mrb[0].mxu0
    %v1639 = vadd.f32 %v1549, %v1638
    %v1640 = vpop.f32.mrb[0].mxu0
    %1641 = vmatprep.mubr.f32.mxu0 0.0
    %1642 = vmatmul.mubr.f32.gmra.mrb[0].mxu0 %v1560
    %v1643 = vpop.f32.mrb[0].mxu0
    %v1644 = vadd.f32 %v1549, %v1643
    %v1645 = vpop.f32.mrb[0].mxu0
    %1646 = vdwg.mxu0
    %v1647 = vmax.f32 %v1629, 0.0
    %v1648 = vmax.f32 %v1634, 0.0
    %v1649 = vmax.f32 %v1639, 0.0
    %v1650 = vmax.f32 %v1644, 0.0
    %v1651 = vlaneseq
    %v1652 = vshrl.u32 %v1651, 7
    %v1653 = vsub.s32 0, %v1652
    %v1654 = vrot.slane %v451, %v1653
    %1655 = vmatprep.subr.mxu0 0.0
    %1656 = vmatpush1.msra.mxu0 %v430
    %1657 = vmatprep.subr.mxu0 0.0
    %1658 = vmatpush1.msra.mxu0 %v431
    %1659 = vmatprep.subr.mxu0 0.0
    %1660 = vmatpush1.msra.mxu0 %v432
    %1661 = vmatprep.subr.mxu0 0.0
    %1662 = vmatpush1.msra.mxu0 %v433
    %1663 = vmatprep.subr.mxu0 0.0
    %1664 = vmatpush1.msra.mxu0 %v434
    %1665 = vmatprep.subr.mxu0 0.0
    %1666 = vmatpush1.msra.mxu0 %v435
    %1667 = vmatprep.subr.mxu0 0.0
    %1668 = vmatpush1.msra.mxu0 %v436
    %1669 = vmatprep.subr.mxu0 0.0
    %1670 = vmatpush1.msra.mxu0 %v437
    %1671 = vmatprep.subr.mxu0 0.0
    %1672 = vmatpush1.msra.mxu0 %v438
    %1673 = vmatprep.subr.mxu0 0.0
    %1674 = vmatpush1.msra.mxu0 %v439
    %1675 = vmatprep.subr.mxu0 0.0
    %1676 = vmatpush1.msra.mxu0 %v440
    %1677 = vmatprep.subr.mxu0 0.0
    %1678 = vmatpush1.msra.mxu0 %v441
    %1679 = vmatprep.subr.mxu0 0.0
    %1680 = vmatpush1.msra.mxu0 %v442
    %1681 = vmatprep.subr.mxu0 0.0
    %1682 = vmatpush1.msra.mxu0 %v443
    %1683 = vmatprep.subr.mxu0 0.0
    %1684 = vmatpush1.msra.mxu0 %v444
    %1685 = vmatprep.subr.mxu0 0.0
    %1686 = vmatpush1.msra.mxu0 %v445
    %1687 = vmatprep.subr.mxu0 0.0
    %1688 = vmatpush1.msra.mxu0 0.0
    %1689 = vmatprep.subr.mxu0 0.0
    %1690 = vmatpush1.msra.mxu0 0.0
    %1691 = vmatprep.subr.mxu0 0.0
    %1692 = vmatpush1.msra.mxu0 0.0
    %1693 = vmatprep.subr.mxu0 0.0
    %1694 = vmatpush1.msra.mxu0 0.0
    %1695 = vmatprep.subr.mxu0 0.0
    %1696 = vmatpush1.msra.mxu0 0.0
    %1697 = vmatprep.subr.mxu0 0.0
    %1698 = vmatpush1.msra.mxu0 0.0
    %1699 = vmatprep.subr.mxu0 0.0
    %1700 = vmatpush1.msra.mxu0 0.0
    %1701 = vmatprep.subr.mxu0 0.0
    %1702 = vmatpush1.msra.mxu0 0.0
    %1703 = vmatprep.subr.mxu0 0.0
    %1704 = vmatpush1.msra.mxu0 0.0
    %1705 = vmatprep.subr.mxu0 0.0
    %1706 = vmatpush1.msra.mxu0 0.0
    %1707 = vmatprep.subr.mxu0 0.0
    %1708 = vmatpush1.msra.mxu0 0.0
    %1709 = vmatprep.subr.mxu0 0.0
    %1710 = vmatpush1.msra.mxu0 0.0
    %1711 = vmatprep.subr.mxu0 0.0
    %1712 = vmatpush1.msra.mxu0 0.0
    %1713 = vmatprep.subr.mxu0 0.0
    %1714 = vmatpush1.msra.mxu0 0.0
    %1715 = vmatprep.subr.mxu0 0.0
    %1716 = vmatpush1.msra.mxu0 0.0
    %1717 = vmatprep.subr.mxu0 0.0
    %1718 = vmatpush1.msra.mxu0 0.0
    %1719 = vmatprep.mubr.f32.mxu0 0.0
    %1720 = vmatmul.mubr.f32.gmra.mrb[0].mxu0 %v1647
    %v1721 = vpop.f32.mrb[0].mxu0
    %v1722 = vadd.f32 %v1654, %v1721
    %v1723 = vpop.f32.mrb[0].mxu0
    %1724 = vmatprep.mubr.f32.mxu0 0.0
    %1725 = vmatmul.mubr.f32.gmra.mrb[0].mxu0 %v1648
    %v1726 = vpop.f32.mrb[0].mxu0
    %v1727 = vadd.f32 %v1654, %v1726
    %v1728 = vpop.f32.mrb[0].mxu0
    %1729 = vmatprep.mubr.f32.mxu0 0.0
    %1730 = vmatmul.mubr.f32.gmra.mrb[0].mxu0 %v1649
    %v1731 = vpop.f32.mrb[0].mxu0
    %v1732 = vadd.f32 %v1654, %v1731
    %v1733 = vpop.f32.mrb[0].mxu0
    %1734 = vmatprep.mubr.f32.mxu0 0.0
    %1735 = vmatmul.mubr.f32.gmra.mrb[0].mxu0 %v1650
    %v1736 = vpop.f32.mrb[0].mxu0
    %v1737 = vadd.f32 %v1654, %v1736
    %v1738 = vpop.f32.mrb[0].mxu0
    %1739 = vdwg.mxu0
    %v1740 = vadd.f32 %v1542, %v1722
    %v1741 = vadd.f32 %v1543, %v1727
    %v1742 = vadd.f32 %v1544, %v1732
    %v1743 = vadd.f32 %v1545, %v1737
    %v1744 = vsel %vm266, %v1740, 0.0
    %1745 = vadd.xlane.f32.xlu0 %v1744
    %v1746 = vpop.xlane.xlu0 %1745
    %v1747 = vsel %vm266, %v1741, 0.0
    %1748 = vadd.xlane.f32.xlu0 %v1747
    %v1749 = vpop.xlane.xlu0 %1748
    %v1750 = vsel %vm266, %v1742, 0.0
    %1751 = vadd.xlane.f32.xlu0 %v1750
    %v1752 = vpop.xlane.xlu0 %1751
    %v1753 = vsel %vm266, %v1743, 0.0
    %1754 = vadd.xlane.f32.xlu0 %v1753
    %v1755 = vpop.xlane.xlu0 %1754
    %v1756 = vmul.f32 %v1746, %v1489
    %v1757 = vmul.f32 %v1749, %v1489
    %v1758 = vmul.f32 %v1752, %v1489
    %v1759 = vmul.f32 %v1755, %v1489
    %v1760 = vsub.f32 %v1740, %v1756
    %v1761 = vsub.f32 %v1741, %v1757
    %v1762 = vsub.f32 %v1742, %v1758
    %v1763 = vsub.f32 %v1743, %v1759
    %v1764 = vmul.f32 %v1760, %v1760
    %v1765 = vmul.f32 %v1761, %v1761
    %v1766 = vmul.f32 %v1762, %v1762
    %v1767 = vmul.f32 %v1763, %v1763
    %v1768 = vsel %vm266, %v1764, 0.0
    %1769 = vadd.xlane.f32.xlu0 %v1768
    %v1770 = vpop.xlane.xlu0 %1769
    %v1771 = vsel %vm266, %v1765, 0.0
    %1772 = vadd.xlane.f32.xlu0 %v1771
    %v1773 = vpop.xlane.xlu0 %1772
    %v1774 = vsel %vm266, %v1766, 0.0
    %1775 = vadd.xlane.f32.xlu0 %v1774
    %v1776 = vpop.xlane.xlu0 %1775
    %v1777 = vsel %vm266, %v1767, 0.0
    %1778 = vadd.xlane.f32.xlu0 %v1777
    %v1779 = vpop.xlane.xlu0 %1778
    %v1780 = vmul.f32 %v1770, %v1489
    %v1781 = vmul.f32 %v1773, %v1489
    %v1782 = vmul.f32 %v1776, %v1489
    %v1783 = vmul.f32 %v1779, %v1489
    %v1784 = vadd.f32 %v1780, 1e-05
    %v1785 = vadd.f32 %v1781, 1e-05
    %v1786 = vadd.f32 %v1782, 1e-05
    %v1787 = vadd.f32 %v1783, 1e-05
    %v1788 = vrsqrt.pop %v1784
    %v1789 = vrsqrt.pop %v1785
    %v1790 = vrsqrt.pop %v1786
    %v1791 = vrsqrt.pop %v1787
    %v1792 = vmul.f32 %v1760, %v1788
    %v1793 = vmul.f32 %v1761, %v1789
    %v1794 = vmul.f32 %v1762, %v1790
    %v1795 = vmul.f32 %v1763, %v1791
    %v1796 = vlaneseq
    %v1797 = vshrl.u32 %v1796, 7
    %v1798 = vsub.s32 0, %v1797
    %v1799 = vrot.slane %v452, %v1798
    %v1800 = vmul.f32 %v1792, %v1799
    %v1801 = vmul.f32 %v1793, %v1799
    %v1802 = vmul.f32 %v1794, %v1799
    %v1803 = vmul.f32 %v1795, %v1799
    %v1804 = vlaneseq
    %v1805 = vshrl.u32 %v1804, 7
    %v1806 = vsub.s32 0, %v1805
    %v1807 = vrot.slane %v453, %v1806
    %v1808 = vadd.f32 %v1800, %v1807
    %v1809 = vadd.f32 %v1801, %v1807
    %v1810 = vadd.f32 %v1802, %v1807
    %v1811 = vadd.f32 %v1803, %v1807
    %v1812 = vld [vmem:[#allocation2 + $0x158] sm:$0xff]
    %v1813 = vld [vmem:[#allocation2 + $0x160] sm:$0xff]
    %v1814 = vld [vmem:[#allocation2 + $0x168] sm:$0xff]
    %v1815 = vld [vmem:[#allocation2 + $0x170] sm:$0xff]
    %v1816 = vld [vmem:[#allocation2 + $0x178] sm:$0xff]
    %v1817 = vld [vmem:[#allocation2 + $0x180] sm:$0xff]
    %v1818 = vld [vmem:[#allocation2 + $0x188] sm:$0xff]
    %v1819 = vld [vmem:[#allocation2 + $0x190] sm:$0xff]
    %v1820 = vld [vmem:[#allocation2 + $0x198] sm:$0xff]
    %v1821 = vld [vmem:[#allocation2 + $0x1a0] sm:$0xff]
    %v1822 = vld [vmem:[#allocation2 + $0x1a8] sm:$0xff]
    %v1823 = vld [vmem:[#allocation2 + $0x1b0] sm:$0xff]
    %v1824 = vld [vmem:[#allocation2 + $0x1b8] sm:$0xff]
    %v1825 = vld [vmem:[#allocation2 + $0x1c0] sm:$0xff]
    %v1826 = vld [vmem:[#allocation2 + $0x1c8] sm:$0xff]
    %v1827 = vld [vmem:[#allocation2 + $0x1d0] sm:$0xff]
    %v1828 = vld [vmem:[#allocation2 + $0x1d8] sm:$0xff]
    %v1829 = vld [vmem:[#allocation2 + $0x1e0] sm:$0xff]
    %v1830 = vld [vmem:[#allocation2 + $0x1e8] sm:$0xff]
    %v1831 = vld [vmem:[#allocation2 + $0x1f0] sm:$0xff]
    %v1832 = vld [vmem:[#allocation2 + $0x1f8] sm:$0xff]
    %v1833 = vld [vmem:[#allocation2 + $0x200] sm:$0xff]
    %v1834 = vld [vmem:[#allocation2 + $0x208] sm:$0xff]
    %v1835 = vld [vmem:[#allocation2 + $0x210] sm:$0xff]
    %v1836 = vld [vmem:[#allocation2 + $0x218] sm:$0xff]
    %v1837 = vld [vmem:[#allocation2 + $0x220] sm:$0xff]
    %v1838 = vld [vmem:[#allocation2 + $0x228] sm:$0xff]
    %v1839 = vld [vmem:[#allocation2 + $0x230] sm:$0xff]
    %v1840 = vld [vmem:[%s2 + $0xc] sm:$0x1]
    %v1841 = vld [vmem:[%s2 + $0xd] sm:$0x1]
    %v1842 = vld [vmem:[%s2 + $0xe] sm:$0x1]
    %v1843 = vld [vmem:[%s2 + $0xf] sm:$0x1]
    %v1844 = vld [vmem:[%s2 + $0x10] sm:$0x1]
    %v1845 = vld [vmem:[%s2 + $0x11] sm:$0x1]
    %v1846 = vld [vmem:[%s2 + $0x12] sm:$0x1]
    %v1847 = vld [vmem:[%s2 + $0x13] sm:$0x1]
    %v1848 = vlaneseq
    %v1849 = vshrl.u32 %v1848, 7
    %v1850 = vsub.s32 0, %v1849
    %v1851 = vrot.slane %v1840, %v1850
    %v1853 = vsel %vm266, %v1808, 0
    %v1856 = vsel %vm266, %v1809, 0
    %v1859 = vsel %vm266, %v1810, 0
    %v1862 = vsel %vm266, %v1811, 0
    %1864 = vmatprep.subr.mxu0 0.0
    %1865 = vmatpush1.msra.mxu0 %v1812
    %1866 = vmatprep.subr.mxu0 0.0
    %1867 = vmatpush1.msra.mxu0 %v1813
    %1868 = vmatprep.subr.mxu0 0.0
    %1869 = vmatpush1.msra.mxu0 %v1814
    %1870 = vmatprep.subr.mxu0 0.0
    %1871 = vmatpush1.msra.mxu0 %v1815
    %1872 = vmatprep.subr.mxu0 0.0
    %1873 = vmatpush1.msra.mxu0 0.0
    %1874 = vmatprep.subr.mxu0 0.0
    %1875 = vmatpush1.msra.mxu0 0.0
    %1876 = vmatprep.subr.mxu0 0.0
    %1877 = vmatpush1.msra.mxu0 0.0
    %1878 = vmatprep.subr.mxu0 0.0
    %1879 = vmatpush1.msra.mxu0 0.0
    %1880 = vmatprep.subr.mxu0 0.0
    %1881 = vmatpush1.msra.mxu0 0.0
    %1882 = vmatprep.subr.mxu0 0.0
    %1883 = vmatpush1.msra.mxu0 0.0
    %1884 = vmatprep.subr.mxu0 0.0
    %1885 = vmatpush1.msra.mxu0 0.0
    %1886 = vmatprep.subr.mxu0 0.0
    %1887 = vmatpush1.msra.mxu0 0.0
    %1888 = vmatprep.subr.mxu0 0.0
    %1889 = vmatpush1.msra.mxu0 0.0
    %1890 = vmatprep.subr.mxu0 0.0
    %1891 = vmatpush1.msra.mxu0 0.0
    %1892 = vmatprep.subr.mxu0 0.0
    %1893 = vmatpush1.msra.mxu0 0.0
    %1894 = vmatprep.subr.mxu0 0.0
    %1895 = vmatpush1.msra.mxu0 0.0
    %1896 = vmatprep.subr.mxu0 0.0
    %1897 = vmatpush1.msra.mxu0 0.0
    %1898 = vmatprep.subr.mxu0 0.0
    %1899 = vmatpush1.msra.mxu0 0.0
    %1900 = vmatprep.subr.mxu0 0.0
    %1901 = vmatpush1.msra.mxu0 0.0
    %1902 = vmatprep.subr.mxu0 0.0
    %1903 = vmatpush1.msra.mxu0 0.0
    %1904 = vmatprep.subr.mxu0 0.0
    %1905 = vmatpush1.msra.mxu0 0.0
    %1906 = vmatprep.subr.mxu0 0.0
    %1907 = vmatpush1.msra.mxu0 0.0
    %1908 = vmatprep.subr.mxu0 0.0
    %1909 = vmatpush1.msra.mxu0 0.0
    %1910 = vmatprep.subr.mxu0 0.0
    %1911 = vmatpush1.msra.mxu0 0.0
    %1912 = vmatprep.subr.mxu0 0.0
    %1913 = vmatpush1.msra.mxu0 0.0
    %1914 = vmatprep.subr.mxu0 0.0
    %1915 = vmatpush1.msra.mxu0 0.0
    %1916 = vmatprep.subr.mxu0 0.0
    %1917 = vmatpush1.msra.mxu0 0.0
    %1918 = vmatprep.subr.mxu0 0.0
    %1919 = vmatpush1.msra.mxu0 0.0
    %1920 = vmatprep.subr.mxu0 0.0
    %1921 = vmatpush1.msra.mxu0 0.0
    %1922 = vmatprep.subr.mxu0 0.0
    %1923 = vmatpush1.msra.mxu0 0.0
    %1924 = vmatprep.subr.mxu0 0.0
    %1925 = vmatpush1.msra.mxu0 0.0
    %1926 = vmatprep.subr.mxu0 0.0
    %1927 = vmatpush1.msra.mxu0 0.0
    %1928 = vmatprep.mubr.f32.mxu0 0.0
    %1929 = vmatmul.mubr.f32.gmra.mrb[0].mxu0 %v1853
    %v1930 = vpop.f32.mrb[0].mxu0
    %v1931 = vadd.f32 %v1851, %v1930
    %v1932 = vpop.f32.mrb[0].mxu0
    %1933 = vmatprep.mubr.f32.mxu0 0.0
    %1934 = vmatmul.mubr.f32.gmra.mrb[0].mxu0 %v1856
    %v1935 = vpop.f32.mrb[0].mxu0
    %v1936 = vadd.f32 %v1851, %v1935
    %v1937 = vpop.f32.mrb[0].mxu0
    %1938 = vmatprep.mubr.f32.mxu0 0.0
    %1939 = vmatmul.mubr.f32.gmra.mrb[0].mxu0 %v1859
    %v1940 = vpop.f32.mrb[0].mxu0
    %v1941 = vadd.f32 %v1851, %v1940
    %v1942 = vpop.f32.mrb[0].mxu0
    %1943 = vmatprep.mubr.f32.mxu0 0.0
    %1944 = vmatmul.mubr.f32.gmra.mrb[0].mxu0 %v1862
    %v1945 = vpop.f32.mrb[0].mxu0
    %v1946 = vadd.f32 %v1851, %v1945
    %v1947 = vpop.f32.mrb[0].mxu0
    %1948 = vdwg.mxu0
    %1953 = vrot.lane.b32.xlu0 %v1931, 112
    %v1954 = vpop.permute.xlu0 %1953
    %1955 = vrot.lane.b32.xlu0 %v1936, 112
    %v1956 = vpop.permute.xlu0 %1955
    %1957 = vrot.lane.b32.xlu0 %v1941, 112
    %v1958 = vpop.permute.xlu0 %1957
    %1959 = vrot.lane.b32.xlu0 %v1946, 112
    %v1960 = vpop.permute.xlu0 %1959
    %1961 = vrot.lane.b32.xlu0 %v1931, 96
    %v1962 = vpop.permute.xlu0 %1961
    %1963 = vrot.lane.b32.xlu0 %v1936, 96
    %v1964 = vpop.permute.xlu0 %1963
    %v1965 = vsel %vm571, %v1931, 0
    %v1967 = vsel %vm571, %v1936, 0
    %v1969 = vsel %vm571, %v1962, 0
    %v1971 = vsel %vm571, %v1964, 0
    %1973 = vmatprep.subr.mxu0 0.0
    %1974 = vmatpush1.xpose.msra.mxu0 %v1969
    %1975 = vmatprep.subr.mxu0 0.0
    %1976 = vmatpush1.xpose.msra.mxu0 %v1971
    %1977 = vmatprep.subr.mxu0 0.0
    %1978 = vmatpush1.xpose.msra.mxu0 0.0
    %1979 = vmatprep.subr.mxu0 0.0
    %1980 = vmatpush1.xpose.msra.mxu0 0.0
    %1981 = vmatprep.subr.mxu0 0.0
    %1982 = vmatpush1.xpose.msra.mxu0 0.0
    %1983 = vmatprep.subr.mxu0 0.0
    %1984 = vmatpush1.xpose.msra.mxu0 0.0
    %1985 = vmatprep.subr.mxu0 0.0
    %1986 = vmatpush1.xpose.msra.mxu0 0.0
    %1987 = vmatprep.subr.mxu0 0.0
    %1988 = vmatpush1.xpose.msra.mxu0 0.0
    %1989 = vmatprep.subr.mxu0 0.0
    %1990 = vmatpush1.xpose.msra.mxu0 0.0
    %1991 = vmatprep.subr.mxu0 0.0
    %1992 = vmatpush1.xpose.msra.mxu0 0.0
    %1993 = vmatprep.subr.mxu0 0.0
    %1994 = vmatpush1.xpose.msra.mxu0 0.0
    %1995 = vmatprep.subr.mxu0 0.0
    %1996 = vmatpush1.xpose.msra.mxu0 0.0
    %1997 = vmatprep.subr.mxu0 0.0
    %1998 = vmatpush1.xpose.msra.mxu0 0.0
    %1999 = vmatprep.subr.mxu0 0.0
    %2000 = vmatpush1.xpose.msra.mxu0 0.0
    %2001 = vmatprep.subr.mxu0 0.0
    %2002 = vmatpush1.xpose.msra.mxu0 0.0
    %2003 = vmatprep.subr.mxu0 0.0
    %2004 = vmatpush1.xpose.msra.mxu0 0.0
    %2005 = vmatprep.subr.mxu0 0.0
    %2006 = vmatpush1.xpose.msra.mxu0 0.0
    %2007 = vmatprep.subr.mxu0 0.0
    %2008 = vmatpush1.xpose.msra.mxu0 0.0
    %2009 = vmatprep.subr.mxu0 0.0
    %2010 = vmatpush1.xpose.msra.mxu0 0.0
    %2011 = vmatprep.subr.mxu0 0.0
    %2012 = vmatpush1.xpose.msra.mxu0 0.0
    %2013 = vmatprep.subr.mxu0 0.0
    %2014 = vmatpush1.xpose.msra.mxu0 0.0
    %2015 = vmatprep.subr.mxu0 0.0
    %2016 = vmatpush1.xpose.msra.mxu0 0.0
    %2017 = vmatprep.subr.mxu0 0.0
    %2018 = vmatpush1.xpose.msra.mxu0 0.0
    %2019 = vmatprep.subr.mxu0 0.0
    %2020 = vmatpush1.xpose.msra.mxu0 0.0
    %2021 = vmatprep.subr.mxu0 0.0
    %2022 = vmatpush1.xpose.msra.mxu0 0.0
    %2023 = vmatprep.subr.mxu0 0.0
    %2024 = vmatpush1.xpose.msra.mxu0 0.0
    %2025 = vmatprep.subr.mxu0 0.0
    %2026 = vmatpush1.xpose.msra.mxu0 0.0
    %2027 = vmatprep.subr.mxu0 0.0
    %2028 = vmatpush1.xpose.msra.mxu0 0.0
    %2029 = vmatprep.subr.mxu0 0.0
    %2030 = vmatpush1.xpose.msra.mxu0 0.0
    %2031 = vmatprep.subr.mxu0 0.0
    %2032 = vmatpush1.xpose.msra.mxu0 0.0
    %2033 = vmatprep.subr.mxu0 0.0
    %2034 = vmatpush1.xpose.msra.mxu0 0.0
    %2035 = vmatprep.subr.mxu0 0.0
    %2036 = vmatpush1.xpose.msra.mxu0 0.0
    %2037 = vmatprep.mubr.f32.mxu0 0.0
    %2038 = vmatmul.mubr.f32.gmra.mrb[0].mxu0 %v1965
    %v2039 = vpop.f32.mrb[0].mxu0
    %v2040 = vadd.f32 0.0, %v2039
    %v2041 = vpop.f32.mrb[0].mxu0
    %2042 = vmatprep.mubr.f32.mxu0 0.0
    %2043 = vmatmul.mubr.f32.gmra.mrb[0].mxu0 %v1967
    %v2044 = vpop.f32.mrb[0].mxu0
    %v2045 = vadd.f32 0.0, %v2044
    %v2046 = vpop.f32.mrb[0].mxu0
    %2047 = vdwg.mxu0
    %2048 = vrot.lane.b32.xlu0 %v1941, 96
    %v2049 = vpop.permute.xlu0 %2048
    %2050 = vrot.lane.b32.xlu0 %v1946, 96
    %v2051 = vpop.permute.xlu0 %2050
    %v2052 = vsel %vm571, %v1941, 0
    %v2054 = vsel %vm571, %v1946, 0
    %v2056 = vsel %vm571, %v2049, 0
    %v2058 = vsel %vm571, %v2051, 0
    %2060 = vmatprep.subr.mxu0 0.0
    %2061 = vmatpush1.xpose.msra.mxu0 %v2056
    %2062 = vmatprep.subr.mxu0 0.0
    %2063 = vmatpush1.xpose.msra.mxu0 %v2058
    %2064 = vmatprep.subr.mxu0 0.0
    %2065 = vmatpush1.xpose.msra.mxu0 0.0
    %2066 = vmatprep.subr.mxu0 0.0
    %2067 = vmatpush1.xpose.msra.mxu0 0.0
    %2068 = vmatprep.subr.mxu0 0.0
    %2069 = vmatpush1.xpose.msra.mxu0 0.0
    %2070 = vmatprep.subr.mxu0 0.0
    %2071 = vmatpush1.xpose.msra.mxu0 0.0
    %2072 = vmatprep.subr.mxu0 0.0
    %2073 = vmatpush1.xpose.msra.mxu0 0.0
    %2074 = vmatprep.subr.mxu0 0.0
    %2075 = vmatpush1.xpose.msra.mxu0 0.0
    %2076 = vmatprep.subr.mxu0 0.0
    %2077 = vmatpush1.xpose.msra.mxu0 0.0
    %2078 = vmatprep.subr.mxu0 0.0
    %2079 = vmatpush1.xpose.msra.mxu0 0.0
    %2080 = vmatprep.subr.mxu0 0.0
    %2081 = vmatpush1.xpose.msra.mxu0 0.0
    %2082 = vmatprep.subr.mxu0 0.0
    %2083 = vmatpush1.xpose.msra.mxu0 0.0
    %2084 = vmatprep.subr.mxu0 0.0
    %2085 = vmatpush1.xpose.msra.mxu0 0.0
    %2086 = vmatprep.subr.mxu0 0.0
    %2087 = vmatpush1.xpose.msra.mxu0 0.0
    %2088 = vmatprep.subr.mxu0 0.0
    %2089 = vmatpush1.xpose.msra.mxu0 0.0
    %2090 = vmatprep.subr.mxu0 0.0
    %2091 = vmatpush1.xpose.msra.mxu0 0.0
    %2092 = vmatprep.subr.mxu0 0.0
    %2093 = vmatpush1.xpose.msra.mxu0 0.0
    %2094 = vmatprep.subr.mxu0 0.0
    %2095 = vmatpush1.xpose.msra.mxu0 0.0
    %2096 = vmatprep.subr.mxu0 0.0
    %2097 = vmatpush1.xpose.msra.mxu0 0.0
    %2098 = vmatprep.subr.mxu0 0.0
    %2099 = vmatpush1.xpose.msra.mxu0 0.0
    %2100 = vmatprep.subr.mxu0 0.0
    %2101 = vmatpush1.xpose.msra.mxu0 0.0
    %2102 = vmatprep.subr.mxu0 0.0
    %2103 = vmatpush1.xpose.msra.mxu0 0.0
    %2104 = vmatprep.subr.mxu0 0.0
    %2105 = vmatpush1.xpose.msra.mxu0 0.0
    %2106 = vmatprep.subr.mxu0 0.0
    %2107 = vmatpush1.xpose.msra.mxu0 0.0
    %2108 = vmatprep.subr.mxu0 0.0
    %2109 = vmatpush1.xpose.msra.mxu0 0.0
    %2110 = vmatprep.subr.mxu0 0.0
    %2111 = vmatpush1.xpose.msra.mxu0 0.0
    %2112 = vmatprep.subr.mxu0 0.0
    %2113 = vmatpush1.xpose.msra.mxu0 0.0
    %2114 = vmatprep.subr.mxu0 0.0
    %2115 = vmatpush1.xpose.msra.mxu0 0.0
    %2116 = vmatprep.subr.mxu0 0.0
    %2117 = vmatpush1.xpose.msra.mxu0 0.0
    %2118 = vmatprep.subr.mxu0 0.0
    %2119 = vmatpush1.xpose.msra.mxu0 0.0
    %2120 = vmatprep.subr.mxu0 0.0
    %2121 = vmatpush1.xpose.msra.mxu0 0.0
    %2122 = vmatprep.subr.mxu0 0.0
    %2123 = vmatpush1.xpose.msra.mxu0 0.0
    %2124 = vmatprep.mubr.f32.mxu0 0.0
    %2125 = vmatmul.mubr.f32.gmra.mrb[0].mxu0 %v2052
    %v2126 = vpop.f32.mrb[0].mxu0
    %v2127 = vadd.f32 0.0, %v2126
    %v2128 = vpop.f32.mrb[0].mxu0
    %2129 = vmatprep.mubr.f32.mxu0 0.0
    %2130 = vmatmul.mubr.f32.gmra.mrb[0].mxu0 %v2054
    %v2131 = vpop.f32.mrb[0].mxu0
    %v2132 = vadd.f32 0.0, %v2131
    %v2133 = vpop.f32.mrb[0].mxu0
    %2134 = vdwg.mxu0
    %2135 = vrot.lane.b32.xlu0 %v1954, 96
    %v2136 = vpop.permute.xlu0 %2135
    %2137 = vrot.lane.b32.xlu0 %v1956, 96
    %v2138 = vpop.permute.xlu0 %2137
    %v2139 = vsel %vm571, %v1954, 0
    %v2141 = vsel %vm571, %v1956, 0
    %v2143 = vsel %vm571, %v2136, 0
    %v2145 = vsel %vm571, %v2138, 0
    %2147 = vmatprep.subr.mxu0 0.0
    %2148 = vmatpush1.xpose.msra.mxu0 %v2143
    %2149 = vmatprep.subr.mxu0 0.0
    %2150 = vmatpush1.xpose.msra.mxu0 %v2145
    %2151 = vmatprep.subr.mxu0 0.0
    %2152 = vmatpush1.xpose.msra.mxu0 0.0
    %2153 = vmatprep.subr.mxu0 0.0
    %2154 = vmatpush1.xpose.msra.mxu0 0.0
    %2155 = vmatprep.subr.mxu0 0.0
    %2156 = vmatpush1.xpose.msra.mxu0 0.0
    %2157 = vmatprep.subr.mxu0 0.0
    %2158 = vmatpush1.xpose.msra.mxu0 0.0
    %2159 = vmatprep.subr.mxu0 0.0
    %2160 = vmatpush1.xpose.msra.mxu0 0.0
    %2161 = vmatprep.subr.mxu0 0.0
    %2162 = vmatpush1.xpose.msra.mxu0 0.0
    %2163 = vmatprep.subr.mxu0 0.0
    %2164 = vmatpush1.xpose.msra.mxu0 0.0
    %2165 = vmatprep.subr.mxu0 0.0
    %2166 = vmatpush1.xpose.msra.mxu0 0.0
    %2167 = vmatprep.subr.mxu0 0.0
    %2168 = vmatpush1.xpose.msra.mxu0 0.0
    %2169 = vmatprep.subr.mxu0 0.0
    %2170 = vmatpush1.xpose.msra.mxu0 0.0
    %2171 = vmatprep.subr.mxu0 0.0
    %2172 = vmatpush1.xpose.msra.mxu0 0.0
    %2173 = vmatprep.subr.mxu0 0.0
    %2174 = vmatpush1.xpose.msra.mxu0 0.0
    %2175 = vmatprep.subr.mxu0 0.0
    %2176 = vmatpush1.xpose.msra.mxu0 0.0
    %2177 = vmatprep.subr.mxu0 0.0
    %2178 = vmatpush1.xpose.msra.mxu0 0.0
    %2179 = vmatprep.subr.mxu0 0.0
    %2180 = vmatpush1.xpose.msra.mxu0 0.0
    %2181 = vmatprep.subr.mxu0 0.0
    %2182 = vmatpush1.xpose.msra.mxu0 0.0
    %2183 = vmatprep.subr.mxu0 0.0
    %2184 = vmatpush1.xpose.msra.mxu0 0.0
    %2185 = vmatprep.subr.mxu0 0.0
    %2186 = vmatpush1.xpose.msra.mxu0 0.0
    %2187 = vmatprep.subr.mxu0 0.0
    %2188 = vmatpush1.xpose.msra.mxu0 0.0
    %2189 = vmatprep.subr.mxu0 0.0
    %2190 = vmatpush1.xpose.msra.mxu0 0.0
    %2191 = vmatprep.subr.mxu0 0.0
    %2192 = vmatpush1.xpose.msra.mxu0 0.0
    %2193 = vmatprep.subr.mxu0 0.0
    %2194 = vmatpush1.xpose.msra.mxu0 0.0
    %2195 = vmatprep.subr.mxu0 0.0
    %2196 = vmatpush1.xpose.msra.mxu0 0.0
    %2197 = vmatprep.subr.mxu0 0.0
    %2198 = vmatpush1.xpose.msra.mxu0 0.0
    %2199 = vmatprep.subr.mxu0 0.0
    %2200 = vmatpush1.xpose.msra.mxu0 0.0
    %2201 = vmatprep.subr.mxu0 0.0
    %2202 = vmatpush1.xpose.msra.mxu0 0.0
    %2203 = vmatprep.subr.mxu0 0.0
    %2204 = vmatpush1.xpose.msra.mxu0 0.0
    %2205 = vmatprep.subr.mxu0 0.0
    %2206 = vmatpush1.xpose.msra.mxu0 0.0
    %2207 = vmatprep.subr.mxu0 0.0
    %2208 = vmatpush1.xpose.msra.mxu0 0.0
    %2209 = vmatprep.subr.mxu0 0.0
    %2210 = vmatpush1.xpose.msra.mxu0 0.0
    %2211 = vmatprep.mubr.f32.mxu0 0.0
    %2212 = vmatmul.mubr.f32.gmra.mrb[0].mxu0 %v2139
    %v2213 = vpop.f32.mrb[0].mxu0
    %v2214 = vadd.f32 0.0, %v2213
    %v2215 = vpop.f32.mrb[0].mxu0
    %2216 = vmatprep.mubr.f32.mxu0 0.0
    %2217 = vmatmul.mubr.f32.gmra.mrb[0].mxu0 %v2141
    %v2218 = vpop.f32.mrb[0].mxu0
    %v2219 = vadd.f32 0.0, %v2218
    %v2220 = vpop.f32.mrb[0].mxu0
    %2221 = vdwg.mxu0
    %2222 = vrot.lane.b32.xlu0 %v1958, 96
    %v2223 = vpop.permute.xlu0 %2222
    %2224 = vrot.lane.b32.xlu0 %v1960, 96
    %v2225 = vpop.permute.xlu0 %2224
    %v2226 = vsel %vm571, %v1958, 0
    %v2228 = vsel %vm571, %v1960, 0
    %v2230 = vsel %vm571, %v2223, 0
    %v2232 = vsel %vm571, %v2225, 0
    %2234 = vmatprep.subr.mxu0 0.0
    %2235 = vmatpush1.xpose.msra.mxu0 %v2230
    %2236 = vmatprep.subr.mxu0 0.0
    %2237 = vmatpush1.xpose.msra.mxu0 %v2232
    %2238 = vmatprep.subr.mxu0 0.0
    %2239 = vmatpush1.xpose.msra.mxu0 0.0
    %2240 = vmatprep.subr.mxu0 0.0
    %2241 = vmatpush1.xpose.msra.mxu0 0.0
    %2242 = vmatprep.subr.mxu0 0.0
    %2243 = vmatpush1.xpose.msra.mxu0 0.0
    %2244 = vmatprep.subr.mxu0 0.0
    %2245 = vmatpush1.xpose.msra.mxu0 0.0
    %2246 = vmatprep.subr.mxu0 0.0
    %2247 = vmatpush1.xpose.msra.mxu0 0.0
    %2248 = vmatprep.subr.mxu0 0.0
    %2249 = vmatpush1.xpose.msra.mxu0 0.0
    %2250 = vmatprep.subr.mxu0 0.0
    %2251 = vmatpush1.xpose.msra.mxu0 0.0
    %2252 = vmatprep.subr.mxu0 0.0
    %2253 = vmatpush1.xpose.msra.mxu0 0.0
    %2254 = vmatprep.subr.mxu0 0.0
    %2255 = vmatpush1.xpose.msra.mxu0 0.0
    %2256 = vmatprep.subr.mxu0 0.0
    %2257 = vmatpush1.xpose.msra.mxu0 0.0
    %2258 = vmatprep.subr.mxu0 0.0
    %2259 = vmatpush1.xpose.msra.mxu0 0.0
    %2260 = vmatprep.subr.mxu0 0.0
    %2261 = vmatpush1.xpose.msra.mxu0 0.0
    %2262 = vmatprep.subr.mxu0 0.0
    %2263 = vmatpush1.xpose.msra.mxu0 0.0
    %2264 = vmatprep.subr.mxu0 0.0
    %2265 = vmatpush1.xpose.msra.mxu0 0.0
    %2266 = vmatprep.subr.mxu0 0.0
    %2267 = vmatpush1.xpose.msra.mxu0 0.0
    %2268 = vmatprep.subr.mxu0 0.0
    %2269 = vmatpush1.xpose.msra.mxu0 0.0
    %2270 = vmatprep.subr.mxu0 0.0
    %2271 = vmatpush1.xpose.msra.mxu0 0.0
    %2272 = vmatprep.subr.mxu0 0.0
    %2273 = vmatpush1.xpose.msra.mxu0 0.0
    %2274 = vmatprep.subr.mxu0 0.0
    %2275 = vmatpush1.xpose.msra.mxu0 0.0
    %2276 = vmatprep.subr.mxu0 0.0
    %2277 = vmatpush1.xpose.msra.mxu0 0.0
    %2278 = vmatprep.subr.mxu0 0.0
    %2279 = vmatpush1.xpose.msra.mxu0 0.0
    %2280 = vmatprep.subr.mxu0 0.0
    %2281 = vmatpush1.xpose.msra.mxu0 0.0
    %2282 = vmatprep.subr.mxu0 0.0
    %2283 = vmatpush1.xpose.msra.mxu0 0.0
    %2284 = vmatprep.subr.mxu0 0.0
    %2285 = vmatpush1.xpose.msra.mxu0 0.0
    %2286 = vmatprep.subr.mxu0 0.0
    %2287 = vmatpush1.xpose.msra.mxu0 0.0
    %2288 = vmatprep.subr.mxu0 0.0
    %2289 = vmatpush1.xpose.msra.mxu0 0.0
    %2290 = vmatprep.subr.mxu0 0.0
    %2291 = vmatpush1.xpose.msra.mxu0 0.0
    %2292 = vmatprep.subr.mxu0 0.0
    %2293 = vmatpush1.xpose.msra.mxu0 0.0
    %2294 = vmatprep.subr.mxu0 0.0
    %2295 = vmatpush1.xpose.msra.mxu0 0.0
    %2296 = vmatprep.subr.mxu0 0.0
    %2297 = vmatpush1.xpose.msra.mxu0 0.0
    %2298 = vmatprep.mubr.f32.mxu0 0.0
    %2299 = vmatmul.mubr.f32.gmra.mrb[0].mxu0 %v2226
    %v2300 = vpop.f32.mrb[0].mxu0
    %v2301 = vadd.f32 0.0, %v2300
    %v2302 = vpop.f32.mrb[0].mxu0
    %2303 = vmatprep.mubr.f32.mxu0 0.0
    %2304 = vmatmul.mubr.f32.gmra.mrb[0].mxu0 %v2228
    %v2305 = vpop.f32.mrb[0].mxu0
    %v2306 = vadd.f32 0.0, %v2305
    %v2307 = vpop.f32.mrb[0].mxu0
    %2308 = vdwg.mxu0
    %v2309 = vsel %vm571, %v2040, -inf
    %2310 = vmax.xlane.f32.xlu0 %v2309
    %v2311 = vpop.xlane.xlu0 %2310
    %v2312 = vsel %vm571, %v2045, -inf
    %2313 = vmax.xlane.f32.xlu0 %v2312
    %v2314 = vpop.xlane.xlu0 %2313
    %v2315 = vsel %vm571, %v2127, -inf
    %2316 = vmax.xlane.f32.xlu0 %v2315
    %v2317 = vpop.xlane.xlu0 %2316
    %v2318 = vsel %vm571, %v2132, -inf
    %2319 = vmax.xlane.f32.xlu0 %v2318
    %v2320 = vpop.xlane.xlu0 %2319
    %v2321 = vsel %vm571, %v2214, -inf
    %2322 = vmax.xlane.f32.xlu0 %v2321
    %v2323 = vpop.xlane.xlu0 %2322
    %v2324 = vsel %vm571, %v2219, -inf
    %2325 = vmax.xlane.f32.xlu0 %v2324
    %v2326 = vpop.xlane.xlu0 %2325
    %v2327 = vsel %vm571, %v2301, -inf
    %2328 = vmax.xlane.f32.xlu0 %v2327
    %v2329 = vpop.xlane.xlu0 %2328
    %v2330 = vsel %vm571, %v2306, -inf
    %2331 = vmax.xlane.f32.xlu0 %v2330
    %v2332 = vpop.xlane.xlu0 %2331
    %v2333 = vsub.f32 %v2040, %v2311
    %v2334 = vsub.f32 %v2045, %v2314
    %v2335 = vsub.f32 %v2127, %v2317
    %v2336 = vsub.f32 %v2132, %v2320
    %v2337 = vsub.f32 %v2214, %v2323
    %v2338 = vsub.f32 %v2219, %v2326
    %v2339 = vsub.f32 %v2301, %v2329
    %v2340 = vsub.f32 %v2306, %v2332
    %v2341 = vmul.f32 %v2333, 1.442695
    %v2342 = vpow.pop %v2341
    %v2343 = vmul.f32 %v2334, 1.442695
    %v2344 = vpow.pop %v2343
    %v2345 = vmul.f32 %v2335, 1.442695
    %v2346 = vpow.pop %v2345
    %v2347 = vmul.f32 %v2336, 1.442695
    %v2348 = vpow.pop %v2347
    %v2349 = vmul.f32 %v2337, 1.442695
    %v2350 = vpow.pop %v2349
    %v2351 = vmul.f32 %v2338, 1.442695
    %v2352 = vpow.pop %v2351
    %v2353 = vmul.f32 %v2339, 1.442695
    %v2354 = vpow.pop %v2353
    %v2355 = vmul.f32 %v2340, 1.442695
    %v2356 = vpow.pop %v2355
    %v2357 = vsel %vm571, %v2342, 0.0
    %2358 = vadd.xlane.f32.xlu0 %v2357
    %v2359 = vpop.xlane.xlu0 %2358
    %v2360 = vsel %vm571, %v2344, 0.0
    %2361 = vadd.xlane.f32.xlu0 %v2360
    %v2362 = vpop.xlane.xlu0 %2361
    %v2363 = vsel %vm571, %v2346, 0.0
    %2364 = vadd.xlane.f32.xlu0 %v2363
    %v2365 = vpop.xlane.xlu0 %2364
    %v2366 = vsel %vm571, %v2348, 0.0
    %2367 = vadd.xlane.f32.xlu0 %v2366
    %v2368 = vpop.xlane.xlu0 %2367
    %v2369 = vsel %vm571, %v2350, 0.0
    %2370 = vadd.xlane.f32.xlu0 %v2369
    %v2371 = vpop.xlane.xlu0 %2370
    %v2372 = vsel %vm571, %v2352, 0.0
    %2373 = vadd.xlane.f32.xlu0 %v2372
    %v2374 = vpop.xlane.xlu0 %2373
    %v2375 = vsel %vm571, %v2354, 0.0
    %2376 = vadd.xlane.f32.xlu0 %v2375
    %v2377 = vpop.xlane.xlu0 %2376
    %v2378 = vsel %vm571, %v2356, 0.0
    %2379 = vadd.xlane.f32.xlu0 %v2378
    %v2380 = vpop.xlane.xlu0 %2379
    %v2381 = vrcp.pop %v2359
    %v2382 = vrcp.pop %v2362
    %v2383 = vrcp.pop %v2365
    %v2384 = vrcp.pop %v2368
    %v2385 = vrcp.pop %v2371
    %v2386 = vrcp.pop %v2374
    %v2387 = vrcp.pop %v2377
    %v2388 = vrcp.pop %v2380
    %v2389 = vmul.f32 %v2342, %v2381
    %v2390 = vmul.f32 %v2344, %v2382
    %v2391 = vmul.f32 %v2346, %v2383
    %v2392 = vmul.f32 %v2348, %v2384
    %v2393 = vmul.f32 %v2350, %v2385
    %v2394 = vmul.f32 %v2352, %v2386
    %v2395 = vmul.f32 %v2354, %v2387
    %v2396 = vmul.f32 %v2356, %v2388
    %2397 = vrot.lane.b32.xlu0 %v1931, 64
    %v2398 = vpop.permute.xlu0 %2397
    %2399 = vrot.lane.b32.xlu0 %v1936, 64
    %v2400 = vpop.permute.xlu0 %2399
    %v2404 = vsel %vm571, %v2389, 0
    %v2407 = vsel %vm571, %v2390, 0
    %2409 = vmatprep.subr.mxu0 0.0
    %2410 = vmatpush1.msra.mxu0 %v2398
    %2411 = vmatprep.subr.mxu0 0.0
    %2412 = vmatpush1.msra.mxu0 %v2400
    %2413 = vmatprep.subr.mxu0 0.0
    %2414 = vmatpush1.msra.mxu0 0.0
    %2415 = vmatprep.subr.mxu0 0.0
    %2416 = vmatpush1.msra.mxu0 0.0
    %2417 = vmatprep.subr.mxu0 0.0
    %2418 = vmatpush1.msra.mxu0 0.0
    %2419 = vmatprep.subr.mxu0 0.0
    %2420 = vmatpush1.msra.mxu0 0.0
    %2421 = vmatprep.subr.mxu0 0.0
    %2422 = vmatpush1.msra.mxu0 0.0
    %2423 = vmatprep.subr.mxu0 0.0
    %2424 = vmatpush1.msra.mxu0 0.0
    %2425 = vmatprep.subr.mxu0 0.0
    %2426 = vmatpush1.msra.mxu0 0.0
    %2427 = vmatprep.subr.mxu0 0.0
    %2428 = vmatpush1.msra.mxu0 0.0
    %2429 = vmatprep.subr.mxu0 0.0
    %2430 = vmatpush1.msra.mxu0 0.0
    %2431 = vmatprep.subr.mxu0 0.0
    %2432 = vmatpush1.msra.mxu0 0.0
    %2433 = vmatprep.subr.mxu0 0.0
    %2434 = vmatpush1.msra.mxu0 0.0
    %2435 = vmatprep.subr.mxu0 0.0
    %2436 = vmatpush1.msra.mxu0 0.0
    %2437 = vmatprep.subr.mxu0 0.0
    %2438 = vmatpush1.msra.mxu0 0.0
    %2439 = vmatprep.subr.mxu0 0.0
    %2440 = vmatpush1.msra.mxu0 0.0
    %2441 = vmatprep.subr.mxu0 0.0
    %2442 = vmatpush1.msra.mxu0 0.0
    %2443 = vmatprep.subr.mxu0 0.0
    %2444 = vmatpush1.msra.mxu0 0.0
    %2445 = vmatprep.subr.mxu0 0.0
    %2446 = vmatpush1.msra.mxu0 0.0
    %2447 = vmatprep.subr.mxu0 0.0
    %2448 = vmatpush1.msra.mxu0 0.0
    %2449 = vmatprep.subr.mxu0 0.0
    %2450 = vmatpush1.msra.mxu0 0.0
    %2451 = vmatprep.subr.mxu0 0.0
    %2452 = vmatpush1.msra.mxu0 0.0
    %2453 = vmatprep.subr.mxu0 0.0
    %2454 = vmatpush1.msra.mxu0 0.0
    %2455 = vmatprep.subr.mxu0 0.0
    %2456 = vmatpush1.msra.mxu0 0.0
    %2457 = vmatprep.subr.mxu0 0.0
    %2458 = vmatpush1.msra.mxu0 0.0
    %2459 = vmatprep.subr.mxu0 0.0
    %2460 = vmatpush1.msra.mxu0 0.0
    %2461 = vmatprep.subr.mxu0 0.0
    %2462 = vmatpush1.msra.mxu0 0.0
    %2463 = vmatprep.subr.mxu0 0.0
    %2464 = vmatpush1.msra.mxu0 0.0
    %2465 = vmatprep.subr.mxu0 0.0
    %2466 = vmatpush1.msra.mxu0 0.0
    %2467 = vmatprep.subr.mxu0 0.0
    %2468 = vmatpush1.msra.mxu0 0.0
    %2469 = vmatprep.subr.mxu0 0.0
    %2470 = vmatpush1.msra.mxu0 0.0
    %2471 = vmatprep.subr.mxu0 0.0
    %2472 = vmatpush1.msra.mxu0 0.0
    %2473 = vmatprep.mubr.f32.mxu0 0.0
    %2474 = vmatmul.mubr.f32.gmra.mrb[0].mxu0 %v2404
    %v2475 = vpop.f32.mrb[0].mxu0
    %v2476 = vadd.f32 0.0, %v2475
    %v2477 = vpop.f32.mrb[0].mxu0
    %2478 = vmatprep.mubr.f32.mxu0 0.0
    %2479 = vmatmul.mubr.f32.gmra.mrb[0].mxu0 %v2407
    %v2480 = vpop.f32.mrb[0].mxu0
    %v2481 = vadd.f32 0.0, %v2480
    %v2482 = vpop.f32.mrb[0].mxu0
    %2483 = vdwg.mxu0
    %2484 = vrot.lane.b32.xlu0 %v1941, 64
    %v2485 = vpop.permute.xlu0 %2484
    %2486 = vrot.lane.b32.xlu0 %v1946, 64
    %v2487 = vpop.permute.xlu0 %2486
    %v2491 = vsel %vm571, %v2391, 0
    %v2494 = vsel %vm571, %v2392, 0
    %2496 = vmatprep.subr.mxu0 0.0
    %2497 = vmatpush1.msra.mxu0 %v2485
    %2498 = vmatprep.subr.mxu0 0.0
    %2499 = vmatpush1.msra.mxu0 %v2487
    %2500 = vmatprep.subr.mxu0 0.0
    %2501 = vmatpush1.msra.mxu0 0.0
    %2502 = vmatprep.subr.mxu0 0.0
    %2503 = vmatpush1.msra.mxu0 0.0
    %2504 = vmatprep.subr.mxu0 0.0
    %2505 = vmatpush1.msra.mxu0 0.0
    %2506 = vmatprep.subr.mxu0 0.0
    %2507 = vmatpush1.msra.mxu0 0.0
    %2508 = vmatprep.subr.mxu0 0.0
    %2509 = vmatpush1.msra.mxu0 0.0
    %2510 = vmatprep.subr.mxu0 0.0
    %2511 = vmatpush1.msra.mxu0 0.0
    %2512 = vmatprep.subr.mxu0 0.0
    %2513 = vmatpush1.msra.mxu0 0.0
    %2514 = vmatprep.subr.mxu0 0.0
    %2515 = vmatpush1.msra.mxu0 0.0
    %2516 = vmatprep.subr.mxu0 0.0
    %2517 = vmatpush1.msra.mxu0 0.0
    %2518 = vmatprep.subr.mxu0 0.0
    %2519 = vmatpush1.msra.mxu0 0.0
    %2520 = vmatprep.subr.mxu0 0.0
    %2521 = vmatpush1.msra.mxu0 0.0
    %2522 = vmatprep.subr.mxu0 0.0
    %2523 = vmatpush1.msra.mxu0 0.0
    %2524 = vmatprep.subr.mxu0 0.0
    %2525 = vmatpush1.msra.mxu0 0.0
    %2526 = vmatprep.subr.mxu0 0.0
    %2527 = vmatpush1.msra.mxu0 0.0
    %2528 = vmatprep.subr.mxu0 0.0
    %2529 = vmatpush1.msra.mxu0 0.0
    %2530 = vmatprep.subr.mxu0 0.0
    %2531 = vmatpush1.msra.mxu0 0.0
    %2532 = vmatprep.subr.mxu0 0.0
    %2533 = vmatpush1.msra.mxu0 0.0
    %2534 = vmatprep.subr.mxu0 0.0
    %2535 = vmatpush1.msra.mxu0 0.0
    %2536 = vmatprep.subr.mxu0 0.0
    %2537 = vmatpush1.msra.mxu0 0.0
    %2538 = vmatprep.subr.mxu0 0.0
    %2539 = vmatpush1.msra.mxu0 0.0
    %2540 = vmatprep.subr.mxu0 0.0
    %2541 = vmatpush1.msra.mxu0 0.0
    %2542 = vmatprep.subr.mxu0 0.0
    %2543 = vmatpush1.msra.mxu0 0.0
    %2544 = vmatprep.subr.mxu0 0.0
    %2545 = vmatpush1.msra.mxu0 0.0
    %2546 = vmatprep.subr.mxu0 0.0
    %2547 = vmatpush1.msra.mxu0 0.0
    %2548 = vmatprep.subr.mxu0 0.0
    %2549 = vmatpush1.msra.mxu0 0.0
    %2550 = vmatprep.subr.mxu0 0.0
    %2551 = vmatpush1.msra.mxu0 0.0
    %2552 = vmatprep.subr.mxu0 0.0
    %2553 = vmatpush1.msra.mxu0 0.0
    %2554 = vmatprep.subr.mxu0 0.0
    %2555 = vmatpush1.msra.mxu0 0.0
    %2556 = vmatprep.subr.mxu0 0.0
    %2557 = vmatpush1.msra.mxu0 0.0
    %2558 = vmatprep.subr.mxu0 0.0
    %2559 = vmatpush1.msra.mxu0 0.0
    %2560 = vmatprep.mubr.f32.mxu0 0.0
    %2561 = vmatmul.mubr.f32.gmra.mrb[0].mxu0 %v2491
    %v2562 = vpop.f32.mrb[0].mxu0
    %v2563 = vadd.f32 0.0, %v2562
    %v2564 = vpop.f32.mrb[0].mxu0
    %2565 = vmatprep.mubr.f32.mxu0 0.0
    %2566 = vmatmul.mubr.f32.gmra.mrb[0].mxu0 %v2494
    %v2567 = vpop.f32.mrb[0].mxu0
    %v2568 = vadd.f32 0.0, %v2567
    %v2569 = vpop.f32.mrb[0].mxu0
    %2570 = vdwg.mxu0
    %2571 = vrot.lane.b32.xlu0 %v1954, 64
    %v2572 = vpop.permute.xlu0 %2571
    %2573 = vrot.lane.b32.xlu0 %v1956, 64
    %v2574 = vpop.permute.xlu0 %2573
    %v2578 = vsel %vm571, %v2393, 0
    %v2581 = vsel %vm571, %v2394, 0
    %2583 = vmatprep.subr.mxu0 0.0
    %2584 = vmatpush1.msra.mxu0 %v2572
    %2585 = vmatprep.subr.mxu0 0.0
    %2586 = vmatpush1.msra.mxu0 %v2574
    %2587 = vmatprep.subr.mxu0 0.0
    %2588 = vmatpush1.msra.mxu0 0.0
    %2589 = vmatprep.subr.mxu0 0.0
    %2590 = vmatpush1.msra.mxu0 0.0
    %2591 = vmatprep.subr.mxu0 0.0
    %2592 = vmatpush1.msra.mxu0 0.0
    %2593 = vmatprep.subr.mxu0 0.0
    %2594 = vmatpush1.msra.mxu0 0.0
    %2595 = vmatprep.subr.mxu0 0.0
    %2596 = vmatpush1.msra.mxu0 0.0
    %2597 = vmatprep.subr.mxu0 0.0
    %2598 = vmatpush1.msra.mxu0 0.0
    %2599 = vmatprep.subr.mxu0 0.0
    %2600 = vmatpush1.msra.mxu0 0.0
    %2601 = vmatprep.subr.mxu0 0.0
    %2602 = vmatpush1.msra.mxu0 0.0
    %2603 = vmatprep.subr.mxu0 0.0
    %2604 = vmatpush1.msra.mxu0 0.0
    %2605 = vmatprep.subr.mxu0 0.0
    %2606 = vmatpush1.msra.mxu0 0.0
    %2607 = vmatprep.subr.mxu0 0.0
    %2608 = vmatpush1.msra.mxu0 0.0
    %2609 = vmatprep.subr.mxu0 0.0
    %2610 = vmatpush1.msra.mxu0 0.0
    %2611 = vmatprep.subr.mxu0 0.0
    %2612 = vmatpush1.msra.mxu0 0.0
    %2613 = vmatprep.subr.mxu0 0.0
    %2614 = vmatpush1.msra.mxu0 0.0
    %2615 = vmatprep.subr.mxu0 0.0
    %2616 = vmatpush1.msra.mxu0 0.0
    %2617 = vmatprep.subr.mxu0 0.0
    %2618 = vmatpush1.msra.mxu0 0.0
    %2619 = vmatprep.subr.mxu0 0.0
    %2620 = vmatpush1.msra.mxu0 0.0
    %2621 = vmatprep.subr.mxu0 0.0
    %2622 = vmatpush1.msra.mxu0 0.0
    %2623 = vmatprep.subr.mxu0 0.0
    %2624 = vmatpush1.msra.mxu0 0.0
    %2625 = vmatprep.subr.mxu0 0.0
    %2626 = vmatpush1.msra.mxu0 0.0
    %2627 = vmatprep.subr.mxu0 0.0
    %2628 = vmatpush1.msra.mxu0 0.0
    %2629 = vmatprep.subr.mxu0 0.0
    %2630 = vmatpush1.msra.mxu0 0.0
    %2631 = vmatprep.subr.mxu0 0.0
    %2632 = vmatpush1.msra.mxu0 0.0
    %2633 = vmatprep.subr.mxu0 0.0
    %2634 = vmatpush1.msra.mxu0 0.0
    %2635 = vmatprep.subr.mxu0 0.0
    %2636 = vmatpush1.msra.mxu0 0.0
    %2637 = vmatprep.subr.mxu0 0.0
    %2638 = vmatpush1.msra.mxu0 0.0
    %2639 = vmatprep.subr.mxu0 0.0
    %2640 = vmatpush1.msra.mxu0 0.0
    %2641 = vmatprep.subr.mxu0 0.0
    %2642 = vmatpush1.msra.mxu0 0.0
    %2643 = vmatprep.subr.mxu0 0.0
    %2644 = vmatpush1.msra.mxu0 0.0
    %2645 = vmatprep.subr.mxu0 0.0
    %2646 = vmatpush1.msra.mxu0 0.0
    %2647 = vmatprep.mubr.f32.mxu0 0.0
    %2648 = vmatmul.mubr.f32.gmra.mrb[0].mxu0 %v2578
    %v2649 = vpop.f32.mrb[0].mxu0
    %v2650 = vadd.f32 0.0, %v2649
    %v2651 = vpop.f32.mrb[0].mxu0
    %2652 = vmatprep.mubr.f32.mxu0 0.0
    %2653 = vmatmul.mubr.f32.gmra.mrb[0].mxu0 %v2581
    %v2654 = vpop.f32.mrb[0].mxu0
    %v2655 = vadd.f32 0.0, %v2654
    %v2656 = vpop.f32.mrb[0].mxu0
    %2657 = vdwg.mxu0
    %2658 = vrot.lane.b32.xlu0 %v1958, 64
    %v2659 = vpop.permute.xlu0 %2658
    %2660 = vrot.lane.b32.xlu0 %v1960, 64
    %v2661 = vpop.permute.xlu0 %2660
    %v2665 = vsel %vm571, %v2395, 0
    %v2668 = vsel %vm571, %v2396, 0
    %2670 = vmatprep.subr.mxu0 0.0
    %2671 = vmatpush1.msra.mxu0 %v2659
    %2672 = vmatprep.subr.mxu0 0.0
    %2673 = vmatpush1.msra.mxu0 %v2661
    %2674 = vmatprep.subr.mxu0 0.0
    %2675 = vmatpush1.msra.mxu0 0.0
    %2676 = vmatprep.subr.mxu0 0.0
    %2677 = vmatpush1.msra.mxu0 0.0
    %2678 = vmatprep.subr.mxu0 0.0
    %2679 = vmatpush1.msra.mxu0 0.0
    %2680 = vmatprep.subr.mxu0 0.0
    %2681 = vmatpush1.msra.mxu0 0.0
    %2682 = vmatprep.subr.mxu0 0.0
    %2683 = vmatpush1.msra.mxu0 0.0
    %2684 = vmatprep.subr.mxu0 0.0
    %2685 = vmatpush1.msra.mxu0 0.0
    %2686 = vmatprep.subr.mxu0 0.0
    %2687 = vmatpush1.msra.mxu0 0.0
    %2688 = vmatprep.subr.mxu0 0.0
    %2689 = vmatpush1.msra.mxu0 0.0
    %2690 = vmatprep.subr.mxu0 0.0
    %2691 = vmatpush1.msra.mxu0 0.0
    %2692 = vmatprep.subr.mxu0 0.0
    %2693 = vmatpush1.msra.mxu0 0.0
    %2694 = vmatprep.subr.mxu0 0.0
    %2695 = vmatpush1.msra.mxu0 0.0
    %2696 = vmatprep.subr.mxu0 0.0
    %2697 = vmatpush1.msra.mxu0 0.0
    %2698 = vmatprep.subr.mxu0 0.0
    %2699 = vmatpush1.msra.mxu0 0.0
    %2700 = vmatprep.subr.mxu0 0.0
    %2701 = vmatpush1.msra.mxu0 0.0
    %2702 = vmatprep.subr.mxu0 0.0
    %2703 = vmatpush1.msra.mxu0 0.0
    %2704 = vmatprep.subr.mxu0 0.0
    %2705 = vmatpush1.msra.mxu0 0.0
    %2706 = vmatprep.subr.mxu0 0.0
    %2707 = vmatpush1.msra.mxu0 0.0
    %2708 = vmatprep.subr.mxu0 0.0
    %2709 = vmatpush1.msra.mxu0 0.0
    %2710 = vmatprep.subr.mxu0 0.0
    %2711 = vmatpush1.msra.mxu0 0.0
    %2712 = vmatprep.subr.mxu0 0.0
    %2713 = vmatpush1.msra.mxu0 0.0
    %2714 = vmatprep.subr.mxu0 0.0
    %2715 = vmatpush1.msra.mxu0 0.0
    %2716 = vmatprep.subr.mxu0 0.0
    %2717 = vmatpush1.msra.mxu0 0.0
    %2718 = vmatprep.subr.mxu0 0.0
    %2719 = vmatpush1.msra.mxu0 0.0
    %2720 = vmatprep.subr.mxu0 0.0
    %2721 = vmatpush1.msra.mxu0 0.0
    %2722 = vmatprep.subr.mxu0 0.0
    %2723 = vmatpush1.msra.mxu0 0.0
    %2724 = vmatprep.subr.mxu0 0.0
    %2725 = vmatpush1.msra.mxu0 0.0
    %2726 = vmatprep.subr.mxu0 0.0
    %2727 = vmatpush1.msra.mxu0 0.0
    %2728 = vmatprep.subr.mxu0 0.0
    %2729 = vmatpush1.msra.mxu0 0.0
    %2730 = vmatprep.subr.mxu0 0.0
    %2731 = vmatpush1.msra.mxu0 0.0
    %2732 = vmatprep.subr.mxu0 0.0
    %2733 = vmatpush1.msra.mxu0 0.0
    %2734 = vmatprep.mubr.f32.mxu0 0.0
    %2735 = vmatmul.mubr.f32.gmra.mrb[0].mxu0 %v2665
    %v2736 = vpop.f32.mrb[0].mxu0
    %v2737 = vadd.f32 0.0, %v2736
    %v2738 = vpop.f32.mrb[0].mxu0
    %2739 = vmatprep.mubr.f32.mxu0 0.0
    %2740 = vmatmul.mubr.f32.gmra.mrb[0].mxu0 %v2668
    %v2741 = vpop.f32.mrb[0].mxu0
    %v2742 = vadd.f32 0.0, %v2741
    %v2743 = vpop.f32.mrb[0].mxu0
    %2744 = vdwg.mxu0
    %2749 = vrot.lane.b32.xlu0 %v2650, 16
    %v2750 = vpop.permute.xlu0 %2749
    %2751 = vrot.lane.b32.xlu0 %v2655, 16
    %v2752 = vpop.permute.xlu0 %2751
    %2753 = vrot.lane.b32.xlu0 %v2737, 16
    %v2754 = vpop.permute.xlu0 %2753
    %2755 = vrot.lane.b32.xlu0 %v2742, 16
    %v2756 = vpop.permute.xlu0 %2755
    %v2761 = vsel %vm571, %v2476, %v2750
    %v2762 = vsel %vm571, %v2481, %v2752
    %v2763 = vsel %vm571, %v2563, %v2754
    %v2764 = vsel %vm571, %v2568, %v2756
    %v2765 = vlaneseq
    %v2766 = vshrl.u32 %v2765, 7
    %v2767 = vsub.s32 0, %v2766
    %v2768 = vrot.slane %v1841, %v2767
    %v2770 = vsel %vm266, %v2761, 0
    %v2773 = vsel %vm266, %v2762, 0
    %v2776 = vsel %vm266, %v2763, 0
    %v2779 = vsel %vm266, %v2764, 0
    %2781 = vmatprep.subr.mxu0 0.0
    %2782 = vmatpush1.msra.mxu0 %v1816
    %2783 = vmatprep.subr.mxu0 0.0
    %2784 = vmatpush1.msra.mxu0 %v1817
    %2785 = vmatprep.subr.mxu0 0.0
    %2786 = vmatpush1.msra.mxu0 %v1818
    %2787 = vmatprep.subr.mxu0 0.0
    %2788 = vmatpush1.msra.mxu0 %v1819
    %2789 = vmatprep.subr.mxu0 0.0
    %2790 = vmatpush1.msra.mxu0 0.0
    %2791 = vmatprep.subr.mxu0 0.0
    %2792 = vmatpush1.msra.mxu0 0.0
    %2793 = vmatprep.subr.mxu0 0.0
    %2794 = vmatpush1.msra.mxu0 0.0
    %2795 = vmatprep.subr.mxu0 0.0
    %2796 = vmatpush1.msra.mxu0 0.0
    %2797 = vmatprep.subr.mxu0 0.0
    %2798 = vmatpush1.msra.mxu0 0.0
    %2799 = vmatprep.subr.mxu0 0.0
    %2800 = vmatpush1.msra.mxu0 0.0
    %2801 = vmatprep.subr.mxu0 0.0
    %2802 = vmatpush1.msra.mxu0 0.0
    %2803 = vmatprep.subr.mxu0 0.0
    %2804 = vmatpush1.msra.mxu0 0.0
    %2805 = vmatprep.subr.mxu0 0.0
    %2806 = vmatpush1.msra.mxu0 0.0
    %2807 = vmatprep.subr.mxu0 0.0
    %2808 = vmatpush1.msra.mxu0 0.0
    %2809 = vmatprep.subr.mxu0 0.0
    %2810 = vmatpush1.msra.mxu0 0.0
    %2811 = vmatprep.subr.mxu0 0.0
    %2812 = vmatpush1.msra.mxu0 0.0
    %2813 = vmatprep.subr.mxu0 0.0
    %2814 = vmatpush1.msra.mxu0 0.0
    %2815 = vmatprep.subr.mxu0 0.0
    %2816 = vmatpush1.msra.mxu0 0.0
    %2817 = vmatprep.subr.mxu0 0.0
    %2818 = vmatpush1.msra.mxu0 0.0
    %2819 = vmatprep.subr.mxu0 0.0
    %2820 = vmatpush1.msra.mxu0 0.0
    %2821 = vmatprep.subr.mxu0 0.0
    %2822 = vmatpush1.msra.mxu0 0.0
    %2823 = vmatprep.subr.mxu0 0.0
    %2824 = vmatpush1.msra.mxu0 0.0
    %2825 = vmatprep.subr.mxu0 0.0
    %2826 = vmatpush1.msra.mxu0 0.0
    %2827 = vmatprep.subr.mxu0 0.0
    %2828 = vmatpush1.msra.mxu0 0.0
    %2829 = vmatprep.subr.mxu0 0.0
    %2830 = vmatpush1.msra.mxu0 0.0
    %2831 = vmatprep.subr.mxu0 0.0
    %2832 = vmatpush1.msra.mxu0 0.0
    %2833 = vmatprep.subr.mxu0 0.0
    %2834 = vmatpush1.msra.mxu0 0.0
    %2835 = vmatprep.subr.mxu0 0.0
    %2836 = vmatpush1.msra.mxu0 0.0
    %2837 = vmatprep.subr.mxu0 0.0
    %2838 = vmatpush1.msra.mxu0 0.0
    %2839 = vmatprep.subr.mxu0 0.0
    %2840 = vmatpush1.msra.mxu0 0.0
    %2841 = vmatprep.subr.mxu0 0.0
    %2842 = vmatpush1.msra.mxu0 0.0
    %2843 = vmatprep.subr.mxu0 0.0
    %2844 = vmatpush1.msra.mxu0 0.0
    %2845 = vmatprep.mubr.f32.mxu0 0.0
    %2846 = vmatmul.mubr.f32.gmra.mrb[0].mxu0 %v2770
    %v2847 = vpop.f32.mrb[0].mxu0
    %v2848 = vadd.f32 %v2768, %v2847
    %v2849 = vpop.f32.mrb[0].mxu0
    %2850 = vmatprep.mubr.f32.mxu0 0.0
    %2851 = vmatmul.mubr.f32.gmra.mrb[0].mxu0 %v2773
    %v2852 = vpop.f32.mrb[0].mxu0
    %v2853 = vadd.f32 %v2768, %v2852
    %v2854 = vpop.f32.mrb[0].mxu0
    %2855 = vmatprep.mubr.f32.mxu0 0.0
    %2856 = vmatmul.mubr.f32.gmra.mrb[0].mxu0 %v2776
    %v2857 = vpop.f32.mrb[0].mxu0
    %v2858 = vadd.f32 %v2768, %v2857
    %v2859 = vpop.f32.mrb[0].mxu0
    %2860 = vmatprep.mubr.f32.mxu0 0.0
    %2861 = vmatmul.mubr.f32.gmra.mrb[0].mxu0 %v2779
    %v2862 = vpop.f32.mrb[0].mxu0
    %v2863 = vadd.f32 %v2768, %v2862
    %v2864 = vpop.f32.mrb[0].mxu0
    %2865 = vdwg.mxu0
    %v2866 = vadd.f32 %v1808, %v2848
    %v2867 = vadd.f32 %v1809, %v2853
    %v2868 = vadd.f32 %v1810, %v2858
    %v2869 = vadd.f32 %v1811, %v2863
    %v2870 = vsel %vm266, %v2866, 0.0
    %2871 = vadd.xlane.f32.xlu0 %v2870
    %v2872 = vpop.xlane.xlu0 %2871
    %v2873 = vsel %vm266, %v2867, 0.0
    %2874 = vadd.xlane.f32.xlu0 %v2873
    %v2875 = vpop.xlane.xlu0 %2874
    %v2876 = vsel %vm266, %v2868, 0.0
    %2877 = vadd.xlane.f32.xlu0 %v2876
    %v2878 = vpop.xlane.xlu0 %2877
    %v2879 = vsel %vm266, %v2869, 0.0
    %2880 = vadd.xlane.f32.xlu0 %v2879
    %v2881 = vpop.xlane.xlu0 %2880
    %v2882 = vmul.f32 %v2872, %v1489
    %v2883 = vmul.f32 %v2875, %v1489
    %v2884 = vmul.f32 %v2878, %v1489
    %v2885 = vmul.f32 %v2881, %v1489
    %v2886 = vsub.f32 %v2866, %v2882
    %v2887 = vsub.f32 %v2867, %v2883
    %v2888 = vsub.f32 %v2868, %v2884
    %v2889 = vsub.f32 %v2869, %v2885
    %v2890 = vmul.f32 %v2886, %v2886
    %v2891 = vmul.f32 %v2887, %v2887
    %v2892 = vmul.f32 %v2888, %v2888
    %v2893 = vmul.f32 %v2889, %v2889
    %v2894 = vsel %vm266, %v2890, 0.0
    %2895 = vadd.xlane.f32.xlu0 %v2894
    %v2896 = vpop.xlane.xlu0 %2895
    %v2897 = vsel %vm266, %v2891, 0.0
    %2898 = vadd.xlane.f32.xlu0 %v2897
    %v2899 = vpop.xlane.xlu0 %2898
    %v2900 = vsel %vm266, %v2892, 0.0
    %2901 = vadd.xlane.f32.xlu0 %v2900
    %v2902 = vpop.xlane.xlu0 %2901
    %v2903 = vsel %vm266, %v2893, 0.0
    %2904 = vadd.xlane.f32.xlu0 %v2903
    %v2905 = vpop.xlane.xlu0 %2904
    %v2906 = vmul.f32 %v2896, %v1489
    %v2907 = vmul.f32 %v2899, %v1489
    %v2908 = vmul.f32 %v2902, %v1489
    %v2909 = vmul.f32 %v2905, %v1489
    %v2910 = vadd.f32 %v2906, 1e-05
    %v2911 = vadd.f32 %v2907, 1e-05
    %v2912 = vadd.f32 %v2908, 1e-05
    %v2913 = vadd.f32 %v2909, 1e-05
    %v2914 = vrsqrt.pop %v2910
    %v2915 = vrsqrt.pop %v2911
    %v2916 = vrsqrt.pop %v2912
    %v2917 = vrsqrt.pop %v2913
    %v2918 = vmul.f32 %v2886, %v2914
    %v2919 = vmul.f32 %v2887, %v2915
    %v2920 = vmul.f32 %v2888, %v2916
    %v2921 = vmul.f32 %v2889, %v2917
    %v2922 = vlaneseq
    %v2923 = vshrl.u32 %v2922, 7
    %v2924 = vsub.s32 0, %v2923
    %v2925 = vrot.slane %v1842, %v2924
    %v2926 = vmul.f32 %v2918, %v2925
    %v2927 = vmul.f32 %v2919, %v2925
    %v2928 = vmul.f32 %v2920, %v2925
    %v2929 = vmul.f32 %v2921, %v2925
    %v2930 = vlaneseq
    %v2931 = vshrl.u32 %v2930, 7
    %v2932 = vsub.s32 0, %v2931
    %v2933 = vrot.slane %v1843, %v2932
    %v2934 = vadd.f32 %v2926, %v2933
    %v2935 = vadd.f32 %v2927, %v2933
    %v2936 = vadd.f32 %v2928, %v2933
    %v2937 = vadd.f32 %v2929, %v2933
    %v2938 = vlaneseq
    %v2939 = vshrl.u32 %v2938, 7
    %v2940 = vsub.s32 0, %v2939
    %v2941 = vrot.slane %v1844, %v2940
    %v2943 = vsel %vm266, %v2934, 0
    %v2946 = vsel %vm266, %v2935, 0
    %v2949 = vsel %vm266, %v2936, 0
    %v2952 = vsel %vm266, %v2937, 0
    %2954 = vmatprep.subr.mxu0 0.0
    %2955 = vmatpush1.msra.mxu0 %v1820
    %2956 = vmatprep.subr.mxu0 0.0
    %2957 = vmatpush1.msra.mxu0 %v1821
    %2958 = vmatprep.subr.mxu0 0.0
    %2959 = vmatpush1.msra.mxu0 %v1822
    %2960 = vmatprep.subr.mxu0 0.0
    %2961 = vmatpush1.msra.mxu0 %v1823
    %2962 = vmatprep.subr.mxu0 0.0
    %2963 = vmatpush1.msra.mxu0 0.0
    %2964 = vmatprep.subr.mxu0 0.0
    %2965 = vmatpush1.msra.mxu0 0.0
    %2966 = vmatprep.subr.mxu0 0.0
    %2967 = vmatpush1.msra.mxu0 0.0
    %2968 = vmatprep.subr.mxu0 0.0
    %2969 = vmatpush1.msra.mxu0 0.0
    %2970 = vmatprep.subr.mxu0 0.0
    %2971 = vmatpush1.msra.mxu0 0.0
    %2972 = vmatprep.subr.mxu0 0.0
    %2973 = vmatpush1.msra.mxu0 0.0
    %2974 = vmatprep.subr.mxu0 0.0
    %2975 = vmatpush1.msra.mxu0 0.0
    %2976 = vmatprep.subr.mxu0 0.0
    %2977 = vmatpush1.msra.mxu0 0.0
    %2978 = vmatprep.subr.mxu0 0.0
    %2979 = vmatpush1.msra.mxu0 0.0
    %2980 = vmatprep.subr.mxu0 0.0
    %2981 = vmatpush1.msra.mxu0 0.0
    %2982 = vmatprep.subr.mxu0 0.0
    %2983 = vmatpush1.msra.mxu0 0.0
    %2984 = vmatprep.subr.mxu0 0.0
    %2985 = vmatpush1.msra.mxu0 0.0
    %2986 = vmatprep.subr.mxu0 0.0
    %2987 = vmatpush1.msra.mxu0 0.0
    %2988 = vmatprep.subr.mxu0 0.0
    %2989 = vmatpush1.msra.mxu0 0.0
    %2990 = vmatprep.subr.mxu0 0.0
    %2991 = vmatpush1.msra.mxu0 0.0
    %2992 = vmatprep.subr.mxu0 0.0
    %2993 = vmatpush1.msra.mxu0 0.0
    %2994 = vmatprep.subr.mxu0 0.0
    %2995 = vmatpush1.msra.mxu0 0.0
    %2996 = vmatprep.subr.mxu0 0.0
    %2997 = vmatpush1.msra.mxu0 0.0
    %2998 = vmatprep.subr.mxu0 0.0
    %2999 = vmatpush1.msra.mxu0 0.0
    %3000 = vmatprep.subr.mxu0 0.0
    %3001 = vmatpush1.msra.mxu0 0.0
    %3002 = vmatprep.subr.mxu0 0.0
    %3003 = vmatpush1.msra.mxu0 0.0
    %3004 = vmatprep.subr.mxu0 0.0
    %3005 = vmatpush1.msra.mxu0 0.0
    %3006 = vmatprep.subr.mxu0 0.0
    %3007 = vmatpush1.msra.mxu0 0.0
    %3008 = vmatprep.subr.mxu0 0.0
    %3009 = vmatpush1.msra.mxu0 0.0
    %3010 = vmatprep.subr.mxu0 0.0
    %3011 = vmatpush1.msra.mxu0 0.0
    %3012 = vmatprep.subr.mxu0 0.0
    %3013 = vmatpush1.msra.mxu0 0.0
    %3014 = vmatprep.subr.mxu0 0.0
    %3015 = vmatpush1.msra.mxu0 0.0
    %3016 = vmatprep.subr.mxu0 0.0
    %3017 = vmatpush1.msra.mxu0 0.0
    %3018 = vmatprep.mubr.f32.mxu0 0.0
    %3019 = vmatmul.mubr.f32.gmra.mrb[0].mxu0 %v2943
    %v3020 = vpop.f32.mrb[0].mxu0
    %v3021 = vadd.f32 %v2941, %v3020
    %v3022 = vpop.f32.mrb[0].mxu0
    %3023 = vmatprep.mubr.f32.mxu0 0.0
    %3024 = vmatmul.mubr.f32.gmra.mrb[0].mxu0 %v2946
    %v3025 = vpop.f32.mrb[0].mxu0
    %v3026 = vadd.f32 %v2941, %v3025
    %v3027 = vpop.f32.mrb[0].mxu0
    %3028 = vmatprep.mubr.f32.mxu0 0.0
    %3029 = vmatmul.mubr.f32.gmra.mrb[0].mxu0 %v2949
    %v3030 = vpop.f32.mrb[0].mxu0
    %v3031 = vadd.f32 %v2941, %v3030
    %v3032 = vpop.f32.mrb[0].mxu0
    %3033 = vmatprep.mubr.f32.mxu0 0.0
    %3034 = vmatmul.mubr.f32.gmra.mrb[0].mxu0 %v2952
    %v3035 = vpop.f32.mrb[0].mxu0
    %v3036 = vadd.f32 %v2941, %v3035
    %v3037 = vpop.f32.mrb[0].mxu0
    %3038 = vdwg.mxu0
    %v3039 = vmax.f32 %v3021, 0.0
    %v3040 = vmax.f32 %v3026, 0.0
    %v3041 = vmax.f32 %v3031, 0.0
    %v3042 = vmax.f32 %v3036, 0.0
    %v3043 = vlaneseq
    %v3044 = vshrl.u32 %v3043, 7
    %v3045 = vsub.s32 0, %v3044
    %v3046 = vrot.slane %v1845, %v3045
    %3047 = vmatprep.subr.mxu0 0.0
    %3048 = vmatpush1.msra.mxu0 %v1824
    %3049 = vmatprep.subr.mxu0 0.0
    %3050 = vmatpush1.msra.mxu0 %v1825
    %3051 = vmatprep.subr.mxu0 0.0
    %3052 = vmatpush1.msra.mxu0 %v1826
    %3053 = vmatprep.subr.mxu0 0.0
    %3054 = vmatpush1.msra.mxu0 %v1827
    %3055 = vmatprep.subr.mxu0 0.0
    %3056 = vmatpush1.msra.mxu0 %v1828
    %3057 = vmatprep.subr.mxu0 0.0
    %3058 = vmatpush1.msra.mxu0 %v1829
    %3059 = vmatprep.subr.mxu0 0.0
    %3060 = vmatpush1.msra.mxu0 %v1830
    %3061 = vmatprep.subr.mxu0 0.0
    %3062 = vmatpush1.msra.mxu0 %v1831
    %3063 = vmatprep.subr.mxu0 0.0
    %3064 = vmatpush1.msra.mxu0 %v1832
    %3065 = vmatprep.subr.mxu0 0.0
    %3066 = vmatpush1.msra.mxu0 %v1833
    %3067 = vmatprep.subr.mxu0 0.0
    %3068 = vmatpush1.msra.mxu0 %v1834
    %3069 = vmatprep.subr.mxu0 0.0
    %3070 = vmatpush1.msra.mxu0 %v1835
    %3071 = vmatprep.subr.mxu0 0.0
    %3072 = vmatpush1.msra.mxu0 %v1836
    %3073 = vmatprep.subr.mxu0 0.0
    %3074 = vmatpush1.msra.mxu0 %v1837
    %3075 = vmatprep.subr.mxu0 0.0
    %3076 = vmatpush1.msra.mxu0 %v1838
    %3077 = vmatprep.subr.mxu0 0.0
    %3078 = vmatpush1.msra.mxu0 %v1839
    %3079 = vmatprep.subr.mxu0 0.0
    %3080 = vmatpush1.msra.mxu0 0.0
    %3081 = vmatprep.subr.mxu0 0.0
    %3082 = vmatpush1.msra.mxu0 0.0
    %3083 = vmatprep.subr.mxu0 0.0
    %3084 = vmatpush1.msra.mxu0 0.0
    %3085 = vmatprep.subr.mxu0 0.0
    %3086 = vmatpush1.msra.mxu0 0.0
    %3087 = vmatprep.subr.mxu0 0.0
    %3088 = vmatpush1.msra.mxu0 0.0
    %3089 = vmatprep.subr.mxu0 0.0
    %3090 = vmatpush1.msra.mxu0 0.0
    %3091 = vmatprep.subr.mxu0 0.0
    %3092 = vmatpush1.msra.mxu0 0.0
    %3093 = vmatprep.subr.mxu0 0.0
    %3094 = vmatpush1.msra.mxu0 0.0
    %3095 = vmatprep.subr.mxu0 0.0
    %3096 = vmatpush1.msra.mxu0 0.0
    %3097 = vmatprep.subr.mxu0 0.0
    %3098 = vmatpush1.msra.mxu0 0.0
    %3099 = vmatprep.subr.mxu0 0.0
    %3100 = vmatpush1.msra.mxu0 0.0
    %3101 = vmatprep.subr.mxu0 0.0
    %3102 = vmatpush1.msra.mxu0 0.0
    %3103 = vmatprep.subr.mxu0 0.0
    %3104 = vmatpush1.msra.mxu0 0.0
    %3105 = vmatprep.subr.mxu0 0.0
    %3106 = vmatpush1.msra.mxu0 0.0
    %3107 = vmatprep.subr.mxu0 0.0
    %3108 = vmatpush1.msra.mxu0 0.0
    %3109 = vmatprep.subr.mxu0 0.0
    %3110 = vmatpush1.msra.mxu0 0.0
    %3111 = vmatprep.mubr.f32.mxu0 0.0
    %3112 = vmatmul.mubr.f32.gmra.mrb[0].mxu0 %v3039
    %v3113 = vpop.f32.mrb[0].mxu0
    %v3114 = vadd.f32 %v3046, %v3113
    %v3115 = vpop.f32.mrb[0].mxu0
    %3116 = vmatprep.mubr.f32.mxu0 0.0
    %3117 = vmatmul.mubr.f32.gmra.mrb[0].mxu0 %v3040
    %v3118 = vpop.f32.mrb[0].mxu0
    %v3119 = vadd.f32 %v3046, %v3118
    %v3120 = vpop.f32.mrb[0].mxu0
    %3121 = vmatprep.mubr.f32.mxu0 0.0
    %3122 = vmatmul.mubr.f32.gmra.mrb[0].mxu0 %v3041
    %v3123 = vpop.f32.mrb[0].mxu0
    %v3124 = vadd.f32 %v3046, %v3123
    %v3125 = vpop.f32.mrb[0].mxu0
    %3126 = vmatprep.mubr.f32.mxu0 0.0
    %3127 = vmatmul.mubr.f32.gmra.mrb[0].mxu0 %v3042
    %v3128 = vpop.f32.mrb[0].mxu0
    %v3129 = vadd.f32 %v3046, %v3128
    %v3130 = vpop.f32.mrb[0].mxu0
    %3131 = vdwg.mxu0
    %v3132 = vadd.f32 %v2934, %v3114
    %v3133 = vadd.f32 %v2935, %v3119
    %v3134 = vadd.f32 %v2936, %v3124
    %v3135 = vadd.f32 %v2937, %v3129
    %v3136 = vsel %vm266, %v3132, 0.0
    %3137 = vadd.xlane.f32.xlu0 %v3136
    %v3138 = vpop.xlane.xlu0 %3137
    %v3139 = vsel %vm266, %v3133, 0.0
    %3140 = vadd.xlane.f32.xlu0 %v3139
    %v3141 = vpop.xlane.xlu0 %3140
    %v3142 = vsel %vm266, %v3134, 0.0
    %3143 = vadd.xlane.f32.xlu0 %v3142
    %v3144 = vpop.xlane.xlu0 %3143
    %v3145 = vsel %vm266, %v3135, 0.0
    %3146 = vadd.xlane.f32.xlu0 %v3145
    %v3147 = vpop.xlane.xlu0 %3146
    %v3148 = vmul.f32 %v3138, %v1489
    %v3149 = vmul.f32 %v3141, %v1489
    %v3150 = vmul.f32 %v3144, %v1489
    %v3151 = vmul.f32 %v3147, %v1489
    %v3152 = vsub.f32 %v3132, %v3148
    %v3153 = vsub.f32 %v3133, %v3149
    %v3154 = vsub.f32 %v3134, %v3150
    %v3155 = vsub.f32 %v3135, %v3151
    %v3156 = vmul.f32 %v3152, %v3152
    %v3157 = vmul.f32 %v3153, %v3153
    %v3158 = vmul.f32 %v3154, %v3154
    %v3159 = vmul.f32 %v3155, %v3155
    %v3160 = vsel %vm266, %v3156, 0.0
    %3161 = vadd.xlane.f32.xlu0 %v3160
    %v3162 = vpop.xlane.xlu0 %3161
    %v3163 = vsel %vm266, %v3157, 0.0
    %3164 = vadd.xlane.f32.xlu0 %v3163
    %v3165 = vpop.xlane.xlu0 %3164
    %v3166 = vsel %vm266, %v3158, 0.0
    %3167 = vadd.xlane.f32.xlu0 %v3166
    %v3168 = vpop.xlane.xlu0 %3167
    %v3169 = vsel %vm266, %v3159, 0.0
    %3170 = vadd.xlane.f32.xlu0 %v3169
    %v3171 = vpop.xlane.xlu0 %3170
    %v3172 = vmul.f32 %v3162, %v1489
    %v3173 = vmul.f32 %v3165, %v1489
    %v3174 = vmul.f32 %v3168, %v1489
    %v3175 = vmul.f32 %v3171, %v1489
    %v3176 = vadd.f32 %v3172, 1e-05
    %v3177 = vadd.f32 %v3173, 1e-05
    %v3178 = vadd.f32 %v3174, 1e-05
    %v3179 = vadd.f32 %v3175, 1e-05
    %v3180 = vrsqrt.pop %v3176
    %v3181 = vrsqrt.pop %v3177
    %v3182 = vrsqrt.pop %v3178
    %v3183 = vrsqrt.pop %v3179
    %v3184 = vmul.f32 %v3152, %v3180
    %v3185 = vmul.f32 %v3153, %v3181
    %v3186 = vmul.f32 %v3154, %v3182
    %v3187 = vmul.f32 %v3155, %v3183
    %v3188 = vlaneseq
    %v3189 = vshrl.u32 %v3188, 7
    %v3190 = vsub.s32 0, %v3189
    %v3191 = vrot.slane %v1846, %v3190
    %v3192 = vmul.f32 %v3184, %v3191
    %v3193 = vmul.f32 %v3185, %v3191
    %v3194 = vmul.f32 %v3186, %v3191
    %v3195 = vmul.f32 %v3187, %v3191
    %v3196 = vlaneseq
    %v3197 = vshrl.u32 %v3196, 7
    %v3198 = vsub.s32 0, %v3197
    %v3199 = vrot.slane %v1847, %v3198
    %v3200 = vadd.f32 %v3192, %v3199
    %v3201 = vadd.f32 %v3193, %v3199
    %v3202 = vadd.f32 %v3194, %v3199
    %v3203 = vadd.f32 %v3195, %v3199
    %v3204 = vadd.f32 %v3200, %v414
    %v3205 = vadd.f32 %v3201, %v415
    %v3206 = vadd.f32 %v3202, %v416
    %v3207 = vadd.f32 %v3203, %v417
    %v3208 = vsel %vm266, %v3204, 0.0
    %v3209 = vsel %vm266, %v3205, 0.0
    %v3210 = vadd.f32 %v3208, %v3209
    %v3211 = vrot.slane %v3210, 4
    %v3212 = vadd.f32 %v3210, %v3211
    %v3213 = vrot.slane %v3212, 2
    %v3214 = vadd.f32 %v3212, %v3213
    %v3215 = vrot.slane %v3214, 1
    %v3216 = vadd.f32 %v3214, %v3215
    %v3217 = vsel %vm266, %v3206, 0.0
    %v3218 = vsel %vm266, %v3207, 0.0
    %v3219 = vadd.f32 %v3217, %v3218
    %v3220 = vrot.slane %v3219, 4
    %v3221 = vadd.f32 %v3219, %v3220
    %v3222 = vrot.slane %v3221, 2
    %v3223 = vadd.f32 %v3221, %v3222
    %v3224 = vrot.slane %v3223, 1
    %v3225 = vadd.f32 %v3223, %v3224
    %v3226 = vrcp.pop 16.0
    %v3227 = vmul.f32 %v3216, %v3226
    %v3228 = vmul.f32 %v3225, %v3226
    %v3229 = vlaneseq
    %v3230 = vshrl.u32 %v3229, 7
    %v3231 = vsub.s32 0, %v3230
    %v3232 = vrot.slane %v52, %v3231
    %vm3235 = vcmask 1041409
    %v3236 = vsel %vm3235, %v3228, %v3227
    %v3237 = vsel %vm266, %v3236, 0
    %3239 = vmatprep.subr.mxu0 0.0
    %3240 = vmatpush1.msra.mxu0 %v44
    %3241 = vmatprep.subr.mxu0 0.0
    %3242 = vmatpush1.msra.mxu0 %v45
    %3243 = vmatprep.subr.mxu0 0.0
    %3244 = vmatpush1.msra.mxu0 %v46
    %3245 = vmatprep.subr.mxu0 0.0
    %3246 = vmatpush1.msra.mxu0 %v47
    %3247 = vmatprep.subr.mxu0 0.0
    %3248 = vmatpush1.msra.mxu0 0.0
    %3249 = vmatprep.subr.mxu0 0.0
    %3250 = vmatpush1.msra.mxu0 0.0
    %3251 = vmatprep.subr.mxu0 0.0
    %3252 = vmatpush1.msra.mxu0 0.0
    %3253 = vmatprep.subr.mxu0 0.0
    %3254 = vmatpush1.msra.mxu0 0.0
    %3255 = vmatprep.subr.mxu0 0.0
    %3256 = vmatpush1.msra.mxu0 0.0
    %3257 = vmatprep.subr.mxu0 0.0
    %3258 = vmatpush1.msra.mxu0 0.0
    %3259 = vmatprep.subr.mxu0 0.0
    %3260 = vmatpush1.msra.mxu0 0.0
    %3261 = vmatprep.subr.mxu0 0.0
    %3262 = vmatpush1.msra.mxu0 0.0
    %3263 = vmatprep.subr.mxu0 0.0
    %3264 = vmatpush1.msra.mxu0 0.0
    %3265 = vmatprep.subr.mxu0 0.0
    %3266 = vmatpush1.msra.mxu0 0.0
    %3267 = vmatprep.subr.mxu0 0.0
    %3268 = vmatpush1.msra.mxu0 0.0
    %3269 = vmatprep.subr.mxu0 0.0
    %3270 = vmatpush1.msra.mxu0 0.0
    %3271 = vmatprep.subr.mxu0 0.0
    %3272 = vmatpush1.msra.mxu0 0.0
    %3273 = vmatprep.subr.mxu0 0.0
    %3274 = vmatpush1.msra.mxu0 0.0
    %3275 = vmatprep.subr.mxu0 0.0
    %3276 = vmatpush1.msra.mxu0 0.0
    %3277 = vmatprep.subr.mxu0 0.0
    %3278 = vmatpush1.msra.mxu0 0.0
    %3279 = vmatprep.subr.mxu0 0.0
    %3280 = vmatpush1.msra.mxu0 0.0
    %3281 = vmatprep.subr.mxu0 0.0
    %3282 = vmatpush1.msra.mxu0 0.0
    %3283 = vmatprep.subr.mxu0 0.0
    %3284 = vmatpush1.msra.mxu0 0.0
    %3285 = vmatprep.subr.mxu0 0.0
    %3286 = vmatpush1.msra.mxu0 0.0
    %3287 = vmatprep.subr.mxu0 0.0
    %3288 = vmatpush1.msra.mxu0 0.0
    %3289 = vmatprep.subr.mxu0 0.0
    %3290 = vmatpush1.msra.mxu0 0.0
    %3291 = vmatprep.subr.mxu0 0.0
    %3292 = vmatpush1.msra.mxu0 0.0
    %3293 = vmatprep.subr.mxu0 0.0
    %3294 = vmatpush1.msra.mxu0 0.0
    %3295 = vmatprep.subr.mxu0 0.0
    %3296 = vmatpush1.msra.mxu0 0.0
    %3297 = vmatprep.subr.mxu0 0.0
    %3298 = vmatpush1.msra.mxu0 0.0
    %3299 = vmatprep.subr.mxu0 0.0
    %3300 = vmatpush1.msra.mxu0 0.0
    %3301 = vmatprep.subr.mxu0 0.0
    %3302 = vmatpush1.msra.mxu0 0.0
    %3303 = vmatprep.mubr.f32.mxu0 0.0
    %3304 = vmatmul.mubr.f32.gmra.mrb[0].mxu0 %v3237
    %v3305 = vpop.f32.mrb[0].mxu0
    %v3306 = vadd.f32 %v3232, %v3305
    %v3307 = vpop.f32.mrb[0].mxu0
    %3308 = vdwg.mxu0
    %vm3309 = vcmask 254976
    %v3310 = vsel %vm3309, %v3306, 0.0
    %3311 = vadd.xlane.f32.xlu0 %v3310
    %v3312 = vpop.xlane.xlu0 %3311
    %v3313 = vmul.f32 %v3312, %v1489
    %v3314 = vsub.f32 %v3306, %v3313
    %v3315 = vmul.f32 %v3314, %v3314
    %v3316 = vsel %vm3309, %v3315, 0.0
    %3317 = vadd.xlane.f32.xlu0 %v3316
    %v3318 = vpop.xlane.xlu0 %3317
    %v3319 = vmul.f32 %v3318, %v1489
    %v3320 = vadd.f32 %v3319, 1e-05
    %v3321 = vrsqrt.pop %v3320
    %v3322 = vmul.f32 %v3314, %v3321
    %v3323 = vlaneseq
    %v3324 = vshrl.u32 %v3323, 7
    %v3325 = vsub.s32 0, %v3324
    %v3326 = vrot.slane %v53, %v3325
    %v3327 = vmul.f32 %v3322, %v3326
    %v3328 = vlaneseq
    %v3329 = vshrl.u32 %v3328, 7
    %v3330 = vsub.s32 0, %v3329
    %v3331 = vrot.slane %v54, %v3330
    %v3332 = vadd.f32 %v3327, %v3331
    %3333 = vst.msk [vmem:[#allocation5] sm:$0x3] %vm3309, %v3332
    // Predicated region
    $region18: #{tpu_custom_call.1} parent=1 // pred_check
      _
    $region19: #{tpu_custom_call.1} parent=1 // pred_check_branch
      %3335 = sbr.rel (0) target = $region21
    $region20: #{tpu_custom_call.1} parent=1 // pred_region
      %s3337 = ssub.s32 32, 32
      %3338 = vsyncadd [#allocation4], %s3337
      %s3340 = sshll.u32 [#allocation5], 4
      %s3341 = int_to_ptr.vmem [resolvable:$true] %s3340
      %3343 = dma.vmem_to_hbm [thread:$0]  %s3341, 32, %s3, [#allocation4]
    $region21: #{tpu_custom_call.1} parent=1 // pred_fallthru
      _
    // Predicated region
    $region22: #{tpu_custom_call.1} parent=1 // pred_check
      _
    $region23: #{tpu_custom_call.1} parent=1 // pred_check_branch
      %3345 = sbr.rel (0) target = $region25
    $region24: #{tpu_custom_call.1} parent=1 // pred_region
      %3346 = dma.done [#allocation4], 32
    $region25: #{tpu_custom_call.1} parent=1 // pred_fallthru
      _
    %3347 = vsyncpa [#allocation3], 1
    %3348 = vsyncpa [#allocation4], 1

</llo_original>
